<compile_context>
chip_gen: v7x
topology: tpu7x:2x2x1
jax: 0.10.0
libtpu: 0.0.40
codegen_flags: <defaults>
</compile_context>

<pallas_src>
import functools

import jax
import jax.numpy as jnp
from jax.experimental import pallas as pl
from jax.experimental.pallas import tpu as pltpu

_LN_EPS = 1e-5
_VMEM_LIMIT = 32 * 1024 * 1024


def _layernorm(x, gamma, beta, eps=_LN_EPS):
    mu = jnp.mean(x, axis=-1, keepdims=True)
    xc = x - mu
    var = jnp.mean(xc * xc, axis=-1, keepdims=True)
    return xc * jax.lax.rsqrt(var + eps) * gamma + beta


# ---------------------------------------------------------------------------
# TriangleMultiplication (Algorithms 12 & 13 as literally written: the einsum
# contracts the channel axis within each pair-matrix row, so every
# (batch, row) slice is an independent problem -> row-tiled grid).
# ---------------------------------------------------------------------------
def _tri_mult_row_kernel(x_ref, wab_ref, wg_ref, wo_ref, gamma_ref, beta_ref,
                         o_ref, *, pattern):
    x_raw = x_ref[0, 0]                                   # [N, D] f32
    D = x_raw.shape[-1]
    gamma = gamma_ref[...]
    beta = beta_ref[...]

    x = _layernorm(x_raw, gamma, beta)
    ab = jnp.dot(x, wab_ref[...], preferred_element_type=jnp.float32)   # [N, 2D]
    a = ab[:, :D]
    b = ab[:, D:]
    a = jax.nn.sigmoid(a) * a                              # SiLU
    b = jax.nn.sigmoid(b) * b
    g = jax.nn.sigmoid(jnp.dot(x, wg_ref[...],
                               preferred_element_type=jnp.float32))

    if pattern == 'outgoing':
        # tri[i, j] = sum_k a[i, k] * b[j, k]
        tri = jnp.einsum('ik,jk->ij', a, b, preferred_element_type=jnp.float32)
    else:
        # tri[i, j] = sum_k a[k, i] * b[k, j]
        tri = jnp.dot(a.T, b, preferred_element_type=jnp.float32)

    tri = _layernorm(tri, gamma, beta)       # module reuses the same LayerNorm
    upd = jnp.dot(tri, wo_ref[...], preferred_element_type=jnp.float32) * g

    # Fused PairStack residual (dropout == identity in eval mode).
    o_ref[0, 0] = (x_raw + upd).astype(o_ref.dtype)


def triangle_multiplication(pair, p, *, pattern):
    B, N, N2, D = pair.shape
    assert N == N2 == D, "reference TriangleMultiplication requires n_tokens == dim"
    gamma = p['ln_gamma'].reshape(1, D)
    beta = p['ln_beta'].reshape(1, D)
    kernel = functools.partial(_tri_mult_row_kernel, pattern=pattern)
    return pl.pallas_call(
        kernel,
        out_shape=jax.ShapeDtypeStruct(pair.shape, pair.dtype),
        grid_spec=pltpu.PrefetchScalarGridSpec(
            num_scalar_prefetch=0,
            grid=(B, N),
            in_specs=[
                pl.BlockSpec((1, 1, N, D), lambda b, r: (b, r, 0, 0)),   # pair row
                pl.BlockSpec((D, 2 * D), lambda b, r: (0, 0)),           # W_in
                pl.BlockSpec((D, D), lambda b, r: (0, 0)),               # W_gate
                pl.BlockSpec((D, D), lambda b, r: (0, 0)),               # W_out
                pl.BlockSpec((1, D), lambda b, r: (0, 0)),               # ln gamma
                pl.BlockSpec((1, D), lambda b, r: (0, 0)),               # ln beta
            ],
            out_specs=pl.BlockSpec((1, 1, N, D), lambda b, r: (b, r, 0, 0)),
        ),
        compiler_params=pltpu.CompilerParams(
            dimension_semantics=("parallel", "parallel"),
            vmem_limit_bytes=_VMEM_LIMIT),
    )(pair, p['w_in'], p['w_gate'], p['w_out'], gamma, beta)


# ---------------------------------------------------------------------------
# TriangleAttention (Algorithms 14 & 15).
# ---------------------------------------------------------------------------
def _tri_attn_row_kernel(x_ref, wqkvg_ref, wo_h_ref, bias_ref, o_ref, *,
                         n_heads, head_dim):
    x_raw = x_ref[0, 0]                                   # [N, D] f32
    N, D = x_raw.shape
    H, hd = n_heads, head_dim

    # Single fused Q|K|V|Gate projection: bf16 operands, f32 accumulation.
    # dim**-0.5 scaling is pre-folded into the Q columns of the weight.
    proj = jnp.dot(x_raw.astype(jnp.bfloat16), wqkvg_ref[...],
                   preferred_element_type=jnp.float32)    # [N, 4D]

    gate = jax.nn.sigmoid(proj[:, 3 * D:])                # [N, D]

    acc = jnp.zeros((N, D), jnp.float32)
    for h in range(H):                                    # static unroll, H small
        q_h = proj[:, h * hd:(h + 1) * hd].astype(jnp.bfloat16)             # [N, hd]
        k_h = proj[:, D + h * hd:D + (h + 1) * hd].astype(jnp.bfloat16)
        v_h = proj[:, 2 * D + h * hd:2 * D + (h + 1) * hd].astype(jnp.bfloat16)

        # scores[q, k] = <q_h[q], k_h[k]> + bias[h, q, k]   (keys on lanes)
        s = jnp.einsum('qd,kd->qk', q_h, k_h,
                       preferred_element_type=jnp.float32)                  # [N, N]
        s = s + bias_ref[0, h]

        s_max = jnp.max(s, axis=-1, keepdims=True)
        p = jnp.exp(s - s_max)
        denom = jnp.sum(p, axis=-1, keepdims=True)
        p = p * pl.reciprocal(denom, approx=True)          # softmax over keys

        o_h = jnp.dot(p.astype(jnp.bfloat16), v_h,
                      preferred_element_type=jnp.float32)                   # [N, hd]
        # Fold the head-concatenate into the output projection.
        acc = acc + jnp.dot(o_h.astype(jnp.bfloat16), wo_h_ref[h],
                            preferred_element_type=jnp.float32)             # [N, D]

    # Fused PairStack residual (dropout == identity in eval mode).
    o_ref[0, 0] = (x_raw + acc * gate).astype(o_ref.dtype)


def triangle_attention(pair, p, *, n_heads=2, node_type='starting'):
    if node_type == 'ending':
        # Layout glue mirroring the PyTorch module (transpose(-3, -2)).
        pair = jnp.swapaxes(pair, -3, -2)

    B, N, N2, D = pair.shape
    assert N == N2 and D % n_heads == 0
    assert B == 1, "the reference bias broadcast is only valid for batch == 1"
    hd = D // n_heads
    scaling = float(D) ** -0.5

    # Fused [Wq * scaling | Wk | Wv | Wg] projection weight, bf16 for the MXU.
    w_qkvg = jnp.concatenate(
        [p['wq'] * scaling, p['wk'], p['wv'], p['wg']], axis=1
    ).astype(jnp.bfloat16)
    # Output projection split per head so the kernel indexes only the leading axis.
    wo_heads = p['wo'].reshape(n_heads, hd, D).astype(jnp.bfloat16)
    # The bias depends on the whole pair matrix (every query row uses
    # bias[q_col, k_col, h]), so it is computed once per call and kept resident
    # in VMEM with the key axis lane-major: [B, H, N, N].
    bias = jnp.einsum('bqkd,dh->bhqk', pair, p['wb'])

    kernel = functools.partial(_tri_attn_row_kernel, n_heads=n_heads, head_dim=hd)
    flops = 2 * B * N * (N * D * 4 * D + n_heads * 2 * N * N * hd + N * D * D)
    cost = pl.CostEstimate(
        flops=int(flops),
        transcendentals=int(B * N * (n_heads * N * N + 2 * N * D)),
        bytes_accessed=int(2 * B * N * N * D * 4 + B * n_heads * N * N * 4
                           + 4 * D * 4 * D),
    )

    out = pl.pallas_call(
        kernel,
        out_shape=jax.ShapeDtypeStruct(pair.shape, pair.dtype),
        grid_spec=pltpu.PrefetchScalarGridSpec(
            num_scalar_prefetch=0,
            grid=(B, N),
            in_specs=[
                pl.BlockSpec((1, 1, N, D), lambda b, r: (b, r, 0, 0)),        # pair row
                pl.BlockSpec((D, 4 * D), lambda b, r: (0, 0)),                # fused QKVG
                pl.BlockSpec((n_heads, hd, D), lambda b, r: (0, 0, 0)),       # Wo per head
                pl.BlockSpec((1, n_heads, N, N), lambda b, r: (b, 0, 0, 0)),  # bias
            ],
            out_specs=pl.BlockSpec((1, 1, N, D), lambda b, r: (b, r, 0, 0)),
        ),
        compiler_params=pltpu.CompilerParams(
            dimension_semantics=("parallel", "parallel"),
            vmem_limit_bytes=_VMEM_LIMIT),
        cost_estimate=cost,
    )(pair, w_qkvg, wo_heads, bias)

    if node_type == 'ending':
        out = jnp.swapaxes(out, -3, -2)
    return out


# ---------------------------------------------------------------------------
# Transition (SwiGLU feed-forward).
# ---------------------------------------------------------------------------
def _transition_row_kernel(x_ref, w12_ref, w3_ref, gamma_ref, beta_ref, o_ref, *,
                           hidden):
    x_raw = x_ref[0, 0]                                   # [N, D]
    x = _layernorm(x_raw, gamma_ref[...], beta_ref[...])
    ab = jnp.dot(x, w12_ref[...], preferred_element_type=jnp.float32)  # [N, 2*hidden]
    a = ab[:, :hidden]
    b = ab[:, hidden:]
    h = (a * jax.nn.sigmoid(a)) * b                       # SwiGLU
    upd = jnp.dot(h, w3_ref[...], preferred_element_type=jnp.float32)
    o_ref[0, 0] = (x_raw + upd).astype(o_ref.dtype)       # fused residual


def transition(pair, p):
    B, N, _, D = pair.shape
    hidden = p['w1'].shape[1]
    gamma = p['ln_gamma'].reshape(1, D)
    beta = p['ln_beta'].reshape(1, D)
    w12 = jnp.concatenate([p['w1'], p['w2']], axis=1)     # fused [D, 2*hidden]
    kernel = functools.partial(_transition_row_kernel, hidden=hidden)
    return pl.pallas_call(
        kernel,
        out_shape=jax.ShapeDtypeStruct(pair.shape, pair.dtype),
        grid_spec=pltpu.PrefetchScalarGridSpec(
            num_scalar_prefetch=0,
            grid=(B, N),
            in_specs=[
                pl.BlockSpec((1, 1, N, D), lambda b, r: (b, r, 0, 0)),
                pl.BlockSpec((D, 2 * hidden), lambda b, r: (0, 0)),
                pl.BlockSpec((hidden, D), lambda b, r: (0, 0)),
                pl.BlockSpec((1, D), lambda b, r: (0, 0)),
                pl.BlockSpec((1, D), lambda b, r: (0, 0)),
            ],
            out_specs=pl.BlockSpec((1, 1, N, D), lambda b, r: (b, r, 0, 0)),
        ),
        compiler_params=pltpu.CompilerParams(
            dimension_semantics=("parallel", "parallel"),
            vmem_limit_bytes=_VMEM_LIMIT),
    )(pair, w12, p['w_out'], gamma, beta)


# ---------------------------------------------------------------------------
# PairStack forward.
# ---------------------------------------------------------------------------
def pair_stack_forward(pair, params, *, n_heads=2):
    """Pallas forward pass of PairStack (eval mode)."""
    # TODO(synk): training-mode dropout(p=0.25) is not implemented; the forward
    # is reproduced in eval mode, where torch.dropout(train=False) is identity.
    pair = triangle_multiplication(pair, params['mult_out'], pattern='outgoing')
    pair = triangle_multiplication(pair, params['mult_in'], pattern='incoming')
    pair = triangle_attention(pair, params['att_start'], n_heads=n_heads,
                              node_type='starting')
    pair = triangle_attention(pair, params['att_end'], n_heads=n_heads,
                              node_type='ending')
    pair = transition(pair, params['transition'])
    return pair


# ---------------------------------------------------------------------------
# Pure-JAX reference (mirror of the PyTorch module, for correctness checking).
# ---------------------------------------------------------------------------
def _ln_ref(x, gamma, beta, eps=_LN_EPS):
    mu = jnp.mean(x, axis=-1, keepdims=True)
    var = jnp.mean(jnp.square(x - mu), axis=-1, keepdims=True)
    return (x - mu) / jnp.sqrt(var + eps) * gamma + beta


def _tri_mult_ref(pair, p, pattern):
    x = _ln_ref(pair, p['ln_gamma'], p['ln_beta'])
    ab = x @ p['w_in']
    a, b = jnp.split(ab, 2, axis=-1)
    a = jax.nn.sigmoid(a) * a
    b = jax.nn.sigmoid(b) * b
    g = jax.nn.sigmoid(x @ p['w_gate'])
    if pattern == 'outgoing':
        tri = jnp.einsum('...ik,...jk->...ij', a, b)
    else:
        tri = jnp.einsum('...ki,...kj->...ij', a, b)
    return _ln_ref(tri, p['ln_gamma'], p['ln_beta']) @ p['w_out'] * g


def _tri_att_ref(pair, p, n_heads, node_type):
    if node_type == 'ending':
        pair = jnp.swapaxes(pair, -3, -2)
    D = pair.shape[-1]
    hd = D // n_heads
    q = (pair @ p['wq']).reshape(*pair.shape[:-1], n_heads, hd)
    k = (pair @ p['wk']).reshape(*pair.shape[:-1], n_heads, hd)
    v = (pair @ p['wv']).reshape(*pair.shape[:-1], n_heads, hd)
    bias = pair @ p['wb']
    scores = jnp.einsum('...qhd,...khd->...qkh', q, k) * (D ** -0.5)
    scores = scores + bias                 # right-aligned broadcast (batch == 1)
    w = jax.nn.softmax(scores, axis=-2)
    out = jnp.einsum('...qkh,...khd->...qhd', w, v)
    out = out.reshape(*out.shape[:-2], D) @ p['wo']
    out = out * jax.nn.sigmoid(pair @ p['wg'])
    if node_type == 'ending':
        out = jnp.swapaxes(out, -3, -2)
    return out


def _transition_ref(pair, p):
    x = _ln_ref(pair, p['ln_gamma'], p['ln_beta'])
    a = x @ p['w1']
    b = x @ p['w2']
    return (a * jax.nn.sigmoid(a) * b) @ p['w_out']


def pair_stack_ref(pair, params, *, n_heads=2):
    pair = pair + _tri_mult_ref(pair, params['mult_out'], 'outgoing')
    pair = pair + _tri_mult_ref(pair, params['mult_in'], 'incoming')
    pair = pair + _tri_att_ref(pair, params['att_start'], n_heads, 'starting')
    pair = pair + _tri_att_ref(pair, params['att_end'], n_heads, 'ending')
    pair = pair + _transition_ref(pair, params['transition'])
    return pair


if __name__ == "__main__":
    # The reference module's TriangleMultiplication einsum / shared LayerNorm
    # require n_tokens == dim, and the attention bias broadcast requires
    # batch == 1, so the example uses B=1, N=D=32, H=2.
    B, N, DIM, HEADS = 1, 32, 32, 2
    HID = 4 * DIM

    key = jax.random.PRNGKey(0)
    keys = iter(jax.random.split(key, 32))

    def linear(d_in, d_out):
        lim = 1.0 / (d_in ** 0.5)
        return jax.random.uniform(next(keys), (d_in, d_out), jnp.float32, -lim, lim)

    def ln_params():
        g = 1.0 + 0.1 * jax.random.normal(next(keys), (DIM,), jnp.float32)
        b = 0.1 * jax.random.normal(next(keys), (DIM,), jnp.float32)
        return g, b

    def mult_params():
        g, b = ln_params()
        return {'w_in': linear(DIM, 2 * DIM), 'w_gate': linear(DIM, DIM),
                'w_out': linear(DIM, DIM), 'ln_gamma': g, 'ln_beta': b}

    def att_params():
        return {'wq': linear(DIM, DIM), 'wk': linear(DIM, DIM),
                'wv': linear(DIM, DIM), 'wb': linear(DIM, HEADS),
                'wo': linear(DIM, DIM), 'wg': linear(DIM, DIM)}

    tg, tb = ln_params()
    params = {
        'mult_out': mult_params(),
        'mult_in': mult_params(),
        'att_start': att_params(),
        'att_end': att_params(),
        'transition': {'w1': linear(DIM, HID), 'w2': linear(DIM, HID),
                       'w_out': linear(HID, DIM), 'ln_gamma': tg, 'ln_beta': tb},
    }
    pair_repr = jax.random.normal(next(keys), (B, N, N, DIM), jnp.float32)

    fwd = jax.jit(functools.partial(pair_stack_forward, n_heads=HEADS))
    out = jax.block_until_ready(fwd(pair_repr, params))

    with jax.default_matmul_precision("highest"):
        ref = jax.block_until_ready(pair_stack_ref(pair_repr, params, n_heads=HEADS))

    assert out.shape == ref.shape
    max_err = float(jnp.max(jnp.abs(out - ref)))
    # Attention matmuls use bf16 MXU operands (per perf review) -> ~1e-2 agreement.
    assert jnp.allclose(out, ref, rtol=5e-2, atol=5e-2), f"max abs err = {max_err}"
    print("KERNEL_OK")
</pallas_src>

<mosaic_0001>
module attributes {stable_mosaic.version = 11 : i64} {
  func.func @_tri_mult_row_kernel(%arg0: i32, %arg1: i32, %arg2: memref<1x1x32x32xf32, #tpu.memory_space<vmem>>, %arg3: memref<32x64xf32, #tpu.memory_space<vmem>>, %arg4: memref<32x32xf32, #tpu.memory_space<vmem>>, %arg5: memref<32x32xf32, #tpu.memory_space<vmem>>, %arg6: memref<1x32xf32, #tpu.memory_space<vmem>>, %arg7: memref<1x32xf32, #tpu.memory_space<vmem>>, %arg8: memref<1x1x32x32xf32, #tpu.memory_space<vmem>>) attributes {dimension_semantics = [#tpu.dimension_semantics<parallel>, #tpu.dimension_semantics<parallel>], iteration_bounds = array<i64: 1, 32>, scalar_prefetch = 0 : i64, scratch_operands = 0 : i64, tpu.core_type = #tpu.core_type<tc>, window_params = [{transform_indices = @transform_0, window_bounds = array<i64: 1, 1, 32, 32>}, {pipeline_mode = #tpu.pipeline_mode<synchronous>, transform_indices = @transform_1, window_bounds = array<i64: 32, 64>}, {pipeline_mode = #tpu.pipeline_mode<synchronous>, transform_indices = @transform_2, window_bounds = array<i64: 32, 32>}, {pipeline_mode = #tpu.pipeline_mode<synchronous>, transform_indices = @transform_3, window_bounds = array<i64: 32, 32>}, {pipeline_mode = #tpu.pipeline_mode<synchronous>, transform_indices = @transform_4, window_bounds = array<i64: 1, 32>}, {pipeline_mode = #tpu.pipeline_mode<synchronous>, transform_indices = @transform_5, window_bounds = array<i64: 1, 32>}, {transform_indices = @transform_6, window_bounds = array<i64: 1, 1, 32, 32>}]} {
    %c0 = arith.constant 0 : index
    %c0_0 = arith.constant 0 : index
    %c0_1 = arith.constant 0 : index
    %c0_2 = arith.constant 0 : index
    %0 = vector.load %arg2[%c0, %c0_0, %c0_1, %c0_2] : memref<1x1x32x32xf32, #tpu.memory_space<vmem>>, vector<1x1x32x32xf32>
    %1 = vector.shape_cast %0 : vector<1x1x32x32xf32> to vector<32x32xf32>
    %c0_3 = arith.constant 0 : index
    %c0_4 = arith.constant 0 : index
    %2 = vector.load %arg6[%c0_3, %c0_4] : memref<1x32xf32, #tpu.memory_space<vmem>>, vector<1x32xf32>
    %c0_5 = arith.constant 0 : index
    %c0_6 = arith.constant 0 : index
    %3 = vector.load %arg7[%c0_5, %c0_6] : memref<1x32xf32, #tpu.memory_space<vmem>>, vector<1x32xf32>
    %cst = arith.constant dense<0.000000e+00> : vector<32xf32>
    %4 = vector.multi_reduction <add>, %1, %cst [1] : vector<32x32xf32> to vector<32xf32>
    %5 = vector.shape_cast %4 : vector<32xf32> to vector<32x1xf32>
    %cst_7 = arith.constant 3.200000e+01 : f32
    %6 = vector.broadcast %cst_7 : f32 to vector<32x1xf32>
    %7 = arith.divf %5, %6 : vector<32x1xf32>
    %8 = vector.broadcast %7 : vector<32x1xf32> to vector<32x32xf32>
    %9 = arith.subf %1, %8 : vector<32x32xf32>
    %10 = arith.mulf %9, %9 : vector<32x32xf32>
    %cst_8 = arith.constant dense<0.000000e+00> : vector<32xf32>
    %11 = vector.multi_reduction <add>, %10, %cst_8 [1] : vector<32x32xf32> to vector<32xf32>
    %12 = vector.shape_cast %11 : vector<32xf32> to vector<32x1xf32>
    %cst_9 = arith.constant 3.200000e+01 : f32
    %13 = vector.broadcast %cst_9 : f32 to vector<32x1xf32>
    %14 = arith.divf %12, %13 : vector<32x1xf32>
    %cst_10 = arith.constant 9.99999974E-6 : f32
    %15 = vector.broadcast %cst_10 : f32 to vector<32x1xf32>
    %16 = arith.addf %14, %15 : vector<32x1xf32>
    %17 = math.rsqrt %16 : vector<32x1xf32>
    %18 = vector.broadcast %17 : vector<32x1xf32> to vector<32x32xf32>
    %19 = arith.mulf %9, %18 : vector<32x32xf32>
    %20 = vector.broadcast %2 : vector<1x32xf32> to vector<32x32xf32>
    %21 = arith.mulf %19, %20 : vector<32x32xf32>
    %22 = vector.broadcast %3 : vector<1x32xf32> to vector<32x32xf32>
    %23 = arith.addf %21, %22 : vector<32x32xf32>
    %c0_11 = arith.constant 0 : index
    %c0_12 = arith.constant 0 : index
    %24 = vector.load %arg3[%c0_11, %c0_12] : memref<32x64xf32, #tpu.memory_space<vmem>>, vector<32x64xf32>
    %cst_13 = arith.constant dense<0.000000e+00> : vector<32x64xf32>
    %25 = tpu.matmul %23, %24, %cst_13 {dimension_numbers = #tpu.dot_dimension_numbers<[1], [0], [0], [1], [0, 0, 1, 1], [], []>} : vector<32x32xf32>, vector<32x64xf32>, vector<32x64xf32> -> vector<32x64xf32>
    %26 = vector.extract_strided_slice %25 {offsets = [0, 0], sizes = [32, 32], strides = [1, 1]} : vector<32x64xf32> to vector<32x32xf32>
    %27 = vector.extract_strided_slice %25 {offsets = [0, 32], sizes = [32, 32], strides = [1, 1]} : vector<32x64xf32> to vector<32x32xf32>
    %28 = arith.negf %26 : vector<32x32xf32>
    %29 = math.exp %28 : vector<32x32xf32>
    %cst_14 = arith.constant 1.000000e+00 : f32
    %30 = vector.broadcast %cst_14 : f32 to vector<32x32xf32>
    %31 = arith.addf %30, %29 : vector<32x32xf32>
    %32 = arith.divf %30, %31 : vector<32x32xf32>
    %33 = arith.mulf %32, %26 : vector<32x32xf32>
    %34 = arith.negf %27 : vector<32x32xf32>
    %35 = math.exp %34 : vector<32x32xf32>
    %cst_15 = arith.constant 1.000000e+00 : f32
    %36 = vector.broadcast %cst_15 : f32 to vector<32x32xf32>
    %37 = arith.addf %36, %35 : vector<32x32xf32>
    %38 = arith.divf %36, %37 : vector<32x32xf32>
    %39 = arith.mulf %38, %27 : vector<32x32xf32>
    %c0_16 = arith.constant 0 : index
    %c0_17 = arith.constant 0 : index
    %40 = vector.load %arg4[%c0_16, %c0_17] : memref<32x32xf32, #tpu.memory_space<vmem>>, vector<32x32xf32>
    %cst_18 = arith.constant dense<0.000000e+00> : vector<32x32xf32>
    %41 = tpu.matmul %23, %40, %cst_18 {dimension_numbers = #tpu.dot_dimension_numbers<[1], [0], [0], [1], [0, 0, 1, 1], [], []>} : vector<32x32xf32>, vector<32x32xf32>, vector<32x32xf32> -> vector<32x32xf32>
    %42 = arith.negf %41 : vector<32x32xf32>
    %43 = math.exp %42 : vector<32x32xf32>
    %cst_19 = arith.constant 1.000000e+00 : f32
    %44 = vector.broadcast %cst_19 : f32 to vector<32x32xf32>
    %45 = arith.addf %44, %43 : vector<32x32xf32>
    %46 = arith.divf %44, %45 : vector<32x32xf32>
    %47 = tpu.transpose %33, [1, 0] : vector<32x32xf32> -> vector<32x32xf32>
    %cst_20 = arith.constant dense<0.000000e+00> : vector<32x32xf32>
    %48 = tpu.matmul %47, %39, %cst_20 {dimension_numbers = #tpu.dot_dimension_numbers<[1], [0], [0], [1], [0, 0, 1, 1], [], []>} : vector<32x32xf32>, vector<32x32xf32>, vector<32x32xf32> -> vector<32x32xf32>
    %cst_21 = arith.constant dense<0.000000e+00> : vector<32xf32>
    %49 = vector.multi_reduction <add>, %48, %cst_21 [1] : vector<32x32xf32> to vector<32xf32>
    %50 = vector.shape_cast %49 : vector<32xf32> to vector<32x1xf32>
    %cst_22 = arith.constant 3.200000e+01 : f32
    %51 = vector.broadcast %cst_22 : f32 to vector<32x1xf32>
    %52 = arith.divf %50, %51 : vector<32x1xf32>
    %53 = vector.broadcast %52 : vector<32x1xf32> to vector<32x32xf32>
    %54 = arith.subf %48, %53 : vector<32x32xf32>
    %55 = arith.mulf %54, %54 : vector<32x32xf32>
    %cst_23 = arith.constant dense<0.000000e+00> : vector<32xf32>
    %56 = vector.multi_reduction <add>, %55, %cst_23 [1] : vector<32x32xf32> to vector<32xf32>
    %57 = vector.shape_cast %56 : vector<32xf32> to vector<32x1xf32>
    %cst_24 = arith.constant 3.200000e+01 : f32
    %58 = vector.broadcast %cst_24 : f32 to vector<32x1xf32>
    %59 = arith.divf %57, %58 : vector<32x1xf32>
    %cst_25 = arith.constant 9.99999974E-6 : f32
    %60 = vector.broadcast %cst_25 : f32 to vector<32x1xf32>
    %61 = arith.addf %59, %60 : vector<32x1xf32>
    %62 = math.rsqrt %61 : vector<32x1xf32>
    %63 = vector.broadcast %62 : vector<32x1xf32> to vector<32x32xf32>
    %64 = arith.mulf %54, %63 : vector<32x32xf32>
    %65 = vector.broadcast %2 : vector<1x32xf32> to vector<32x32xf32>
    %66 = arith.mulf %64, %65 : vector<32x32xf32>
    %67 = vector.broadcast %3 : vector<1x32xf32> to vector<32x32xf32>
    %68 = arith.addf %66, %67 : vector<32x32xf32>
    %c0_26 = arith.constant 0 : index
    %c0_27 = arith.constant 0 : index
    %69 = vector.load %arg5[%c0_26, %c0_27] : memref<32x32xf32, #tpu.memory_space<vmem>>, vector<32x32xf32>
    %cst_28 = arith.constant dense<0.000000e+00> : vector<32x32xf32>
    %70 = tpu.matmul %68, %69, %cst_28 {dimension_numbers = #tpu.dot_dimension_numbers<[1], [0], [0], [1], [0, 0, 1, 1], [], []>} : vector<32x32xf32>, vector<32x32xf32>, vector<32x32xf32> -> vector<32x32xf32>
    %71 = arith.mulf %70, %46 : vector<32x32xf32>
    %72 = arith.addf %1, %71 : vector<32x32xf32>
    %c0_29 = arith.constant 0 : index
    %c0_30 = arith.constant 0 : index
    %c0_31 = arith.constant 0 : index
    %c0_32 = arith.constant 0 : index
    %73 = vector.load %arg8[%c0_29, %c0_30, %c0_31, %c0_32] : memref<1x1x32x32xf32, #tpu.memory_space<vmem>>, vector<1x1x32x32xf32>
    %74 = vector.shape_cast %73 : vector<1x1x32x32xf32> to vector<32x32xf32>
    %75 = vector.shape_cast %72 : vector<32x32xf32> to vector<1x1x32x32xf32>
    tpu.vector_store %arg8[%c0_29, %c0_30, %c0_31, %c0_32], %75 {strides = array<i32>} : memref<1x1x32x32xf32, #tpu.memory_space<vmem>>, vector<1x1x32x32xf32>,
    return
  }
  func.func @transform_0(%arg0: i32, %arg1: i32) -> (i32, i32, i32, i32) {
    %c0_i32 = arith.constant 0 : i32
    %c0_i32_0 = arith.constant 0 : i32
    %c0_i32_1 = arith.constant 0 : i32
    return %arg0, %arg1, %c0_i32, %c0_i32_0 : i32, i32, i32, i32
  }
  func.func @transform_1(%arg0: i32, %arg1: i32) -> (i32, i32) {
    %c0_i32 = arith.constant 0 : i32
    %c0_i32_0 = arith.constant 0 : i32
    %c0_i32_1 = arith.constant 0 : i32
    return %c0_i32, %c0_i32_0 : i32, i32
  }
  func.func @transform_2(%arg0: i32, %arg1: i32) -> (i32, i32) {
    %c0_i32 = arith.constant 0 : i32
    %c0_i32_0 = arith.constant 0 : i32
    %c0_i32_1 = arith.constant 0 : i32
    return %c0_i32, %c0_i32_0 : i32, i32
  }
  func.func @transform_3(%arg0: i32, %arg1: i32) -> (i32, i32) {
    %c0_i32 = arith.constant 0 : i32
    %c0_i32_0 = arith.constant 0 : i32
    %c0_i32_1 = arith.constant 0 : i32
    return %c0_i32, %c0_i32_0 : i32, i32
  }
  func.func @transform_4(%arg0: i32, %arg1: i32) -> (i32, i32) {
    %c0_i32 = arith.constant 0 : i32
    %c0_i32_0 = arith.constant 0 : i32
    %c0_i32_1 = arith.constant 0 : i32
    return %c0_i32, %c0_i32_0 : i32, i32
  }
  func.func @transform_5(%arg0: i32, %arg1: i32) -> (i32, i32) {
    %c0_i32 = arith.constant 0 : i32
    %c0_i32_0 = arith.constant 0 : i32
    %c0_i32_1 = arith.constant 0 : i32
    return %c0_i32, %c0_i32_0 : i32, i32
  }
  func.func @transform_6(%arg0: i32, %arg1: i32) -> (i32, i32, i32, i32) {
    %c0_i32 = arith.constant 0 : i32
    %c0_i32_0 = arith.constant 0 : i32
    %c0_i32_1 = arith.constant 0 : i32
    return %arg0, %arg1, %c0_i32, %c0_i32_0 : i32, i32, i32, i32
  }
}

module attributes {stable_mosaic.version = 11 : i64} {
  func.func @_tri_mult_row_kernel(%arg0: i32, %arg1: i32, %arg2: memref<1x1x32x32xf32, #tpu.memory_space<vmem>>, %arg3: memref<32x64xf32, #tpu.memory_space<vmem>>, %arg4: memref<32x32xf32, #tpu.memory_space<vmem>>, %arg5: memref<32x32xf32, #tpu.memory_space<vmem>>, %arg6: memref<1x32xf32, #tpu.memory_space<vmem>>, %arg7: memref<1x32xf32, #tpu.memory_space<vmem>>, %arg8: memref<1x1x32x32xf32, #tpu.memory_space<vmem>>) attributes {dimension_semantics = [#tpu.dimension_semantics<parallel>, #tpu.dimension_semantics<parallel>], iteration_bounds = array<i64: 1, 32>, scalar_prefetch = 0 : i64, scratch_operands = 0 : i64, tpu.core_type = #tpu.core_type<tc>, window_params = [{transform_indices = @transform_0, window_bounds = array<i64: 1, 1, 32, 32>}, {pipeline_mode = #tpu.pipeline_mode<synchronous>, transform_indices = @transform_1, window_bounds = array<i64: 32, 64>}, {pipeline_mode = #tpu.pipeline_mode<synchronous>, transform_indices = @transform_2, window_bounds = array<i64: 32, 32>}, {pipeline_mode = #tpu.pipeline_mode<synchronous>, transform_indices = @transform_3, window_bounds = array<i64: 32, 32>}, {pipeline_mode = #tpu.pipeline_mode<synchronous>, transform_indices = @transform_4, window_bounds = array<i64: 1, 32>}, {pipeline_mode = #tpu.pipeline_mode<synchronous>, transform_indices = @transform_5, window_bounds = array<i64: 1, 32>}, {transform_indices = @transform_6, window_bounds = array<i64: 1, 1, 32, 32>}]} {
    %c0 = arith.constant 0 : index
    %c0_0 = arith.constant 0 : index
    %c0_1 = arith.constant 0 : index
    %c0_2 = arith.constant 0 : index
    %0 = vector.load %arg2[%c0, %c0_0, %c0_1, %c0_2] : memref<1x1x32x32xf32, #tpu.memory_space<vmem>>, vector<1x1x32x32xf32>
    %1 = vector.shape_cast %0 : vector<1x1x32x32xf32> to vector<32x32xf32>
    %c0_3 = arith.constant 0 : index
    %c0_4 = arith.constant 0 : index
    %2 = vector.load %arg6[%c0_3, %c0_4] : memref<1x32xf32, #tpu.memory_space<vmem>>, vector<1x32xf32>
    %c0_5 = arith.constant 0 : index
    %c0_6 = arith.constant 0 : index
    %3 = vector.load %arg7[%c0_5, %c0_6] : memref<1x32xf32, #tpu.memory_space<vmem>>, vector<1x32xf32>
    %cst = arith.constant dense<0.000000e+00> : vector<32xf32>
    %4 = vector.multi_reduction <add>, %1, %cst [1] : vector<32x32xf32> to vector<32xf32>
    %5 = vector.shape_cast %4 : vector<32xf32> to vector<32x1xf32>
    %cst_7 = arith.constant 3.200000e+01 : f32
    %6 = vector.broadcast %cst_7 : f32 to vector<32x1xf32>
    %7 = arith.divf %5, %6 : vector<32x1xf32>
    %8 = vector.broadcast %7 : vector<32x1xf32> to vector<32x32xf32>
    %9 = arith.subf %1, %8 : vector<32x32xf32>
    %10 = arith.mulf %9, %9 : vector<32x32xf32>
    %cst_8 = arith.constant dense<0.000000e+00> : vector<32xf32>
    %11 = vector.multi_reduction <add>, %10, %cst_8 [1] : vector<32x32xf32> to vector<32xf32>
    %12 = vector.shape_cast %11 : vector<32xf32> to vector<32x1xf32>
    %cst_9 = arith.constant 3.200000e+01 : f32
    %13 = vector.broadcast %cst_9 : f32 to vector<32x1xf32>
    %14 = arith.divf %12, %13 : vector<32x1xf32>
    %cst_10 = arith.constant 9.99999974E-6 : f32
    %15 = vector.broadcast %cst_10 : f32 to vector<32x1xf32>
    %16 = arith.addf %14, %15 : vector<32x1xf32>
    %17 = math.rsqrt %16 : vector<32x1xf32>
    %18 = vector.broadcast %17 : vector<32x1xf32> to vector<32x32xf32>
    %19 = arith.mulf %9, %18 : vector<32x32xf32>
    %20 = vector.broadcast %2 : vector<1x32xf32> to vector<32x32xf32>
    %21 = arith.mulf %19, %20 : vector<32x32xf32>
    %22 = vector.broadcast %3 : vector<1x32xf32> to vector<32x32xf32>
    %23 = arith.addf %21, %22 : vector<32x32xf32>
    %c0_11 = arith.constant 0 : index
    %c0_12 = arith.constant 0 : index
    %24 = vector.load %arg3[%c0_11, %c0_12] : memref<32x64xf32, #tpu.memory_space<vmem>>, vector<32x64xf32>
    %cst_13 = arith.constant dense<0.000000e+00> : vector<32x64xf32>
    %25 = tpu.matmul %23, %24, %cst_13 {dimension_numbers = #tpu.dot_dimension_numbers<[1], [0], [0], [1], [0, 0, 1, 1], [], []>} : vector<32x32xf32>, vector<32x64xf32>, vector<32x64xf32> -> vector<32x64xf32>
    %26 = vector.extract_strided_slice %25 {offsets = [0, 0], sizes = [32, 32], strides = [1, 1]} : vector<32x64xf32> to vector<32x32xf32>
    %27 = vector.extract_strided_slice %25 {offsets = [0, 32], sizes = [32, 32], strides = [1, 1]} : vector<32x64xf32> to vector<32x32xf32>
    %28 = arith.negf %26 : vector<32x32xf32>
    %29 = math.exp %28 : vector<32x32xf32>
    %cst_14 = arith.constant 1.000000e+00 : f32
    %30 = vector.broadcast %cst_14 : f32 to vector<32x32xf32>
    %31 = arith.addf %30, %29 : vector<32x32xf32>
    %32 = arith.divf %30, %31 : vector<32x32xf32>
    %33 = arith.mulf %32, %26 : vector<32x32xf32>
    %34 = arith.negf %27 : vector<32x32xf32>
    %35 = math.exp %34 : vector<32x32xf32>
    %cst_15 = arith.constant 1.000000e+00 : f32
    %36 = vector.broadcast %cst_15 : f32 to vector<32x32xf32>
    %37 = arith.addf %36, %35 : vector<32x32xf32>
    %38 = arith.divf %36, %37 : vector<32x32xf32>
    %39 = arith.mulf %38, %27 : vector<32x32xf32>
    %c0_16 = arith.constant 0 : index
    %c0_17 = arith.constant 0 : index
    %40 = vector.load %arg4[%c0_16, %c0_17] : memref<32x32xf32, #tpu.memory_space<vmem>>, vector<32x32xf32>
    %cst_18 = arith.constant dense<0.000000e+00> : vector<32x32xf32>
    %41 = tpu.matmul %23, %40, %cst_18 {dimension_numbers = #tpu.dot_dimension_numbers<[1], [0], [0], [1], [0, 0, 1, 1], [], []>} : vector<32x32xf32>, vector<32x32xf32>, vector<32x32xf32> -> vector<32x32xf32>
    %42 = arith.negf %41 : vector<32x32xf32>
    %43 = math.exp %42 : vector<32x32xf32>
    %cst_19 = arith.constant 1.000000e+00 : f32
    %44 = vector.broadcast %cst_19 : f32 to vector<32x32xf32>
    %45 = arith.addf %44, %43 : vector<32x32xf32>
    %46 = arith.divf %44, %45 : vector<32x32xf32>
    "tpu.trace_start"() <{level = 10 : i32, message = "ik,jk->ij"}> : () -> ()
    %cst_20 = arith.constant dense<0.000000e+00> : vector<32x32xf32>
    %47 = tpu.matmul %33, %39, %cst_20 {dimension_numbers = #tpu.dot_dimension_numbers<[1], [1], [0], [0], [0, 0, 1, 0], [], []>} : vector<32x32xf32>, vector<32x32xf32>, vector<32x32xf32> -> vector<32x32xf32>
    "tpu.trace_stop"() : () -> ()
    %cst_21 = arith.constant dense<0.000000e+00> : vector<32xf32>
    %48 = vector.multi_reduction <add>, %47, %cst_21 [1] : vector<32x32xf32> to vector<32xf32>
    %49 = vector.shape_cast %48 : vector<32xf32> to vector<32x1xf32>
    %cst_22 = arith.constant 3.200000e+01 : f32
    %50 = vector.broadcast %cst_22 : f32 to vector<32x1xf32>
    %51 = arith.divf %49, %50 : vector<32x1xf32>
    %52 = vector.broadcast %51 : vector<32x1xf32> to vector<32x32xf32>
    %53 = arith.subf %47, %52 : vector<32x32xf32>
    %54 = arith.mulf %53, %53 : vector<32x32xf32>
    %cst_23 = arith.constant dense<0.000000e+00> : vector<32xf32>
    %55 = vector.multi_reduction <add>, %54, %cst_23 [1] : vector<32x32xf32> to vector<32xf32>
    %56 = vector.shape_cast %55 : vector<32xf32> to vector<32x1xf32>
    %cst_24 = arith.constant 3.200000e+01 : f32
    %57 = vector.broadcast %cst_24 : f32 to vector<32x1xf32>
    %58 = arith.divf %56, %57 : vector<32x1xf32>
    %cst_25 = arith.constant 9.99999974E-6 : f32
    %59 = vector.broadcast %cst_25 : f32 to vector<32x1xf32>
    %60 = arith.addf %58, %59 : vector<32x1xf32>
    %61 = math.rsqrt %60 : vector<32x1xf32>
    %62 = vector.broadcast %61 : vector<32x1xf32> to vector<32x32xf32>
    %63 = arith.mulf %53, %62 : vector<32x32xf32>
    %64 = vector.broadcast %2 : vector<1x32xf32> to vector<32x32xf32>
    %65 = arith.mulf %63, %64 : vector<32x32xf32>
    %66 = vector.broadcast %3 : vector<1x32xf32> to vector<32x32xf32>
    %67 = arith.addf %65, %66 : vector<32x32xf32>
    %c0_26 = arith.constant 0 : index
    %c0_27 = arith.constant 0 : index
    %68 = vector.load %arg5[%c0_26, %c0_27] : memref<32x32xf32, #tpu.memory_space<vmem>>, vector<32x32xf32>
    %cst_28 = arith.constant dense<0.000000e+00> : vector<32x32xf32>
    %69 = tpu.matmul %67, %68, %cst_28 {dimension_numbers = #tpu.dot_dimension_numbers<[1], [0], [0], [1], [0, 0, 1, 1], [], []>} : vector<32x32xf32>, vector<32x32xf32>, vector<32x32xf32> -> vector<32x32xf32>
    %70 = arith.mulf %69, %46 : vector<32x32xf32>
    %71 = arith.addf %1, %70 : vector<32x32xf32>
    %c0_29 = arith.constant 0 : index
    %c0_30 = arith.constant 0 : index
    %c0_31 = arith.constant 0 : index
    %c0_32 = arith.constant 0 : index
    %72 = vector.load %arg8[%c0_29, %c0_30, %c0_31, %c0_32] : memref<1x1x32x32xf32, #tpu.memory_space<vmem>>, vector<1x1x32x32xf32>
    %73 = vector.shape_cast %72 : vector<1x1x32x32xf32> to vector<32x32xf32>
    %74 = vector.shape_cast %71 : vector<32x32xf32> to vector<1x1x32x32xf32>
    tpu.vector_store %arg8[%c0_29, %c0_30, %c0_31, %c0_32], %74 {strides = array<i32>} : memref<1x1x32x32xf32, #tpu.memory_space<vmem>>, vector<1x1x32x32xf32>,
    return
  }
  func.func @transform_0(%arg0: i32, %arg1: i32) -> (i32, i32, i32, i32) {
    %c0_i32 = arith.constant 0 : i32
    %c0_i32_0 = arith.constant 0 : i32
    %c0_i32_1 = arith.constant 0 : i32
    return %arg0, %arg1, %c0_i32, %c0_i32_0 : i32, i32, i32, i32
  }
  func.func @transform_1(%arg0: i32, %arg1: i32) -> (i32, i32) {
    %c0_i32 = arith.constant 0 : i32
    %c0_i32_0 = arith.constant 0 : i32
    %c0_i32_1 = arith.constant 0 : i32
    return %c0_i32, %c0_i32_0 : i32, i32
  }
  func.func @transform_2(%arg0: i32, %arg1: i32) -> (i32, i32) {
    %c0_i32 = arith.constant 0 : i32
    %c0_i32_0 = arith.constant 0 : i32
    %c0_i32_1 = arith.constant 0 : i32
    return %c0_i32, %c0_i32_0 : i32, i32
  }
  func.func @transform_3(%arg0: i32, %arg1: i32) -> (i32, i32) {
    %c0_i32 = arith.constant 0 : i32
    %c0_i32_0 = arith.constant 0 : i32
    %c0_i32_1 = arith.constant 0 : i32
    return %c0_i32, %c0_i32_0 : i32, i32
  }
  func.func @transform_4(%arg0: i32, %arg1: i32) -> (i32, i32) {
    %c0_i32 = arith.constant 0 : i32
    %c0_i32_0 = arith.constant 0 : i32
    %c0_i32_1 = arith.constant 0 : i32
    return %c0_i32, %c0_i32_0 : i32, i32
  }
  func.func @transform_5(%arg0: i32, %arg1: i32) -> (i32, i32) {
    %c0_i32 = arith.constant 0 : i32
    %c0_i32_0 = arith.constant 0 : i32
    %c0_i32_1 = arith.constant 0 : i32
    return %c0_i32, %c0_i32_0 : i32, i32
  }
  func.func @transform_6(%arg0: i32, %arg1: i32) -> (i32, i32, i32, i32) {
    %c0_i32 = arith.constant 0 : i32
    %c0_i32_0 = arith.constant 0 : i32
    %c0_i32_1 = arith.constant 0 : i32
    return %arg0, %arg1, %c0_i32, %c0_i32_0 : i32, i32, i32, i32
  }
}

module attributes {stable_mosaic.version = 11 : i64} {
  func.func @_tri_attn_row_kernel(%arg0: i32, %arg1: i32, %arg2: memref<1x1x32x32xf32, #tpu.memory_space<vmem>>, %arg3: memref<32x128xbf16, #tpu.memory_space<vmem>>, %arg4: memref<2x16x32xbf16, #tpu.memory_space<vmem>>, %arg5: memref<1x2x32x32xf32, #tpu.memory_space<vmem>>, %arg6: memref<1x1x32x32xf32, #tpu.memory_space<vmem>>) attributes {dimension_semantics = [#tpu.dimension_semantics<parallel>, #tpu.dimension_semantics<parallel>], iteration_bounds = array<i64: 1, 32>, scalar_prefetch = 0 : i64, scratch_operands = 0 : i64, tpu.core_type = #tpu.core_type<tc>, window_params = [{transform_indices = @transform_0, window_bounds = array<i64: 1, 1, 32, 32>}, {pipeline_mode = #tpu.pipeline_mode<synchronous>, transform_indices = @transform_1, window_bounds = array<i64: 32, 128>}, {pipeline_mode = #tpu.pipeline_mode<synchronous>, transform_indices = @transform_2, window_bounds = array<i64: 2, 16, 32>}, {transform_indices = @transform_3, window_bounds = array<i64: 1, 2, 32, 32>}, {transform_indices = @transform_4, window_bounds = array<i64: 1, 1, 32, 32>}]} {
    %c0 = arith.constant 0 : index
    %c0_0 = arith.constant 0 : index
    %c0_1 = arith.constant 0 : index
    %c0_2 = arith.constant 0 : index
    %0 = vector.load %arg2[%c0, %c0_0, %c0_1, %c0_2] : memref<1x1x32x32xf32, #tpu.memory_space<vmem>>, vector<1x1x32x32xf32>
    %1 = vector.shape_cast %0 : vector<1x1x32x32xf32> to vector<32x32xf32>
    %2 = arith.truncf %1 : vector<32x32xf32> to vector<32x32xbf16>
    %c0_3 = arith.constant 0 : index
    %c0_4 = arith.constant 0 : index
    %3 = vector.load %arg3[%c0_3, %c0_4] : memref<32x128xbf16, #tpu.memory_space<vmem>>, vector<32x128xbf16>
    %cst = arith.constant dense<0.000000e+00> : vector<32x128xf32>
    %4 = tpu.matmul %2, %3, %cst {dimension_numbers = #tpu.dot_dimension_numbers<[1], [0], [0], [1], [0, 0, 1, 1], [], []>} : vector<32x32xbf16>, vector<32x128xbf16>, vector<32x128xf32> -> vector<32x128xf32>
    %5 = vector.extract_strided_slice %4 {offsets = [0, 96], sizes = [32, 32], strides = [1, 1]} : vector<32x128xf32> to vector<32x32xf32>
    %6 = arith.negf %5 : vector<32x32xf32>
    %7 = math.exp %6 : vector<32x32xf32>
    %cst_5 = arith.constant 1.000000e+00 : f32
    %8 = vector.broadcast %cst_5 : f32 to vector<32x32xf32>
    %9 = arith.addf %8, %7 : vector<32x32xf32>
    %10 = arith.divf %8, %9 : vector<32x32xf32>
    %cst_6 = arith.constant 0.000000e+00 : f32
    %11 = vector.broadcast %cst_6 : f32 to vector<32x32xf32>
    %12 = vector.extract_strided_slice %4 {offsets = [0, 0], sizes = [32, 16], strides = [1, 1]} : vector<32x128xf32> to vector<32x16xf32>
    %13 = arith.truncf %12 : vector<32x16xf32> to vector<32x16xbf16>
    %14 = vector.extract_strided_slice %4 {offsets = [0, 32], sizes = [32, 16], strides = [1, 1]} : vector<32x128xf32> to vector<32x16xf32>
    %15 = arith.truncf %14 : vector<32x16xf32> to vector<32x16xbf16>
    %16 = vector.extract_strided_slice %4 {offsets = [0, 64], sizes = [32, 16], strides = [1, 1]} : vector<32x128xf32> to vector<32x16xf32>
    %17 = arith.truncf %16 : vector<32x16xf32> to vector<32x16xbf16>
    "tpu.trace_start"() <{level = 10 : i32, message = "qd,kd->qk"}> : () -> ()
    %cst_7 = arith.constant dense<0.000000e+00> : vector<32x32xf32>
    %18 = tpu.matmul %13, %15, %cst_7 {dimension_numbers = #tpu.dot_dimension_numbers<[1], [1], [0], [0], [0, 0, 1, 0], [], []>} : vector<32x16xbf16>, vector<32x16xbf16>, vector<32x32xf32> -> vector<32x32xf32>
    "tpu.trace_stop"() : () -> ()
    %c0_8 = arith.constant 0 : index
    %c0_9 = arith.constant 0 : index
    %c0_10 = arith.constant 0 : index
    %c0_11 = arith.constant 0 : index
    %19 = vector.load %arg5[%c0_8, %c0_9, %c0_10, %c0_11] : memref<1x2x32x32xf32, #tpu.memory_space<vmem>>, vector<1x1x32x32xf32>
    %20 = vector.shape_cast %19 : vector<1x1x32x32xf32> to vector<32x32xf32>
    %21 = arith.addf %18, %20 : vector<32x32xf32>
    %cst_12 = arith.constant dense<0xFF800000> : vector<32xf32>
    %22 = vector.multi_reduction <maximumf>, %21, %cst_12 [1] : vector<32x32xf32> to vector<32xf32>
    %23 = vector.shape_cast %22 : vector<32xf32> to vector<32x1xf32>
    %24 = vector.broadcast %23 : vector<32x1xf32> to vector<32x32xf32>
    %25 = arith.subf %21, %24 : vector<32x32xf32>
    %26 = math.exp %25 : vector<32x32xf32>
    %cst_13 = arith.constant dense<0.000000e+00> : vector<32xf32>
    %27 = vector.multi_reduction <add>, %26, %cst_13 [1] : vector<32x32xf32> to vector<32xf32>
    %28 = vector.shape_cast %27 : vector<32xf32> to vector<32x1xf32>
    %29 = tpu.reciprocal %28 {approx = true} : vector<32x1xf32> -> vector<32x1xf32>
    %30 = vector.broadcast %29 : vector<32x1xf32> to vector<32x32xf32>
    %31 = arith.mulf %26, %30 : vector<32x32xf32>
    %32 = arith.truncf %31 : vector<32x32xf32> to vector<32x32xbf16>
    %cst_14 = arith.constant dense<0.000000e+00> : vector<32x16xf32>
    %33 = tpu.matmul %32, %17, %cst_14 {dimension_numbers = #tpu.dot_dimension_numbers<[1], [0], [0], [1], [0, 0, 1, 1], [], []>} : vector<32x32xbf16>, vector<32x16xbf16>, vector<32x16xf32> -> vector<32x16xf32>
    %34 = arith.truncf %33 : vector<32x16xf32> to vector<32x16xbf16>
    %c0_15 = arith.constant 0 : index
    %c0_16 = arith.constant 0 : index
    %c0_17 = arith.constant 0 : index
    %35 = vector.load %arg4[%c0_15, %c0_16, %c0_17] : memref<2x16x32xbf16, #tpu.memory_space<vmem>>, vector<1x16x32xbf16>
    %36 = vector.shape_cast %35 : vector<1x16x32xbf16> to vector<16x32xbf16>
    %cst_18 = arith.constant dense<0.000000e+00> : vector<32x32xf32>
    %37 = tpu.matmul %34, %36, %cst_18 {dimension_numbers = #tpu.dot_dimension_numbers<[1], [0], [0], [1], [0, 0, 1, 1], [], []>} : vector<32x16xbf16>, vector<16x32xbf16>, vector<32x32xf32> -> vector<32x32xf32>
    %38 = arith.addf %11, %37 : vector<32x32xf32>
    %39 = vector.extract_strided_slice %4 {offsets = [0, 16], sizes = [32, 16], strides = [1, 1]} : vector<32x128xf32> to vector<32x16xf32>
    %40 = arith.truncf %39 : vector<32x16xf32> to vector<32x16xbf16>
    %41 = vector.extract_strided_slice %4 {offsets = [0, 48], sizes = [32, 16], strides = [1, 1]} : vector<32x128xf32> to vector<32x16xf32>
    %42 = arith.truncf %41 : vector<32x16xf32> to vector<32x16xbf16>
    %43 = vector.extract_strided_slice %4 {offsets = [0, 80], sizes = [32, 16], strides = [1, 1]} : vector<32x128xf32> to vector<32x16xf32>
    %44 = arith.truncf %43 : vector<32x16xf32> to vector<32x16xbf16>
    "tpu.trace_start"() <{level = 10 : i32, message = "qd,kd->qk"}> : () -> ()
    %cst_19 = arith.constant dense<0.000000e+00> : vector<32x32xf32>
    %45 = tpu.matmul %40, %42, %cst_19 {dimension_numbers = #tpu.dot_dimension_numbers<[1], [1], [0], [0], [0, 0, 1, 0], [], []>} : vector<32x16xbf16>, vector<32x16xbf16>, vector<32x32xf32> -> vector<32x32xf32>
    "tpu.trace_stop"() : () -> ()
    %c0_20 = arith.constant 0 : index
    %c1 = arith.constant 1 : index
    %c0_21 = arith.constant 0 : index
    %c0_22 = arith.constant 0 : index
    %46 = vector.load %arg5[%c0_20, %c1, %c0_21, %c0_22] : memref<1x2x32x32xf32, #tpu.memory_space<vmem>>, vector<1x1x32x32xf32>
    %47 = vector.shape_cast %46 : vector<1x1x32x32xf32> to vector<32x32xf32>
    %48 = arith.addf %45, %47 : vector<32x32xf32>
    %cst_23 = arith.constant dense<0xFF800000> : vector<32xf32>
    %49 = vector.multi_reduction <maximumf>, %48, %cst_23 [1] : vector<32x32xf32> to vector<32xf32>
    %50 = vector.shape_cast %49 : vector<32xf32> to vector<32x1xf32>
    %51 = vector.broadcast %50 : vector<32x1xf32> to vector<32x32xf32>
    %52 = arith.subf %48, %51 : vector<32x32xf32>
    %53 = math.exp %52 : vector<32x32xf32>
    %cst_24 = arith.constant dense<0.000000e+00> : vector<32xf32>
    %54 = vector.multi_reduction <add>, %53, %cst_24 [1] : vector<32x32xf32> to vector<32xf32>
    %55 = vector.shape_cast %54 : vector<32xf32> to vector<32x1xf32>
    %56 = tpu.reciprocal %55 {approx = true} : vector<32x1xf32> -> vector<32x1xf32>
    %57 = vector.broadcast %56 : vector<32x1xf32> to vector<32x32xf32>
    %58 = arith.mulf %53, %57 : vector<32x32xf32>
    %59 = arith.truncf %58 : vector<32x32xf32> to vector<32x32xbf16>
    %cst_25 = arith.constant dense<0.000000e+00> : vector<32x16xf32>
    %60 = tpu.matmul %59, %44, %cst_25 {dimension_numbers = #tpu.dot_dimension_numbers<[1], [0], [0], [1], [0, 0, 1, 1], [], []>} : vector<32x32xbf16>, vector<32x16xbf16>, vector<32x16xf32> -> vector<32x16xf32>
    %61 = arith.truncf %60 : vector<32x16xf32> to vector<32x16xbf16>
    %c1_26 = arith.constant 1 : index
    %c0_27 = arith.constant 0 : index
    %c0_28 = arith.constant 0 : index
    %62 = vector.load %arg4[%c1_26, %c0_27, %c0_28] : memref<2x16x32xbf16, #tpu.memory_space<vmem>>, vector<1x16x32xbf16>
    %63 = vector.shape_cast %62 : vector<1x16x32xbf16> to vector<16x32xbf16>
    %cst_29 = arith.constant dense<0.000000e+00> : vector<32x32xf32>
    %64 = tpu.matmul %61, %63, %cst_29 {dimension_numbers = #tpu.dot_dimension_numbers<[1], [0], [0], [1], [0, 0, 1, 1], [], []>} : vector<32x16xbf16>, vector<16x32xbf16>, vector<32x32xf32> -> vector<32x32xf32>
    %65 = arith.addf %38, %64 : vector<32x32xf32>
    %66 = arith.mulf %65, %10 : vector<32x32xf32>
    %67 = arith.addf %1, %66 : vector<32x32xf32>
    %c0_30 = arith.constant 0 : index
    %c0_31 = arith.constant 0 : index
    %c0_32 = arith.constant 0 : index
    %c0_33 = arith.constant 0 : index
    %68 = vector.load %arg6[%c0_30, %c0_31, %c0_32, %c0_33] : memref<1x1x32x32xf32, #tpu.memory_space<vmem>>, vector<1x1x32x32xf32>
    %69 = vector.shape_cast %68 : vector<1x1x32x32xf32> to vector<32x32xf32>
    %70 = vector.shape_cast %67 : vector<32x32xf32> to vector<1x1x32x32xf32>
    tpu.vector_store %arg6[%c0_30, %c0_31, %c0_32, %c0_33], %70 {strides = array<i32>} : memref<1x1x32x32xf32, #tpu.memory_space<vmem>>, vector<1x1x32x32xf32>,
    return
  }
  func.func @transform_0(%arg0: i32, %arg1: i32) -> (i32, i32, i32, i32) {
    %c0_i32 = arith.constant 0 : i32
    %c0_i32_0 = arith.constant 0 : i32
    %c0_i32_1 = arith.constant 0 : i32
    return %arg0, %arg1, %c0_i32, %c0_i32_0 : i32, i32, i32, i32
  }
  func.func @transform_1(%arg0: i32, %arg1: i32) -> (i32, i32) {
    %c0_i32 = arith.constant 0 : i32
    %c0_i32_0 = arith.constant 0 : i32
    %c0_i32_1 = arith.constant 0 : i32
    return %c0_i32, %c0_i32_0 : i32, i32
  }
  func.func @transform_2(%arg0: i32, %arg1: i32) -> (i32, i32, i32) {
    %c0_i32 = arith.constant 0 : i32
    %c0_i32_0 = arith.constant 0 : i32
    %c0_i32_1 = arith.constant 0 : i32
    %c0_i32_2 = arith.constant 0 : i32
    return %c0_i32, %c0_i32_0, %c0_i32_1 : i32, i32, i32
  }
  func.func @transform_3(%arg0: i32, %arg1: i32) -> (i32, i32, i32, i32) {
    %c0_i32 = arith.constant 0 : i32
    %c0_i32_0 = arith.constant 0 : i32
    %c0_i32_1 = arith.constant 0 : i32
    %c0_i32_2 = arith.constant 0 : i32
    return %arg0, %c0_i32, %c0_i32_0, %c0_i32_1 : i32, i32, i32, i32
  }
  func.func @transform_4(%arg0: i32, %arg1: i32) -> (i32, i32, i32, i32) {
    %c0_i32 = arith.constant 0 : i32
    %c0_i32_0 = arith.constant 0 : i32
    %c0_i32_1 = arith.constant 0 : i32
    return %arg0, %arg1, %c0_i32, %c0_i32_0 : i32, i32, i32, i32
  }
}

module attributes {stable_mosaic.version = 11 : i64} {
  func.func @_transition_row_kernel(%arg0: i32, %arg1: i32, %arg2: memref<1x1x32x32xf32, #tpu.memory_space<vmem>>, %arg3: memref<32x256xf32, #tpu.memory_space<vmem>>, %arg4: memref<128x32xf32, #tpu.memory_space<vmem>>, %arg5: memref<1x32xf32, #tpu.memory_space<vmem>>, %arg6: memref<1x32xf32, #tpu.memory_space<vmem>>, %arg7: memref<1x1x32x32xf32, #tpu.memory_space<vmem>>) attributes {dimension_semantics = [#tpu.dimension_semantics<parallel>, #tpu.dimension_semantics<parallel>], iteration_bounds = array<i64: 1, 32>, scalar_prefetch = 0 : i64, scratch_operands = 0 : i64, tpu.core_type = #tpu.core_type<tc>, window_params = [{transform_indices = @transform_0, window_bounds = array<i64: 1, 1, 32, 32>}, {pipeline_mode = #tpu.pipeline_mode<synchronous>, transform_indices = @transform_1, window_bounds = array<i64: 32, 256>}, {pipeline_mode = #tpu.pipeline_mode<synchronous>, transform_indices = @transform_2, window_bounds = array<i64: 128, 32>}, {pipeline_mode = #tpu.pipeline_mode<synchronous>, transform_indices = @transform_3, window_bounds = array<i64: 1, 32>}, {pipeline_mode = #tpu.pipeline_mode<synchronous>, transform_indices = @transform_4, window_bounds = array<i64: 1, 32>}, {transform_indices = @transform_5, window_bounds = array<i64: 1, 1, 32, 32>}]} {
    %c0 = arith.constant 0 : index
    %c0_0 = arith.constant 0 : index
    %c0_1 = arith.constant 0 : index
    %c0_2 = arith.constant 0 : index
    %0 = vector.load %arg2[%c0, %c0_0, %c0_1, %c0_2] : memref<1x1x32x32xf32, #tpu.memory_space<vmem>>, vector<1x1x32x32xf32>
    %1 = vector.shape_cast %0 : vector<1x1x32x32xf32> to vector<32x32xf32>
    %c0_3 = arith.constant 0 : index
    %c0_4 = arith.constant 0 : index
    %2 = vector.load %arg5[%c0_3, %c0_4] : memref<1x32xf32, #tpu.memory_space<vmem>>, vector<1x32xf32>
    %c0_5 = arith.constant 0 : index
    %c0_6 = arith.constant 0 : index
    %3 = vector.load %arg6[%c0_5, %c0_6] : memref<1x32xf32, #tpu.memory_space<vmem>>, vector<1x32xf32>
    %cst = arith.constant dense<0.000000e+00> : vector<32xf32>
    %4 = vector.multi_reduction <add>, %1, %cst [1] : vector<32x32xf32> to vector<32xf32>
    %5 = vector.shape_cast %4 : vector<32xf32> to vector<32x1xf32>
    %cst_7 = arith.constant 3.200000e+01 : f32
    %6 = vector.broadcast %cst_7 : f32 to vector<32x1xf32>
    %7 = arith.divf %5, %6 : vector<32x1xf32>
    %8 = vector.broadcast %7 : vector<32x1xf32> to vector<32x32xf32>
    %9 = arith.subf %1, %8 : vector<32x32xf32>
    %10 = arith.mulf %9, %9 : vector<32x32xf32>
    %cst_8 = arith.constant dense<0.000000e+00> : vector<32xf32>
    %11 = vector.multi_reduction <add>, %10, %cst_8 [1] : vector<32x32xf32> to vector<32xf32>
    %12 = vector.shape_cast %11 : vector<32xf32> to vector<32x1xf32>
    %cst_9 = arith.constant 3.200000e+01 : f32
    %13 = vector.broadcast %cst_9 : f32 to vector<32x1xf32>
    %14 = arith.divf %12, %13 : vector<32x1xf32>
    %cst_10 = arith.constant 9.99999974E-6 : f32
    %15 = vector.broadcast %cst_10 : f32 to vector<32x1xf32>
    %16 = arith.addf %14, %15 : vector<32x1xf32>
    %17 = math.rsqrt %16 : vector<32x1xf32>
    %18 = vector.broadcast %17 : vector<32x1xf32> to vector<32x32xf32>
    %19 = arith.mulf %9, %18 : vector<32x32xf32>
    %20 = vector.broadcast %2 : vector<1x32xf32> to vector<32x32xf32>
    %21 = arith.mulf %19, %20 : vector<32x32xf32>
    %22 = vector.broadcast %3 : vector<1x32xf32> to vector<32x32xf32>
    %23 = arith.addf %21, %22 : vector<32x32xf32>
    %c0_11 = arith.constant 0 : index
    %c0_12 = arith.constant 0 : index
    %24 = vector.load %arg3[%c0_11, %c0_12] : memref<32x256xf32, #tpu.memory_space<vmem>>, vector<32x256xf32>
    %cst_13 = arith.constant dense<0.000000e+00> : vector<32x256xf32>
    %25 = tpu.matmul %23, %24, %cst_13 {dimension_numbers = #tpu.dot_dimension_numbers<[1], [0], [0], [1], [0, 0, 1, 1], [], []>} : vector<32x32xf32>, vector<32x256xf32>, vector<32x256xf32> -> vector<32x256xf32>
    %26 = vector.extract_strided_slice %25 {offsets = [0, 0], sizes = [32, 128], strides = [1, 1]} : vector<32x256xf32> to vector<32x128xf32>
    %27 = vector.extract_strided_slice %25 {offsets = [0, 128], sizes = [32, 128], strides = [1, 1]} : vector<32x256xf32> to vector<32x128xf32>
    %28 = arith.negf %26 : vector<32x128xf32>
    %29 = math.exp %28 : vector<32x128xf32>
    %cst_14 = arith.constant 1.000000e+00 : f32
    %30 = vector.broadcast %cst_14 : f32 to vector<32x128xf32>
    %31 = arith.addf %30, %29 : vector<32x128xf32>
    %32 = arith.divf %30, %31 : vector<32x128xf32>
    %33 = arith.mulf %26, %32 : vector<32x128xf32>
    %34 = arith.mulf %33, %27 : vector<32x128xf32>
    %c0_15 = arith.constant 0 : index
    %c0_16 = arith.constant 0 : index
    %35 = vector.load %arg4[%c0_15, %c0_16] : memref<128x32xf32, #tpu.memory_space<vmem>>, vector<128x32xf32>
    %cst_17 = arith.constant dense<0.000000e+00> : vector<32x32xf32>
    %36 = tpu.matmul %34, %35, %cst_17 {dimension_numbers = #tpu.dot_dimension_numbers<[1], [0], [0], [1], [0, 0, 1, 1], [], []>} : vector<32x128xf32>, vector<128x32xf32>, vector<32x32xf32> -> vector<32x32xf32>
    %37 = arith.addf %1, %36 : vector<32x32xf32>
    %c0_18 = arith.constant 0 : index
    %c0_19 = arith.constant 0 : index
    %c0_20 = arith.constant 0 : index
    %c0_21 = arith.constant 0 : index
    %38 = vector.load %arg7[%c0_18, %c0_19, %c0_20, %c0_21] : memref<1x1x32x32xf32, #tpu.memory_space<vmem>>, vector<1x1x32x32xf32>
    %39 = vector.shape_cast %38 : vector<1x1x32x32xf32> to vector<32x32xf32>
    %40 = vector.shape_cast %37 : vector<32x32xf32> to vector<1x1x32x32xf32>
    tpu.vector_store %arg7[%c0_18, %c0_19, %c0_20, %c0_21], %40 {strides = array<i32>} : memref<1x1x32x32xf32, #tpu.memory_space<vmem>>, vector<1x1x32x32xf32>,
    return
  }
  func.func @transform_0(%arg0: i32, %arg1: i32) -> (i32, i32, i32, i32) {
    %c0_i32 = arith.constant 0 : i32
    %c0_i32_0 = arith.constant 0 : i32
    %c0_i32_1 = arith.constant 0 : i32
    return %arg0, %arg1, %c0_i32, %c0_i32_0 : i32, i32, i32, i32
  }
  func.func @transform_1(%arg0: i32, %arg1: i32) -> (i32, i32) {
    %c0_i32 = arith.constant 0 : i32
    %c0_i32_0 = arith.constant 0 : i32
    %c0_i32_1 = arith.constant 0 : i32
    return %c0_i32, %c0_i32_0 : i32, i32
  }
  func.func @transform_2(%arg0: i32, %arg1: i32) -> (i32, i32) {
    %c0_i32 = arith.constant 0 : i32
    %c0_i32_0 = arith.constant 0 : i32
    %c0_i32_1 = arith.constant 0 : i32
    return %c0_i32, %c0_i32_0 : i32, i32
  }
  func.func @transform_3(%arg0: i32, %arg1: i32) -> (i32, i32) {
    %c0_i32 = arith.constant 0 : i32
    %c0_i32_0 = arith.constant 0 : i32
    %c0_i32_1 = arith.constant 0 : i32
    return %c0_i32, %c0_i32_0 : i32, i32
  }
  func.func @transform_4(%arg0: i32, %arg1: i32) -> (i32, i32) {
    %c0_i32 = arith.constant 0 : i32
    %c0_i32_0 = arith.constant 0 : i32
    %c0_i32_1 = arith.constant 0 : i32
    return %c0_i32, %c0_i32_0 : i32, i32
  }
  func.func @transform_5(%arg0: i32, %arg1: i32) -> (i32, i32, i32, i32) {
    %c0_i32 = arith.constant 0 : i32
    %c0_i32_0 = arith.constant 0 : i32
    %c0_i32_1 = arith.constant 0 : i32
    return %arg0, %arg1, %c0_i32, %c0_i32_0 : i32, i32, i32, i32
  }
}

</mosaic_0001>

<llo_original>
// kernel: pair_stack_forward.5
$region0: #{pair_stack_forward.5}
  #allocation0 [shape = 'u32[]', space=smem, size = 0x4, offset = 0x4, fixed_abs, tag = 'smem constant byte address 0x4 - core index']
  #allocation1 [shape = 'u32[144,128]{1,0:T(1,128)}', space=vmem, size = 0x12000, scoped, tag = 'internal scratch']
  %s0 = inlined_call_operand.hbm [shape: f32[1,32,32,32], index: 0, kind: input, shape index: {}]
  %s1 = inlined_call_operand.vmem [shape: f32[32,64], index: 1, kind: input, shape index: {}]
  %s2 = inlined_call_operand.vmem [shape: f32[32,32], index: 2, kind: input, shape index: {}]
  %s3 = inlined_call_operand.hbm [shape: f32[32,32], index: 3, kind: input, shape index: {}]
  %s4 = inlined_call_operand.vmem [shape: f32[1,32], index: 4, kind: input, shape index: {}]
  %s5 = inlined_call_operand.vmem [shape: f32[1,32], index: 5, kind: input, shape index: {}]
  %s6 = inlined_call_operand.vmem [shape: f32[1,32,32,32], index: 6, kind: output, shape index: {}]
  %s7 = sld [smem:[#allocation0]]
  $region65: #{pair_stack_forward.5} parent=0
    _
  %s9 = ssub.s32 1, %s7
  %s10 = scalar_select 0, %s9, %s7
  $region1: #{pair_stack_forward.5} parent=0
    #allocation2 [shape = 'u8[32768]{0}', space=vmem, size = 0x8000, scoped, tag = 'input window, operand 0']
    #allocation3 [shape = 's32[2]{0}', space=sflag, size = 0x8, scoped, tag = 'scoped memory for pair_stack_forward.5']
    #allocation4 [shape = 'u8[16384]{0}', space=vmem, size = 0x4000, scoped, tag = 'input window, operand 3, single buffered']
    #allocation5 [shape = 's32[1]{0}', space=sflag, size = 0x4, scoped, tag = 'scoped memory for pair_stack_forward.5']
    %11 = vsyncpa [#allocation3], 0
    %s12 = scalar_lea.sflag [#allocation3], 1
    %13 = vsyncpa %s12, 0
    %14 = vsyncpa [#allocation5], 0
    loop: start=0, step=1, limit=34
    $region2: #{pair_stack_forward.5} parent=1 // loop_pre_header
      _
    $region3: #{pair_stack_forward.5} parent=1 // loop_header
      %s16 = sphi 0, %s20
      %p17 = scmp.ge.s32.totalorder %s16, 34
      %s23 = sphi 0, %s35
      %s24 = sphi 0, %s31
      %s25 = sphi 0, %s23
      %s26 = sphi 0, %s24
      %s27 = sphi 0, %s25
      %s28 = sphi 0, %s26
      %s40 = sphi 0, %s42
      %s43 = sphi 0, %s40
      %s44 = sphi 0, %s43
      %s60 = sphi 0, %s44
      %s64 = sphi 0, %s64
      %s66 = sphi 0, %s64
      %s67 = sphi 0, %s66
      %s81 = sphi 0, %s67
      %s85 = sphi 0, %s85
      %s87 = sphi 0, %s85
      %s88 = sphi 0, %s87
      %s102 = sphi 0, %s88
      %s106 = sphi 0, %s106
      %s108 = sphi 0, %s106
      %s109 = sphi 0, %s108
      %s123 = sphi 0, %s109
      %s127 = sphi 0, %s127
      %s129 = sphi 0, %s127
      %s130 = sphi 0, %s129
      %s144 = sphi 0, %s130
      %s148 = sphi 0, %s148
      %s150 = sphi 0, %s148
      %s151 = sphi 0, %s150
      %s165 = sphi 0, %s151
      %s173 = sphi 0, %s175
      %s176 = sphi 0, %s173
      %s177 = sphi 0, %s176
      %s193 = sphi 0, %s177
    $region4: #{pair_stack_forward.5} parent=1 // loop_header_branch
      %19 = sbr.rel (%p17) target = $region8
    $region5: #{pair_stack_forward.5} parent=1 // loop_body
      %s21 = ssub.s32 %s16, 1
      %s22 = ssub.s32 %s16, 2
      %s29 = sadd.s32 1, %s24
      %p30 = scmp.ge.s32.totalorder %s29, 32
      %s31 = scalar_select %p30, 0, %s29
      %s32 = sadd.s32 1, %s23
      %s33 = scalar_select %p30, %s32, %s23
      %p34 = scmp.ge.s32.totalorder %s33, 1
      %s35 = scalar_select %p34, 0, %s33
      %s36 = ssub.s32 %s23, %s35
      %s37 = ssub.s32 %s24, %s31
      %s38 = sor.u32 %s36, %s37
      %p39 = scmp.eq.s32.totalorder %s38, 0
      %s41 = sadd.s32 %s40, 1
      %s42 = scalar_select %p39, %s40, %s41
      %p45 = pneg %p39
      %p46 = scmp.eq.s32.totalorder %s16, 31
      %p47 = por %p45, %p46
      %p48 = scmp.ne.s32.totalorder %s40, %s43
      %p49 = scmp.eq.s32.totalorder %s16, 0
      %p50 = por %p48, %p49
      %p51 = scmp.ne.s32.totalorder %s40, %s43
      %p52 = scmp.eq.s32.totalorder %s21, 31
      %p53 = por %p51, %p52
      %p54 = scmp.ne.s32.totalorder %s43, %s44
      %p55 = scmp.eq.s32.totalorder %s21, 0
      %p56 = por %p54, %p55
      %p57 = scmp.ne.s32.totalorder %s43, %s44
      %p58 = scmp.eq.s32.totalorder %s22, 31
      %p59 = por %p57, %p58
      %p61 = scmp.ne.s32.totalorder %s44, %s60
      %p62 = scmp.eq.s32.totalorder %s22, 0
      %p63 = por %p61, %p62
      %s65 = sadd.s32 %s64, 1
      %p68 = scmp.eq.s32.totalorder %s16, 31
      %p69 = scmp.ne.s32.totalorder %s64, %s66
      %p70 = scmp.eq.s32.totalorder %s16, 0
      %p71 = por %p69, %p70
      %p72 = scmp.ne.s32.totalorder %s64, %s66
      %p73 = scmp.eq.s32.totalorder %s21, 31
      %p74 = por %p72, %p73
      %p75 = scmp.ne.s32.totalorder %s66, %s67
      %p76 = scmp.eq.s32.totalorder %s21, 0
      %p77 = por %p75, %p76
      %p78 = scmp.ne.s32.totalorder %s66, %s67
      %p79 = scmp.eq.s32.totalorder %s22, 31
      %p80 = por %p78, %p79
      %p82 = scmp.ne.s32.totalorder %s67, %s81
      %p83 = scmp.eq.s32.totalorder %s22, 0
      %p84 = por %p82, %p83
      %s86 = sadd.s32 %s85, 1
      %p89 = scmp.eq.s32.totalorder %s16, 31
      %p90 = scmp.ne.s32.totalorder %s85, %s87
      %p91 = scmp.eq.s32.totalorder %s16, 0
      %p92 = por %p90, %p91
      %p93 = scmp.ne.s32.totalorder %s85, %s87
      %p94 = scmp.eq.s32.totalorder %s21, 31
      %p95 = por %p93, %p94
      %p96 = scmp.ne.s32.totalorder %s87, %s88
      %p97 = scmp.eq.s32.totalorder %s21, 0
      %p98 = por %p96, %p97
      %p99 = scmp.ne.s32.totalorder %s87, %s88
      %p100 = scmp.eq.s32.totalorder %s22, 31
      %p101 = por %p99, %p100
      %p103 = scmp.ne.s32.totalorder %s88, %s102
      %p104 = scmp.eq.s32.totalorder %s22, 0
      %p105 = por %p103, %p104
      %s107 = sadd.s32 %s106, 1
      %p110 = scmp.eq.s32.totalorder %s16, 31
      %p111 = scmp.ne.s32.totalorder %s106, %s108
      %p112 = scmp.eq.s32.totalorder %s16, 0
      %p113 = por %p111, %p112
      %p114 = scmp.ne.s32.totalorder %s106, %s108
      %p115 = scmp.eq.s32.totalorder %s21, 31
      %p116 = por %p114, %p115
      %p117 = scmp.ne.s32.totalorder %s108, %s109
      %p118 = scmp.eq.s32.totalorder %s21, 0
      %p119 = por %p117, %p118
      %p120 = scmp.ne.s32.totalorder %s108, %s109
      %p121 = scmp.eq.s32.totalorder %s22, 31
      %p122 = por %p120, %p121
      %p124 = scmp.ne.s32.totalorder %s109, %s123
      %p125 = scmp.eq.s32.totalorder %s22, 0
      %p126 = por %p124, %p125
      %s128 = sadd.s32 %s127, 1
      %p131 = scmp.eq.s32.totalorder %s16, 31
      %p132 = scmp.ne.s32.totalorder %s127, %s129
      %p133 = scmp.eq.s32.totalorder %s16, 0
      %p134 = por %p132, %p133
      %p135 = scmp.ne.s32.totalorder %s127, %s129
      %p136 = scmp.eq.s32.totalorder %s21, 31
      %p137 = por %p135, %p136
      %p138 = scmp.ne.s32.totalorder %s129, %s130
      %p139 = scmp.eq.s32.totalorder %s21, 0
      %p140 = por %p138, %p139
      %p141 = scmp.ne.s32.totalorder %s129, %s130
      %p142 = scmp.eq.s32.totalorder %s22, 31
      %p143 = por %p141, %p142
      %p145 = scmp.ne.s32.totalorder %s130, %s144
      %p146 = scmp.eq.s32.totalorder %s22, 0
      %p147 = por %p145, %p146
      %s149 = sadd.s32 %s148, 1
      %p152 = scmp.eq.s32.totalorder %s16, 31
      %p153 = scmp.ne.s32.totalorder %s148, %s150
      %p154 = scmp.eq.s32.totalorder %s16, 0
      %p155 = por %p153, %p154
      %p156 = scmp.ne.s32.totalorder %s148, %s150
      %p157 = scmp.eq.s32.totalorder %s21, 31
      %p158 = por %p156, %p157
      %p159 = scmp.ne.s32.totalorder %s150, %s151
      %p160 = scmp.eq.s32.totalorder %s21, 0
      %p161 = por %p159, %p160
      %p162 = scmp.ne.s32.totalorder %s150, %s151
      %p163 = scmp.eq.s32.totalorder %s22, 31
      %p164 = por %p162, %p163
      %p166 = scmp.ne.s32.totalorder %s151, %s165
      %p167 = scmp.eq.s32.totalorder %s22, 0
      %p168 = por %p166, %p167
      %s169 = ssub.s32 %s23, %s35
      %s170 = ssub.s32 %s24, %s31
      %s171 = sor.u32 %s169, %s170
      %p172 = scmp.eq.s32.totalorder %s171, 0
      %s174 = sadd.s32 %s173, 1
      %s175 = scalar_select %p172, %s173, %s174
      %p178 = pneg %p172
      %p179 = scmp.eq.s32.totalorder %s16, 31
      %p180 = por %p178, %p179
      %p181 = scmp.ne.s32.totalorder %s173, %s176
      %p182 = scmp.eq.s32.totalorder %s16, 0
      %p183 = por %p181, %p182
      %p184 = scmp.ne.s32.totalorder %s173, %s176
      %p185 = scmp.eq.s32.totalorder %s21, 31
      %p186 = por %p184, %p185
      %p187 = scmp.ne.s32.totalorder %s176, %s177
      %p188 = scmp.eq.s32.totalorder %s21, 0
      %p189 = por %p187, %p188
      %p190 = scmp.ne.s32.totalorder %s176, %s177
      %p191 = scmp.eq.s32.totalorder %s22, 31
      %p192 = por %p190, %p191
      %p194 = scmp.ne.s32.totalorder %s177, %s193
      %p195 = scmp.eq.s32.totalorder %s22, 0
      %p196 = por %p194, %p195
      %p197 = scmp.le.s32.totalorder 1, %s16
      %p198 = scmp.lt.s32.totalorder %s16, 33
      %p199 = pnand %p197, %p198
      %p200 = pneg %p199
      // Predicated region
      $region9: #{pair_stack_forward.5} parent=5 // pred_check
        _
      $region10: #{pair_stack_forward.5} parent=5 // pred_check_branch
        %202 = sbr.rel (%p199) target = $region12
      $region11: #{pair_stack_forward.5} parent=5 // pred_region
        %s203 = ssub.s32 %s16, 1
        // Predicated region
        $region13: #{pair_stack_forward.5} parent=11 // pred_check
          %p204 = pneg %p77
        $region14: #{pair_stack_forward.5} parent=11 // pred_check_branch
          %206 = sbr.rel (%p204) target = $region16
        $region15: #{pair_stack_forward.5} parent=11 // pred_region
          _
        $region16: #{pair_stack_forward.5} parent=11 // pred_fallthru
          _
        // Predicated region
        $region17: #{pair_stack_forward.5} parent=11 // pred_check
          %p207 = pneg %p98
        $region18: #{pair_stack_forward.5} parent=11 // pred_check_branch
          %209 = sbr.rel (%p207) target = $region20
        $region19: #{pair_stack_forward.5} parent=11 // pred_region
          _
        $region20: #{pair_stack_forward.5} parent=11 // pred_fallthru
          _
        // Predicated region
        $region21: #{pair_stack_forward.5} parent=11 // pred_check
          %p210 = pneg %p119
        $region22: #{pair_stack_forward.5} parent=11 // pred_check_branch
          %212 = sbr.rel (%p210) target = $region24
        $region23: #{pair_stack_forward.5} parent=11 // pred_region
          %s214 = ssub.s32 512, 512
          %215 = vsyncadd [#allocation5], %s214
          %s216 = sshll.u32 [#allocation4], 4
          %s217 = int_to_ptr.vmem [resolvable:$true] %s216
          %222 = dma.hbm_to_vmem [thread:$0]  %s3, 512, %s217, [#allocation5], 128, 128, 8
        $region24: #{pair_stack_forward.5} parent=11 // pred_fallthru
          _
        // Predicated region
        $region25: #{pair_stack_forward.5} parent=11 // pred_check
          %p223 = pneg %p140
        $region26: #{pair_stack_forward.5} parent=11 // pred_check_branch
          %225 = sbr.rel (%p223) target = $region28
        $region27: #{pair_stack_forward.5} parent=11 // pred_region
          _
        $region28: #{pair_stack_forward.5} parent=11 // pred_fallthru
          _
        // Predicated region
        $region29: #{pair_stack_forward.5} parent=11 // pred_check
          %p226 = pneg %p161
        $region30: #{pair_stack_forward.5} parent=11 // pred_check_branch
          %228 = sbr.rel (%p226) target = $region32
        $region31: #{pair_stack_forward.5} parent=11 // pred_region
          _
        $region32: #{pair_stack_forward.5} parent=11 // pred_fallthru
          _
      $region12: #{pair_stack_forward.5} parent=5 // pred_fallthru
        _
      %p229 = scmp.lt.s32.totalorder %s16, 32
      // Predicated region
      $region33: #{pair_stack_forward.5} parent=5 // pred_check
        %p230 = pneg %p229
      $region34: #{pair_stack_forward.5} parent=5 // pred_check_branch
        %232 = sbr.rel (%p230) target = $region36
      $region35: #{pair_stack_forward.5} parent=5 // pred_region
        // Predicated region
        $region37: #{pair_stack_forward.5} parent=35 // pred_check
          %p233 = pneg %p50
        $region38: #{pair_stack_forward.5} parent=35 // pred_check_branch
          %235 = sbr.rel (%p233) target = $region40
        $region39: #{pair_stack_forward.5} parent=35 // pred_region
          %s236 = sand.u32 %s40, 1
          %s237 = scalar_lea.sflag [#allocation3], %s236
          %s238 = sand.u32 %s40, 1
          %s239 = smul.addr %s238, 32
          %s240 = scalar_lea.vmem [#allocation2], %s239
          %s242 = ssub.s32 512, 512
          %243 = vsyncadd %s237, %s242
          %s244 = smul.addr %s24, 4
          %s245 = smul.addr %s23, 128
          %s246 = sadd.s32 %s244, %s245
          %s247 = smul.addr %s246, 128
          %s248 = scalar_lea.hbm %s0, %s247
          %s249 = sshll.u32 %s240, 4
          %s250 = int_to_ptr.vmem [resolvable:$true] %s249
          %255 = dma.hbm_to_vmem [thread:$0]  %s248, 512, %s250, %s237, 128, 128, 8
        $region40: #{pair_stack_forward.5} parent=35 // pred_fallthru
          _
      $region36: #{pair_stack_forward.5} parent=5 // pred_fallthru
        _
      %p256 = scmp.le.s32.totalorder 1, %s16
      %p257 = scmp.lt.s32.totalorder %s16, 33
      %p258 = pnand %p256, %p257
      %p259 = pneg %p258
      // Predicated region
      $region41: #{pair_stack_forward.5} parent=5 // pred_check
        _
      $region42: #{pair_stack_forward.5} parent=5 // pred_check_branch
        %261 = sbr.rel (%p258) target = $region44
      $region43: #{pair_stack_forward.5} parent=5 // pred_region
        %s262 = ssub.s32 %s16, 1
        %s263 = sand.u32 %s43, 1
        %s264 = scalar_lea.sflag [#allocation3], %s263
        %s265 = sand.u32 %s43, 1
        %s266 = smul.addr %s265, 32
        %s267 = scalar_lea.vmem [#allocation2], %s266
        // Predicated region
        $region45: #{pair_stack_forward.5} parent=43 // pred_check
          %p268 = pneg %p56
        $region46: #{pair_stack_forward.5} parent=43 // pred_check_branch
          %270 = sbr.rel (%p268) target = $region48
        $region47: #{pair_stack_forward.5} parent=43 // pred_region
          %271 = dma.done %s264, 512
        $region48: #{pair_stack_forward.5} parent=43 // pred_fallthru
          _
        // Predicated region
        $region49: #{pair_stack_forward.5} parent=43 // pred_check
          %p272 = pneg %p119
        $region50: #{pair_stack_forward.5} parent=43 // pred_check_branch
          %274 = sbr.rel (%p272) target = $region52
        $region51: #{pair_stack_forward.5} parent=43 // pred_region
          %275 = dma.done [#allocation5], 512
        $region52: #{pair_stack_forward.5} parent=43 // pred_fallthru
          _
        %s276 = sand.u32 %s43, 1
        %s277 = scalar_lea.sflag [#allocation3], %s276
        %s278 = sand.u32 %s43, 1
        %s279 = smul.addr %s278, 32
        %s280 = scalar_lea.vmem [#allocation2], %s279
        %p281 = pneg %p56
        %p282 = pneg %p53
        %p283 = pneg %p77
        %p284 = pneg %p74
        %p285 = pneg %p98
        %p286 = pneg %p95
        %p287 = pneg %p119
        %p288 = pneg %p116
        %p289 = pneg %p140
        %p290 = pneg %p137
        %p291 = pneg %p161
        %p292 = pneg %p158
        %p293 = pneg %p189
        %p294 = pneg %p186
        %p295 = scmp.lt.s32.totalorder %s25, 0
        %s296 = scalar_select %p295, %s25, 0
        %p297 = scmp.lt.s32.totalorder %s26, 31
        %s298 = scalar_select %p297, %s26, 31
        %s299 = smul.addr %s298, 4
        %s300 = smul.addr %s296, 128
        %s301 = sadd.s32 %s299, %s300
        %s302 = smul.addr %s301, 8
        %s303 = scalar_lea.vmem %s6, %s302
        %p304 = scmp.lt.s32.totalorder %s25, 0
        %s305 = scalar_select %p304, %s25, 0
        %p306 = scmp.lt.s32.totalorder %s26, 31
        %s307 = scalar_select %p306, %s26, 31
        %s308 = smul.addr %s307, 4
        %s309 = smul.addr %s305, 128
        %s310 = sadd.s32 %s308, %s309
        %s311 = smul.addr %s310, 8
        %s312 = scalar_lea.vmem %s6, %s311
        %v313 = vld [vmem:[%s267] sm:$0xff]
        %v314 = vld [vmem:[%s267 + $0x8] sm:$0xff]
        %v315 = vld [vmem:[%s267 + $0x10] sm:$0xff]
        %v316 = vld [vmem:[%s267 + $0x18] sm:$0xff]
        %v317 = vld [vmem:[%s4] sm:$0x1]
        %v318 = vld [vmem:[%s5] sm:$0x1]
        %vm319 = vcmask 261120
        %v320 = vsel %vm319, %v313, 0.0
        %321 = vadd.xlane.f32.xlu0 %v320
        %v322 = vpop.xlane.xlu0 %321
        %v323 = vsel %vm319, %v314, 0.0
        %324 = vadd.xlane.f32.xlu0 %v323
        %v325 = vpop.xlane.xlu0 %324
        %v326 = vsel %vm319, %v315, 0.0
        %327 = vadd.xlane.f32.xlu0 %v326
        %v328 = vpop.xlane.xlu0 %327
        %v329 = vsel %vm319, %v316, 0.0
        %330 = vadd.xlane.f32.xlu0 %v329
        %v331 = vpop.xlane.xlu0 %330
        %v332 = vrcp.pop 32.0
        %v333 = vmul.f32 %v322, %v332
        %v334 = vmul.f32 %v325, %v332
        %v335 = vmul.f32 %v328, %v332
        %v336 = vmul.f32 %v331, %v332
        %v337 = vsub.f32 %v313, %v333
        %v338 = vsub.f32 %v314, %v334
        %v339 = vsub.f32 %v315, %v335
        %v340 = vsub.f32 %v316, %v336
        %v341 = vmul.f32 %v337, %v337
        %v342 = vmul.f32 %v338, %v338
        %v343 = vmul.f32 %v339, %v339
        %v344 = vmul.f32 %v340, %v340
        %v345 = vsel %vm319, %v341, 0.0
        %346 = vadd.xlane.f32.xlu0 %v345
        %v347 = vpop.xlane.xlu0 %346
        %v348 = vsel %vm319, %v342, 0.0
        %349 = vadd.xlane.f32.xlu0 %v348
        %v350 = vpop.xlane.xlu0 %349
        %v351 = vsel %vm319, %v343, 0.0
        %352 = vadd.xlane.f32.xlu0 %v351
        %v353 = vpop.xlane.xlu0 %352
        %v354 = vsel %vm319, %v344, 0.0
        %355 = vadd.xlane.f32.xlu0 %v354
        %v356 = vpop.xlane.xlu0 %355
        %v357 = vmul.f32 %v347, %v332
        %v358 = vmul.f32 %v350, %v332
        %v359 = vmul.f32 %v353, %v332
        %v360 = vmul.f32 %v356, %v332
        %v361 = vadd.f32 %v357, 1e-05
        %v362 = vadd.f32 %v358, 1e-05
        %v363 = vadd.f32 %v359, 1e-05
        %v364 = vadd.f32 %v360, 1e-05
        %v365 = vrsqrt.pop %v361
        %v366 = vrsqrt.pop %v362
        %v367 = vrsqrt.pop %v363
        %v368 = vrsqrt.pop %v364
        %v369 = vmul.f32 %v337, %v365
        %v370 = vmul.f32 %v338, %v366
        %v371 = vmul.f32 %v339, %v367
        %v372 = vmul.f32 %v340, %v368
        %v374 = vlaneseq
        %v375 = vshrl.u32 %v374, 7
        %v376 = vsub.s32 0, %v375
        %v377 = vrot.slane %v317, %v376
        %v379 = vmul.f32 %v369, %v377
        %v380 = vmul.f32 %v370, %v377
        %v381 = vmul.f32 %v371, %v377
        %v382 = vmul.f32 %v372, %v377
        %v384 = vlaneseq
        %v385 = vshrl.u32 %v384, 7
        %v386 = vsub.s32 0, %v385
        %v387 = vrot.slane %v318, %v386
        %v389 = vadd.f32 %v379, %v387
        %v390 = vadd.f32 %v380, %v387
        %v391 = vadd.f32 %v381, %v387
        %v392 = vadd.f32 %v382, %v387
        %v393 = vld [vmem:[%s1] sm:$0xff]
        %v394 = vld [vmem:[%s1 + $0x8] sm:$0xff]
        %v395 = vld [vmem:[%s1 + $0x10] sm:$0xff]
        %v396 = vld [vmem:[%s1 + $0x18] sm:$0xff]
        %v398 = vsel %vm319, %v389, 0
        %v401 = vsel %vm319, %v390, 0
        %v404 = vsel %vm319, %v391, 0
        %v407 = vsel %vm319, %v392, 0
        %409 = vmatprep.subr.mxu0 0.0
        %410 = vmatpush1.msra.mxu0 %v393
        %411 = vmatprep.subr.mxu0 0.0
        %412 = vmatpush1.msra.mxu0 %v394
        %413 = vmatprep.subr.mxu0 0.0
        %414 = vmatpush1.msra.mxu0 %v395
        %415 = vmatprep.subr.mxu0 0.0
        %416 = vmatpush1.msra.mxu0 %v396
        %417 = vmatprep.subr.mxu0 0.0
        %418 = vmatpush1.msra.mxu0 0.0
        %419 = vmatprep.subr.mxu0 0.0
        %420 = vmatpush1.msra.mxu0 0.0
        %421 = vmatprep.subr.mxu0 0.0
        %422 = vmatpush1.msra.mxu0 0.0
        %423 = vmatprep.subr.mxu0 0.0
        %424 = vmatpush1.msra.mxu0 0.0
        %425 = vmatprep.subr.mxu0 0.0
        %426 = vmatpush1.msra.mxu0 0.0
        %427 = vmatprep.subr.mxu0 0.0
        %428 = vmatpush1.msra.mxu0 0.0
        %429 = vmatprep.subr.mxu0 0.0
        %430 = vmatpush1.msra.mxu0 0.0
        %431 = vmatprep.subr.mxu0 0.0
        %432 = vmatpush1.msra.mxu0 0.0
        %433 = vmatprep.subr.mxu0 0.0
        %434 = vmatpush1.msra.mxu0 0.0
        %435 = vmatprep.subr.mxu0 0.0
        %436 = vmatpush1.msra.mxu0 0.0
        %437 = vmatprep.subr.mxu0 0.0
        %438 = vmatpush1.msra.mxu0 0.0
        %439 = vmatprep.subr.mxu0 0.0
        %440 = vmatpush1.msra.mxu0 0.0
        %441 = vmatprep.subr.mxu0 0.0
        %442 = vmatpush1.msra.mxu0 0.0
        %443 = vmatprep.subr.mxu0 0.0
        %444 = vmatpush1.msra.mxu0 0.0
        %445 = vmatprep.subr.mxu0 0.0
        %446 = vmatpush1.msra.mxu0 0.0
        %447 = vmatprep.subr.mxu0 0.0
        %448 = vmatpush1.msra.mxu0 0.0
        %449 = vmatprep.subr.mxu0 0.0
        %450 = vmatpush1.msra.mxu0 0.0
        %451 = vmatprep.subr.mxu0 0.0
        %452 = vmatpush1.msra.mxu0 0.0
        %453 = vmatprep.subr.mxu0 0.0
        %454 = vmatpush1.msra.mxu0 0.0
        %455 = vmatprep.subr.mxu0 0.0
        %456 = vmatpush1.msra.mxu0 0.0
        %457 = vmatprep.subr.mxu0 0.0
        %458 = vmatpush1.msra.mxu0 0.0
        %459 = vmatprep.subr.mxu0 0.0
        %460 = vmatpush1.msra.mxu0 0.0
        %461 = vmatprep.subr.mxu0 0.0
        %462 = vmatpush1.msra.mxu0 0.0
        %463 = vmatprep.subr.mxu0 0.0
        %464 = vmatpush1.msra.mxu0 0.0
        %465 = vmatprep.subr.mxu0 0.0
        %466 = vmatpush1.msra.mxu0 0.0
        %467 = vmatprep.subr.mxu0 0.0
        %468 = vmatpush1.msra.mxu0 0.0
        %469 = vmatprep.subr.mxu0 0.0
        %470 = vmatpush1.msra.mxu0 0.0
        %471 = vmatprep.subr.mxu0 0.0
        %472 = vmatpush1.msra.mxu0 0.0
        %473 = vmatprep.mubr.f32.mxu0 0.0
        %474 = vmatmul.mubr.f32.gmra.mrb[0].mxu0 %v398
        %v475 = vpop.f32.mrb[0].mxu0
        %v476 = vadd.f32 0.0, %v475
        %v477 = vpop.f32.mrb[0].mxu0
        %478 = vmatprep.mubr.f32.mxu0 0.0
        %479 = vmatmul.mubr.f32.gmra.mrb[0].mxu0 %v401
        %v480 = vpop.f32.mrb[0].mxu0
        %v481 = vadd.f32 0.0, %v480
        %v482 = vpop.f32.mrb[0].mxu0
        %483 = vmatprep.mubr.f32.mxu0 0.0
        %484 = vmatmul.mubr.f32.gmra.mrb[0].mxu0 %v404
        %v485 = vpop.f32.mrb[0].mxu0
        %v486 = vadd.f32 0.0, %v485
        %v487 = vpop.f32.mrb[0].mxu0
        %488 = vmatprep.mubr.f32.mxu0 0.0
        %489 = vmatmul.mubr.f32.gmra.mrb[0].mxu0 %v407
        %v490 = vpop.f32.mrb[0].mxu0
        %v491 = vadd.f32 0.0, %v490
        %v492 = vpop.f32.mrb[0].mxu0
        %493 = vdwg.mxu0
        %v494 = vxor.u32 %v476, 2147483648
        %v495 = vxor.u32 %v481, 2147483648
        %v496 = vxor.u32 %v486, 2147483648
        %v497 = vxor.u32 %v491, 2147483648
        %v498 = vmul.f32 %v494, 1.442695
        %v499 = vpow.pop %v498
        %v500 = vmul.f32 %v495, 1.442695
        %v501 = vpow.pop %v500
        %v502 = vmul.f32 %v496, 1.442695
        %v503 = vpow.pop %v502
        %v504 = vmul.f32 %v497, 1.442695
        %v505 = vpow.pop %v504
        %v506 = vadd.f32 %v499, 1.0
        %v507 = vadd.f32 %v501, 1.0
        %v508 = vadd.f32 %v503, 1.0
        %v509 = vadd.f32 %v505, 1.0
        %v510 = vrcp.pop %v506
        %v511 = vmul.f32 1.0, %v510
        %v512 = vrcp.pop %v507
        %v513 = vmul.f32 1.0, %v512
        %v514 = vrcp.pop %v508
        %v515 = vmul.f32 1.0, %v514
        %v516 = vrcp.pop %v509
        %v517 = vmul.f32 1.0, %v516
        %v518 = vmul.f32 %v511, %v476
        %v519 = vmul.f32 %v513, %v481
        %v520 = vmul.f32 %v515, %v486
        %v521 = vmul.f32 %v517, %v491
        %v522 = vld [vmem:[%s2] sm:$0xff]
        %v523 = vld [vmem:[%s2 + $0x8] sm:$0xff]
        %v524 = vld [vmem:[%s2 + $0x10] sm:$0xff]
        %v525 = vld [vmem:[%s2 + $0x18] sm:$0xff]
        %526 = vmatprep.subr.mxu0 0.0
        %527 = vmatpush1.msra.mxu0 %v522
        %528 = vmatprep.subr.mxu0 0.0
        %529 = vmatpush1.msra.mxu0 %v523
        %530 = vmatprep.subr.mxu0 0.0
        %531 = vmatpush1.msra.mxu0 %v524
        %532 = vmatprep.subr.mxu0 0.0
        %533 = vmatpush1.msra.mxu0 %v525
        %534 = vmatprep.subr.mxu0 0.0
        %535 = vmatpush1.msra.mxu0 0.0
        %536 = vmatprep.subr.mxu0 0.0
        %537 = vmatpush1.msra.mxu0 0.0
        %538 = vmatprep.subr.mxu0 0.0
        %539 = vmatpush1.msra.mxu0 0.0
        %540 = vmatprep.subr.mxu0 0.0
        %541 = vmatpush1.msra.mxu0 0.0
        %542 = vmatprep.subr.mxu0 0.0
        %543 = vmatpush1.msra.mxu0 0.0
        %544 = vmatprep.subr.mxu0 0.0
        %545 = vmatpush1.msra.mxu0 0.0
        %546 = vmatprep.subr.mxu0 0.0
        %547 = vmatpush1.msra.mxu0 0.0
        %548 = vmatprep.subr.mxu0 0.0
        %549 = vmatpush1.msra.mxu0 0.0
        %550 = vmatprep.subr.mxu0 0.0
        %551 = vmatpush1.msra.mxu0 0.0
        %552 = vmatprep.subr.mxu0 0.0
        %553 = vmatpush1.msra.mxu0 0.0
        %554 = vmatprep.subr.mxu0 0.0
        %555 = vmatpush1.msra.mxu0 0.0
        %556 = vmatprep.subr.mxu0 0.0
        %557 = vmatpush1.msra.mxu0 0.0
        %558 = vmatprep.subr.mxu0 0.0
        %559 = vmatpush1.msra.mxu0 0.0
        %560 = vmatprep.subr.mxu0 0.0
        %561 = vmatpush1.msra.mxu0 0.0
        %562 = vmatprep.subr.mxu0 0.0
        %563 = vmatpush1.msra.mxu0 0.0
        %564 = vmatprep.subr.mxu0 0.0
        %565 = vmatpush1.msra.mxu0 0.0
        %566 = vmatprep.subr.mxu0 0.0
        %567 = vmatpush1.msra.mxu0 0.0
        %568 = vmatprep.subr.mxu0 0.0
        %569 = vmatpush1.msra.mxu0 0.0
        %570 = vmatprep.subr.mxu0 0.0
        %571 = vmatpush1.msra.mxu0 0.0
        %572 = vmatprep.subr.mxu0 0.0
        %573 = vmatpush1.msra.mxu0 0.0
        %574 = vmatprep.subr.mxu0 0.0
        %575 = vmatpush1.msra.mxu0 0.0
        %576 = vmatprep.subr.mxu0 0.0
        %577 = vmatpush1.msra.mxu0 0.0
        %578 = vmatprep.subr.mxu0 0.0
        %579 = vmatpush1.msra.mxu0 0.0
        %580 = vmatprep.subr.mxu0 0.0
        %581 = vmatpush1.msra.mxu0 0.0
        %582 = vmatprep.subr.mxu0 0.0
        %583 = vmatpush1.msra.mxu0 0.0
        %584 = vmatprep.subr.mxu0 0.0
        %585 = vmatpush1.msra.mxu0 0.0
        %586 = vmatprep.subr.mxu0 0.0
        %587 = vmatpush1.msra.mxu0 0.0
        %588 = vmatprep.subr.mxu0 0.0
        %589 = vmatpush1.msra.mxu0 0.0
        %590 = vmatprep.mubr.f32.mxu0 0.0
        %591 = vmatmul.mubr.f32.gmra.mrb[0].mxu0 %v398
        %v592 = vpop.f32.mrb[0].mxu0
        %v593 = vadd.f32 0.0, %v592
        %v594 = vpop.f32.mrb[0].mxu0
        %595 = vmatprep.mubr.f32.mxu0 0.0
        %596 = vmatmul.mubr.f32.gmra.mrb[0].mxu0 %v401
        %v597 = vpop.f32.mrb[0].mxu0
        %v598 = vadd.f32 0.0, %v597
        %v599 = vpop.f32.mrb[0].mxu0
        %600 = vmatprep.mubr.f32.mxu0 0.0
        %601 = vmatmul.mubr.f32.gmra.mrb[0].mxu0 %v404
        %v602 = vpop.f32.mrb[0].mxu0
        %v603 = vadd.f32 0.0, %v602
        %v604 = vpop.f32.mrb[0].mxu0
        %605 = vmatprep.mubr.f32.mxu0 0.0
        %606 = vmatmul.mubr.f32.gmra.mrb[0].mxu0 %v407
        %v607 = vpop.f32.mrb[0].mxu0
        %v608 = vadd.f32 0.0, %v607
        %v609 = vpop.f32.mrb[0].mxu0
        %610 = vdwg.mxu0
        %v611 = vxor.u32 %v593, 2147483648
        %v612 = vxor.u32 %v598, 2147483648
        %v613 = vxor.u32 %v603, 2147483648
        %v614 = vxor.u32 %v608, 2147483648
        %v615 = vmul.f32 %v611, 1.442695
        %v616 = vpow.pop %v615
        %v617 = vmul.f32 %v612, 1.442695
        %v618 = vpow.pop %v617
        %v619 = vmul.f32 %v613, 1.442695
        %v620 = vpow.pop %v619
        %v621 = vmul.f32 %v614, 1.442695
        %v622 = vpow.pop %v621
        %v623 = vadd.f32 %v616, 1.0
        %v624 = vadd.f32 %v618, 1.0
        %v625 = vadd.f32 %v620, 1.0
        %v626 = vadd.f32 %v622, 1.0
        %v627 = vrcp.pop %v623
        %v628 = vmul.f32 1.0, %v627
        %v629 = vrcp.pop %v624
        %v630 = vmul.f32 1.0, %v629
        %v631 = vrcp.pop %v625
        %v632 = vmul.f32 1.0, %v631
        %v633 = vrcp.pop %v626
        %v634 = vmul.f32 1.0, %v633
        %639 = vrot.lane.b32.xlu0 %v518, 96
        %v640 = vpop.permute.xlu0 %639
        %641 = vrot.lane.b32.xlu0 %v519, 96
        %v642 = vpop.permute.xlu0 %641
        %643 = vrot.lane.b32.xlu0 %v520, 96
        %v644 = vpop.permute.xlu0 %643
        %645 = vrot.lane.b32.xlu0 %v521, 96
        %v646 = vpop.permute.xlu0 %645
        %v647 = vsel %vm319, %v518, 0
        %v649 = vsel %vm319, %v519, 0
        %v651 = vsel %vm319, %v520, 0
        %v653 = vsel %vm319, %v521, 0
        %v655 = vsel %vm319, %v640, 0
        %v657 = vsel %vm319, %v642, 0
        %v659 = vsel %vm319, %v644, 0
        %v661 = vsel %vm319, %v646, 0
        %663 = vmatprep.subr.mxu0 0.0
        %664 = vmatpush1.xpose.msra.mxu0 %v655
        %665 = vmatprep.subr.mxu0 0.0
        %666 = vmatpush1.xpose.msra.mxu0 %v657
        %667 = vmatprep.subr.mxu0 0.0
        %668 = vmatpush1.xpose.msra.mxu0 %v659
        %669 = vmatprep.subr.mxu0 0.0
        %670 = vmatpush1.xpose.msra.mxu0 %v661
        %671 = vmatprep.subr.mxu0 0.0
        %672 = vmatpush1.xpose.msra.mxu0 0.0
        %673 = vmatprep.subr.mxu0 0.0
        %674 = vmatpush1.xpose.msra.mxu0 0.0
        %675 = vmatprep.subr.mxu0 0.0
        %676 = vmatpush1.xpose.msra.mxu0 0.0
        %677 = vmatprep.subr.mxu0 0.0
        %678 = vmatpush1.xpose.msra.mxu0 0.0
        %679 = vmatprep.subr.mxu0 0.0
        %680 = vmatpush1.xpose.msra.mxu0 0.0
        %681 = vmatprep.subr.mxu0 0.0
        %682 = vmatpush1.xpose.msra.mxu0 0.0
        %683 = vmatprep.subr.mxu0 0.0
        %684 = vmatpush1.xpose.msra.mxu0 0.0
        %685 = vmatprep.subr.mxu0 0.0
        %686 = vmatpush1.xpose.msra.mxu0 0.0
        %687 = vmatprep.subr.mxu0 0.0
        %688 = vmatpush1.xpose.msra.mxu0 0.0
        %689 = vmatprep.subr.mxu0 0.0
        %690 = vmatpush1.xpose.msra.mxu0 0.0
        %691 = vmatprep.subr.mxu0 0.0
        %692 = vmatpush1.xpose.msra.mxu0 0.0
        %693 = vmatprep.subr.mxu0 0.0
        %694 = vmatpush1.xpose.msra.mxu0 0.0
        %695 = vmatprep.subr.mxu0 0.0
        %696 = vmatpush1.xpose.msra.mxu0 0.0
        %697 = vmatprep.subr.mxu0 0.0
        %698 = vmatpush1.xpose.msra.mxu0 0.0
        %699 = vmatprep.subr.mxu0 0.0
        %700 = vmatpush1.xpose.msra.mxu0 0.0
        %701 = vmatprep.subr.mxu0 0.0
        %702 = vmatpush1.xpose.msra.mxu0 0.0
        %703 = vmatprep.subr.mxu0 0.0
        %704 = vmatpush1.xpose.msra.mxu0 0.0
        %705 = vmatprep.subr.mxu0 0.0
        %706 = vmatpush1.xpose.msra.mxu0 0.0
        %707 = vmatprep.subr.mxu0 0.0
        %708 = vmatpush1.xpose.msra.mxu0 0.0
        %709 = vmatprep.subr.mxu0 0.0
        %710 = vmatpush1.xpose.msra.mxu0 0.0
        %711 = vmatprep.subr.mxu0 0.0
        %712 = vmatpush1.xpose.msra.mxu0 0.0
        %713 = vmatprep.subr.mxu0 0.0
        %714 = vmatpush1.xpose.msra.mxu0 0.0
        %715 = vmatprep.subr.mxu0 0.0
        %716 = vmatpush1.xpose.msra.mxu0 0.0
        %717 = vmatprep.subr.mxu0 0.0
        %718 = vmatpush1.xpose.msra.mxu0 0.0
        %719 = vmatprep.subr.mxu0 0.0
        %720 = vmatpush1.xpose.msra.mxu0 0.0
        %721 = vmatprep.subr.mxu0 0.0
        %722 = vmatpush1.xpose.msra.mxu0 0.0
        %723 = vmatprep.subr.mxu0 0.0
        %724 = vmatpush1.xpose.msra.mxu0 0.0
        %725 = vmatprep.subr.mxu0 0.0
        %726 = vmatpush1.xpose.msra.mxu0 0.0
        %727 = vmatprep.mubr.f32.mxu0 0.0
        %728 = vmatmul.mubr.f32.gmra.mrb[0].mxu0 %v647
        %v729 = vpop.f32.mrb[0].mxu0
        %v730 = vadd.f32 0.0, %v729
        %v731 = vpop.f32.mrb[0].mxu0
        %732 = vmatprep.mubr.f32.mxu0 0.0
        %733 = vmatmul.mubr.f32.gmra.mrb[0].mxu0 %v649
        %v734 = vpop.f32.mrb[0].mxu0
        %v735 = vadd.f32 0.0, %v734
        %v736 = vpop.f32.mrb[0].mxu0
        %737 = vmatprep.mubr.f32.mxu0 0.0
        %738 = vmatmul.mubr.f32.gmra.mrb[0].mxu0 %v651
        %v739 = vpop.f32.mrb[0].mxu0
        %v740 = vadd.f32 0.0, %v739
        %v741 = vpop.f32.mrb[0].mxu0
        %742 = vmatprep.mubr.f32.mxu0 0.0
        %743 = vmatmul.mubr.f32.gmra.mrb[0].mxu0 %v653
        %v744 = vpop.f32.mrb[0].mxu0
        %v745 = vadd.f32 0.0, %v744
        %v746 = vpop.f32.mrb[0].mxu0
        %747 = vdwg.mxu0
        %v748 = vsel %vm319, %v730, 0.0
        %749 = vadd.xlane.f32.xlu0 %v748
        %v750 = vpop.xlane.xlu0 %749
        %v751 = vsel %vm319, %v735, 0.0
        %752 = vadd.xlane.f32.xlu0 %v751
        %v753 = vpop.xlane.xlu0 %752
        %v754 = vsel %vm319, %v740, 0.0
        %755 = vadd.xlane.f32.xlu0 %v754
        %v756 = vpop.xlane.xlu0 %755
        %v757 = vsel %vm319, %v745, 0.0
        %758 = vadd.xlane.f32.xlu0 %v757
        %v759 = vpop.xlane.xlu0 %758
        %v760 = vmul.f32 %v750, %v332
        %v761 = vmul.f32 %v753, %v332
        %v762 = vmul.f32 %v756, %v332
        %v763 = vmul.f32 %v759, %v332
        %v764 = vsub.f32 %v730, %v760
        %v765 = vsub.f32 %v735, %v761
        %v766 = vsub.f32 %v740, %v762
        %v767 = vsub.f32 %v745, %v763
        %v768 = vmul.f32 %v764, %v764
        %v769 = vmul.f32 %v765, %v765
        %v770 = vmul.f32 %v766, %v766
        %v771 = vmul.f32 %v767, %v767
        %v772 = vsel %vm319, %v768, 0.0
        %773 = vadd.xlane.f32.xlu0 %v772
        %v774 = vpop.xlane.xlu0 %773
        %v775 = vsel %vm319, %v769, 0.0
        %776 = vadd.xlane.f32.xlu0 %v775
        %v777 = vpop.xlane.xlu0 %776
        %v778 = vsel %vm319, %v770, 0.0
        %779 = vadd.xlane.f32.xlu0 %v778
        %v780 = vpop.xlane.xlu0 %779
        %v781 = vsel %vm319, %v771, 0.0
        %782 = vadd.xlane.f32.xlu0 %v781
        %v783 = vpop.xlane.xlu0 %782
        %v784 = vmul.f32 %v774, %v332
        %v785 = vmul.f32 %v777, %v332
        %v786 = vmul.f32 %v780, %v332
        %v787 = vmul.f32 %v783, %v332
        %v788 = vadd.f32 %v784, 1e-05
        %v789 = vadd.f32 %v785, 1e-05
        %v790 = vadd.f32 %v786, 1e-05
        %v791 = vadd.f32 %v787, 1e-05
        %v792 = vrsqrt.pop %v788
        %v793 = vrsqrt.pop %v789
        %v794 = vrsqrt.pop %v790
        %v795 = vrsqrt.pop %v791
        %v796 = vmul.f32 %v764, %v792
        %v797 = vmul.f32 %v765, %v793
        %v798 = vmul.f32 %v766, %v794
        %v799 = vmul.f32 %v767, %v795
        %v800 = vmul.f32 %v796, %v377
        %v801 = vmul.f32 %v797, %v377
        %v802 = vmul.f32 %v798, %v377
        %v803 = vmul.f32 %v799, %v377
        %v804 = vadd.f32 %v800, %v387
        %v805 = vadd.f32 %v801, %v387
        %v806 = vadd.f32 %v802, %v387
        %v807 = vadd.f32 %v803, %v387
        %v808 = vld [vmem:[#allocation4] sm:$0xff]
        %v809 = vld [vmem:[#allocation4 + $0x8] sm:$0xff]
        %v810 = vld [vmem:[#allocation4 + $0x10] sm:$0xff]
        %v811 = vld [vmem:[#allocation4 + $0x18] sm:$0xff]
        %v813 = vsel %vm319, %v804, 0
        %v816 = vsel %vm319, %v805, 0
        %v819 = vsel %vm319, %v806, 0
        %v822 = vsel %vm319, %v807, 0
        %824 = vmatprep.subr.mxu0 0.0
        %825 = vmatpush1.msra.mxu0 %v808
        %826 = vmatprep.subr.mxu0 0.0
        %827 = vmatpush1.msra.mxu0 %v809
        %828 = vmatprep.subr.mxu0 0.0
        %829 = vmatpush1.msra.mxu0 %v810
        %830 = vmatprep.subr.mxu0 0.0
        %831 = vmatpush1.msra.mxu0 %v811
        %832 = vmatprep.subr.mxu0 0.0
        %833 = vmatpush1.msra.mxu0 0.0
        %834 = vmatprep.subr.mxu0 0.0
        %835 = vmatpush1.msra.mxu0 0.0
        %836 = vmatprep.subr.mxu0 0.0
        %837 = vmatpush1.msra.mxu0 0.0
        %838 = vmatprep.subr.mxu0 0.0
        %839 = vmatpush1.msra.mxu0 0.0
        %840 = vmatprep.subr.mxu0 0.0
        %841 = vmatpush1.msra.mxu0 0.0
        %842 = vmatprep.subr.mxu0 0.0
        %843 = vmatpush1.msra.mxu0 0.0
        %844 = vmatprep.subr.mxu0 0.0
        %845 = vmatpush1.msra.mxu0 0.0
        %846 = vmatprep.subr.mxu0 0.0
        %847 = vmatpush1.msra.mxu0 0.0
        %848 = vmatprep.subr.mxu0 0.0
        %849 = vmatpush1.msra.mxu0 0.0
        %850 = vmatprep.subr.mxu0 0.0
        %851 = vmatpush1.msra.mxu0 0.0
        %852 = vmatprep.subr.mxu0 0.0
        %853 = vmatpush1.msra.mxu0 0.0
        %854 = vmatprep.subr.mxu0 0.0
        %855 = vmatpush1.msra.mxu0 0.0
        %856 = vmatprep.subr.mxu0 0.0
        %857 = vmatpush1.msra.mxu0 0.0
        %858 = vmatprep.subr.mxu0 0.0
        %859 = vmatpush1.msra.mxu0 0.0
        %860 = vmatprep.subr.mxu0 0.0
        %861 = vmatpush1.msra.mxu0 0.0
        %862 = vmatprep.subr.mxu0 0.0
        %863 = vmatpush1.msra.mxu0 0.0
        %864 = vmatprep.subr.mxu0 0.0
        %865 = vmatpush1.msra.mxu0 0.0
        %866 = vmatprep.subr.mxu0 0.0
        %867 = vmatpush1.msra.mxu0 0.0
        %868 = vmatprep.subr.mxu0 0.0
        %869 = vmatpush1.msra.mxu0 0.0
        %870 = vmatprep.subr.mxu0 0.0
        %871 = vmatpush1.msra.mxu0 0.0
        %872 = vmatprep.subr.mxu0 0.0
        %873 = vmatpush1.msra.mxu0 0.0
        %874 = vmatprep.subr.mxu0 0.0
        %875 = vmatpush1.msra.mxu0 0.0
        %876 = vmatprep.subr.mxu0 0.0
        %877 = vmatpush1.msra.mxu0 0.0
        %878 = vmatprep.subr.mxu0 0.0
        %879 = vmatpush1.msra.mxu0 0.0
        %880 = vmatprep.subr.mxu0 0.0
        %881 = vmatpush1.msra.mxu0 0.0
        %882 = vmatprep.subr.mxu0 0.0
        %883 = vmatpush1.msra.mxu0 0.0
        %884 = vmatprep.subr.mxu0 0.0
        %885 = vmatpush1.msra.mxu0 0.0
        %886 = vmatprep.subr.mxu0 0.0
        %887 = vmatpush1.msra.mxu0 0.0
        %888 = vmatprep.mubr.f32.mxu0 0.0
        %889 = vmatmul.mubr.f32.gmra.mrb[0].mxu0 %v813
        %v890 = vpop.f32.mrb[0].mxu0
        %v891 = vadd.f32 0.0, %v890
        %v892 = vpop.f32.mrb[0].mxu0
        %893 = vmatprep.mubr.f32.mxu0 0.0
        %894 = vmatmul.mubr.f32.gmra.mrb[0].mxu0 %v816
        %v895 = vpop.f32.mrb[0].mxu0
        %v896 = vadd.f32 0.0, %v895
        %v897 = vpop.f32.mrb[0].mxu0
        %898 = vmatprep.mubr.f32.mxu0 0.0
        %899 = vmatmul.mubr.f32.gmra.mrb[0].mxu0 %v819
        %v900 = vpop.f32.mrb[0].mxu0
        %v901 = vadd.f32 0.0, %v900
        %v902 = vpop.f32.mrb[0].mxu0
        %903 = vmatprep.mubr.f32.mxu0 0.0
        %904 = vmatmul.mubr.f32.gmra.mrb[0].mxu0 %v822
        %v905 = vpop.f32.mrb[0].mxu0
        %v906 = vadd.f32 0.0, %v905
        %v907 = vpop.f32.mrb[0].mxu0
        %908 = vdwg.mxu0
        %v909 = vmul.f32 %v891, %v628
        %v910 = vmul.f32 %v896, %v630
        %v911 = vmul.f32 %v901, %v632
        %v912 = vmul.f32 %v906, %v634
        %v913 = vadd.f32 %v313, %v909
        %v914 = vadd.f32 %v314, %v910
        %v915 = vadd.f32 %v315, %v911
        %v916 = vadd.f32 %v316, %v912
        %917 = vst.msk [vmem:[%s312] sm:$0xff] %vm319, %v913
        %918 = vst.msk [vmem:[%s312 + $0x8] sm:$0xff] %vm319, %v914
        %919 = vst.msk [vmem:[%s312 + $0x10] sm:$0xff] %vm319, %v915
        %920 = vst.msk [vmem:[%s312 + $0x18] sm:$0xff] %vm319, %v916
        %p921 = scmp.lt.s32.totalorder %s25, 0
        %s922 = scalar_select %p921, %s25, 0
        %p923 = scmp.lt.s32.totalorder %s26, 31
        %s924 = scalar_select %p923, %s26, 31
        %s925 = smul.addr %s924, 4
        %s926 = smul.addr %s922, 128
        %s927 = sadd.s32 %s925, %s926
        %s928 = smul.addr %s927, 8
        %s929 = scalar_lea.vmem %s6, %s928
        // Predicated region
        $region53: #{pair_stack_forward.5} parent=43 // pred_check
          %p930 = pneg %p186
        $region54: #{pair_stack_forward.5} parent=43 // pred_check_branch
          %932 = sbr.rel (%p930) target = $region56
        $region55: #{pair_stack_forward.5} parent=43 // pred_region
          _
        $region56: #{pair_stack_forward.5} parent=43 // pred_fallthru
          _
      $region44: #{pair_stack_forward.5} parent=5 // pred_fallthru
        _
      %p933 = scmp.le.s32.totalorder 2, %s16
      // Predicated region
      $region57: #{pair_stack_forward.5} parent=5 // pred_check
        %p934 = pneg %p933
      $region58: #{pair_stack_forward.5} parent=5 // pred_check_branch
        %936 = sbr.rel (%p934) target = $region60
      $region59: #{pair_stack_forward.5} parent=5 // pred_region
        %s937 = ssub.s32 %s16, 2
        // Predicated region
        $region61: #{pair_stack_forward.5} parent=59 // pred_check
          %p938 = pneg %p192
        $region62: #{pair_stack_forward.5} parent=59 // pred_check_branch
          %940 = sbr.rel (%p938) target = $region64
        $region63: #{pair_stack_forward.5} parent=59 // pred_region
          %p941 = scmp.lt.s32.totalorder %s27, 0
          %s942 = scalar_select %p941, %s27, 0
          %p943 = scmp.lt.s32.totalorder %s28, 31
          %s944 = scalar_select %p943, %s28, 31
          %s945 = smul.addr %s944, 4
          %s946 = smul.addr %s942, 128
          %s947 = sadd.s32 %s945, %s946
          %s948 = smul.addr %s947, 8
          %s949 = scalar_lea.vmem %s6, %s948
        $region64: #{pair_stack_forward.5} parent=59 // pred_fallthru
          _
      $region60: #{pair_stack_forward.5} parent=5 // pred_fallthru
        _
    $region6: #{pair_stack_forward.5} parent=1 // loop_footer
      %s20 = sadd.s32 1, %s16
    $region7: #{pair_stack_forward.5} parent=1 // loop_footer_branch
      %15 = sbr.rel target = $region3
    $region8: #{pair_stack_forward.5} parent=1 // loop_exit
      _
    %950 = vsyncpa [#allocation3], 1
    %s951 = scalar_lea.sflag [#allocation3], 1
    %952 = vsyncpa %s951, 1
    %953 = vsyncpa [#allocation5], 1

// kernel: pair_stack_forward.6
$region0: #{pair_stack_forward.6}
  #allocation0 [shape = 'u32[]', space=smem, size = 0x4, offset = 0x4, fixed_abs, tag = 'smem constant byte address 0x4 - core index']
  #allocation1 [shape = 'u32[144,128]{1,0:T(1,128)}', space=vmem, size = 0x12000, scoped, tag = 'internal scratch']
  %s0 = inlined_call_operand.vmem [shape: f32[1,32,32,32], index: 0, kind: input, shape index: {}]
  %s1 = inlined_call_operand.vmem [shape: f32[32,64], index: 1, kind: input, shape index: {}]
  %s2 = inlined_call_operand.vmem [shape: f32[32,32], index: 2, kind: input, shape index: {}]
  %s3 = inlined_call_operand.vmem [shape: f32[32,32], index: 3, kind: input, shape index: {}]
  %s4 = inlined_call_operand.vmem [shape: f32[1,32], index: 4, kind: input, shape index: {}]
  %s5 = inlined_call_operand.vmem [shape: f32[1,32], index: 5, kind: input, shape index: {}]
  %s6 = inlined_call_operand.vmem [shape: f32[1,32,32,32], index: 6, kind: output, shape index: {}]
  %s7 = sld [smem:[#allocation0]]
  $region57: #{pair_stack_forward.6} parent=0
    _
  %s9 = ssub.s32 1, %s7
  %s10 = scalar_select 0, %s9, %s7
  loop: start=0, step=1, limit=34
  $region2: #{pair_stack_forward.6} parent=0 // loop_pre_header
    _
  $region3: #{pair_stack_forward.6} parent=0 // loop_header
    %s12 = sphi 0, %s16
    %p13 = scmp.ge.s32.totalorder %s12, 34
    %s19 = sphi 0, %s31
    %s20 = sphi 0, %s27
    %s21 = sphi 0, %s19
    %s22 = sphi 0, %s20
    %s23 = sphi 0, %s21
    %s24 = sphi 0, %s22
    %s36 = sphi 0, %s38
    %s39 = sphi 0, %s36
    %s40 = sphi 0, %s39
    %s56 = sphi 0, %s40
    %s60 = sphi 0, %s60
    %s62 = sphi 0, %s60
    %s63 = sphi 0, %s62
    %s77 = sphi 0, %s63
    %s81 = sphi 0, %s81
    %s83 = sphi 0, %s81
    %s84 = sphi 0, %s83
    %s98 = sphi 0, %s84
    %s102 = sphi 0, %s102
    %s104 = sphi 0, %s102
    %s105 = sphi 0, %s104
    %s119 = sphi 0, %s105
    %s123 = sphi 0, %s123
    %s125 = sphi 0, %s123
    %s126 = sphi 0, %s125
    %s140 = sphi 0, %s126
    %s144 = sphi 0, %s144
    %s146 = sphi 0, %s144
    %s147 = sphi 0, %s146
    %s161 = sphi 0, %s147
    %s169 = sphi 0, %s171
    %s172 = sphi 0, %s169
    %s173 = sphi 0, %s172
    %s189 = sphi 0, %s173
  $region4: #{pair_stack_forward.6} parent=0 // loop_header_branch
    %15 = sbr.rel (%p13) target = $region8
  $region5: #{pair_stack_forward.6} parent=0 // loop_body
    %s17 = ssub.s32 %s12, 1
    %s18 = ssub.s32 %s12, 2
    %s25 = sadd.s32 1, %s20
    %p26 = scmp.ge.s32.totalorder %s25, 32
    %s27 = scalar_select %p26, 0, %s25
    %s28 = sadd.s32 1, %s19
    %s29 = scalar_select %p26, %s28, %s19
    %p30 = scmp.ge.s32.totalorder %s29, 1
    %s31 = scalar_select %p30, 0, %s29
    %s32 = ssub.s32 %s19, %s31
    %s33 = ssub.s32 %s20, %s27
    %s34 = sor.u32 %s32, %s33
    %p35 = scmp.eq.s32.totalorder %s34, 0
    %s37 = sadd.s32 %s36, 1
    %s38 = scalar_select %p35, %s36, %s37
    %p41 = pneg %p35
    %p42 = scmp.eq.s32.totalorder %s12, 31
    %p43 = por %p41, %p42
    %p44 = scmp.ne.s32.totalorder %s36, %s39
    %p45 = scmp.eq.s32.totalorder %s12, 0
    %p46 = por %p44, %p45
    %p47 = scmp.ne.s32.totalorder %s36, %s39
    %p48 = scmp.eq.s32.totalorder %s17, 31
    %p49 = por %p47, %p48
    %p50 = scmp.ne.s32.totalorder %s39, %s40
    %p51 = scmp.eq.s32.totalorder %s17, 0
    %p52 = por %p50, %p51
    %p53 = scmp.ne.s32.totalorder %s39, %s40
    %p54 = scmp.eq.s32.totalorder %s18, 31
    %p55 = por %p53, %p54
    %p57 = scmp.ne.s32.totalorder %s40, %s56
    %p58 = scmp.eq.s32.totalorder %s18, 0
    %p59 = por %p57, %p58
    %s61 = sadd.s32 %s60, 1
    %p64 = scmp.eq.s32.totalorder %s12, 31
    %p65 = scmp.ne.s32.totalorder %s60, %s62
    %p66 = scmp.eq.s32.totalorder %s12, 0
    %p67 = por %p65, %p66
    %p68 = scmp.ne.s32.totalorder %s60, %s62
    %p69 = scmp.eq.s32.totalorder %s17, 31
    %p70 = por %p68, %p69
    %p71 = scmp.ne.s32.totalorder %s62, %s63
    %p72 = scmp.eq.s32.totalorder %s17, 0
    %p73 = por %p71, %p72
    %p74 = scmp.ne.s32.totalorder %s62, %s63
    %p75 = scmp.eq.s32.totalorder %s18, 31
    %p76 = por %p74, %p75
    %p78 = scmp.ne.s32.totalorder %s63, %s77
    %p79 = scmp.eq.s32.totalorder %s18, 0
    %p80 = por %p78, %p79
    %s82 = sadd.s32 %s81, 1
    %p85 = scmp.eq.s32.totalorder %s12, 31
    %p86 = scmp.ne.s32.totalorder %s81, %s83
    %p87 = scmp.eq.s32.totalorder %s12, 0
    %p88 = por %p86, %p87
    %p89 = scmp.ne.s32.totalorder %s81, %s83
    %p90 = scmp.eq.s32.totalorder %s17, 31
    %p91 = por %p89, %p90
    %p92 = scmp.ne.s32.totalorder %s83, %s84
    %p93 = scmp.eq.s32.totalorder %s17, 0
    %p94 = por %p92, %p93
    %p95 = scmp.ne.s32.totalorder %s83, %s84
    %p96 = scmp.eq.s32.totalorder %s18, 31
    %p97 = por %p95, %p96
    %p99 = scmp.ne.s32.totalorder %s84, %s98
    %p100 = scmp.eq.s32.totalorder %s18, 0
    %p101 = por %p99, %p100
    %s103 = sadd.s32 %s102, 1
    %p106 = scmp.eq.s32.totalorder %s12, 31
    %p107 = scmp.ne.s32.totalorder %s102, %s104
    %p108 = scmp.eq.s32.totalorder %s12, 0
    %p109 = por %p107, %p108
    %p110 = scmp.ne.s32.totalorder %s102, %s104
    %p111 = scmp.eq.s32.totalorder %s17, 31
    %p112 = por %p110, %p111
    %p113 = scmp.ne.s32.totalorder %s104, %s105
    %p114 = scmp.eq.s32.totalorder %s17, 0
    %p115 = por %p113, %p114
    %p116 = scmp.ne.s32.totalorder %s104, %s105
    %p117 = scmp.eq.s32.totalorder %s18, 31
    %p118 = por %p116, %p117
    %p120 = scmp.ne.s32.totalorder %s105, %s119
    %p121 = scmp.eq.s32.totalorder %s18, 0
    %p122 = por %p120, %p121
    %s124 = sadd.s32 %s123, 1
    %p127 = scmp.eq.s32.totalorder %s12, 31
    %p128 = scmp.ne.s32.totalorder %s123, %s125
    %p129 = scmp.eq.s32.totalorder %s12, 0
    %p130 = por %p128, %p129
    %p131 = scmp.ne.s32.totalorder %s123, %s125
    %p132 = scmp.eq.s32.totalorder %s17, 31
    %p133 = por %p131, %p132
    %p134 = scmp.ne.s32.totalorder %s125, %s126
    %p135 = scmp.eq.s32.totalorder %s17, 0
    %p136 = por %p134, %p135
    %p137 = scmp.ne.s32.totalorder %s125, %s126
    %p138 = scmp.eq.s32.totalorder %s18, 31
    %p139 = por %p137, %p138
    %p141 = scmp.ne.s32.totalorder %s126, %s140
    %p142 = scmp.eq.s32.totalorder %s18, 0
    %p143 = por %p141, %p142
    %s145 = sadd.s32 %s144, 1
    %p148 = scmp.eq.s32.totalorder %s12, 31
    %p149 = scmp.ne.s32.totalorder %s144, %s146
    %p150 = scmp.eq.s32.totalorder %s12, 0
    %p151 = por %p149, %p150
    %p152 = scmp.ne.s32.totalorder %s144, %s146
    %p153 = scmp.eq.s32.totalorder %s17, 31
    %p154 = por %p152, %p153
    %p155 = scmp.ne.s32.totalorder %s146, %s147
    %p156 = scmp.eq.s32.totalorder %s17, 0
    %p157 = por %p155, %p156
    %p158 = scmp.ne.s32.totalorder %s146, %s147
    %p159 = scmp.eq.s32.totalorder %s18, 31
    %p160 = por %p158, %p159
    %p162 = scmp.ne.s32.totalorder %s147, %s161
    %p163 = scmp.eq.s32.totalorder %s18, 0
    %p164 = por %p162, %p163
    %s165 = ssub.s32 %s19, %s31
    %s166 = ssub.s32 %s20, %s27
    %s167 = sor.u32 %s165, %s166
    %p168 = scmp.eq.s32.totalorder %s167, 0
    %s170 = sadd.s32 %s169, 1
    %s171 = scalar_select %p168, %s169, %s170
    %p174 = pneg %p168
    %p175 = scmp.eq.s32.totalorder %s12, 31
    %p176 = por %p174, %p175
    %p177 = scmp.ne.s32.totalorder %s169, %s172
    %p178 = scmp.eq.s32.totalorder %s12, 0
    %p179 = por %p177, %p178
    %p180 = scmp.ne.s32.totalorder %s169, %s172
    %p181 = scmp.eq.s32.totalorder %s17, 31
    %p182 = por %p180, %p181
    %p183 = scmp.ne.s32.totalorder %s172, %s173
    %p184 = scmp.eq.s32.totalorder %s17, 0
    %p185 = por %p183, %p184
    %p186 = scmp.ne.s32.totalorder %s172, %s173
    %p187 = scmp.eq.s32.totalorder %s18, 31
    %p188 = por %p186, %p187
    %p190 = scmp.ne.s32.totalorder %s173, %s189
    %p191 = scmp.eq.s32.totalorder %s18, 0
    %p192 = por %p190, %p191
    %p193 = scmp.le.s32.totalorder 1, %s12
    %p194 = scmp.lt.s32.totalorder %s12, 33
    %p195 = pnand %p193, %p194
    %p196 = pneg %p195
    // Predicated region
    $region9: #{pair_stack_forward.6} parent=5 // pred_check
      _
    $region10: #{pair_stack_forward.6} parent=5 // pred_check_branch
      %198 = sbr.rel (%p195) target = $region12
    $region11: #{pair_stack_forward.6} parent=5 // pred_region
      %s199 = ssub.s32 %s12, 1
      // Predicated region
      $region13: #{pair_stack_forward.6} parent=11 // pred_check
        %p200 = pneg %p73
      $region14: #{pair_stack_forward.6} parent=11 // pred_check_branch
        %202 = sbr.rel (%p200) target = $region16
      $region15: #{pair_stack_forward.6} parent=11 // pred_region
        _
      $region16: #{pair_stack_forward.6} parent=11 // pred_fallthru
        _
      // Predicated region
      $region17: #{pair_stack_forward.6} parent=11 // pred_check
        %p203 = pneg %p94
      $region18: #{pair_stack_forward.6} parent=11 // pred_check_branch
        %205 = sbr.rel (%p203) target = $region20
      $region19: #{pair_stack_forward.6} parent=11 // pred_region
        _
      $region20: #{pair_stack_forward.6} parent=11 // pred_fallthru
        _
      // Predicated region
      $region21: #{pair_stack_forward.6} parent=11 // pred_check
        %p206 = pneg %p115
      $region22: #{pair_stack_forward.6} parent=11 // pred_check_branch
        %208 = sbr.rel (%p206) target = $region24
      $region23: #{pair_stack_forward.6} parent=11 // pred_region
        _
      $region24: #{pair_stack_forward.6} parent=11 // pred_fallthru
        _
      // Predicated region
      $region25: #{pair_stack_forward.6} parent=11 // pred_check
        %p209 = pneg %p136
      $region26: #{pair_stack_forward.6} parent=11 // pred_check_branch
        %211 = sbr.rel (%p209) target = $region28
      $region27: #{pair_stack_forward.6} parent=11 // pred_region
        _
      $region28: #{pair_stack_forward.6} parent=11 // pred_fallthru
        _
      // Predicated region
      $region29: #{pair_stack_forward.6} parent=11 // pred_check
        %p212 = pneg %p157
      $region30: #{pair_stack_forward.6} parent=11 // pred_check_branch
        %214 = sbr.rel (%p212) target = $region32
      $region31: #{pair_stack_forward.6} parent=11 // pred_region
        _
      $region32: #{pair_stack_forward.6} parent=11 // pred_fallthru
        _
    $region12: #{pair_stack_forward.6} parent=5 // pred_fallthru
      _
    %p215 = scmp.lt.s32.totalorder %s12, 32
    // Predicated region
    $region33: #{pair_stack_forward.6} parent=5 // pred_check
      %p216 = pneg %p215
    $region34: #{pair_stack_forward.6} parent=5 // pred_check_branch
      %218 = sbr.rel (%p216) target = $region36
    $region35: #{pair_stack_forward.6} parent=5 // pred_region
      // Predicated region
      $region37: #{pair_stack_forward.6} parent=35 // pred_check
        %p219 = pneg %p46
      $region38: #{pair_stack_forward.6} parent=35 // pred_check_branch
        %221 = sbr.rel (%p219) target = $region40
      $region39: #{pair_stack_forward.6} parent=35 // pred_region
        %p222 = scmp.lt.s32.totalorder %s19, 0
        %s223 = scalar_select %p222, %s19, 0
        %p224 = scmp.lt.s32.totalorder %s20, 31
        %s225 = scalar_select %p224, %s20, 31
        %s226 = smul.addr %s225, 4
        %s227 = smul.addr %s223, 128
        %s228 = sadd.s32 %s226, %s227
        %s229 = smul.addr %s228, 8
        %s230 = scalar_lea.vmem %s0, %s229
      $region40: #{pair_stack_forward.6} parent=35 // pred_fallthru
        _
    $region36: #{pair_stack_forward.6} parent=5 // pred_fallthru
      _
    %p231 = scmp.le.s32.totalorder 1, %s12
    %p232 = scmp.lt.s32.totalorder %s12, 33
    %p233 = pnand %p231, %p232
    %p234 = pneg %p233
    // Predicated region
    $region41: #{pair_stack_forward.6} parent=5 // pred_check
      _
    $region42: #{pair_stack_forward.6} parent=5 // pred_check_branch
      %236 = sbr.rel (%p233) target = $region44
    $region43: #{pair_stack_forward.6} parent=5 // pred_region
      %s237 = ssub.s32 %s12, 1
      %p238 = scmp.lt.s32.totalorder %s21, 0
      %s239 = scalar_select %p238, %s21, 0
      %p240 = scmp.lt.s32.totalorder %s22, 31
      %s241 = scalar_select %p240, %s22, 31
      %s242 = smul.addr %s241, 4
      %s243 = smul.addr %s239, 128
      %s244 = sadd.s32 %s242, %s243
      %s245 = smul.addr %s244, 8
      %s246 = scalar_lea.vmem %s0, %s245
      %p247 = pneg %p52
      %p248 = pneg %p49
      %p249 = pneg %p73
      %p250 = pneg %p70
      %p251 = pneg %p94
      %p252 = pneg %p91
      %p253 = pneg %p115
      %p254 = pneg %p112
      %p255 = pneg %p136
      %p256 = pneg %p133
      %p257 = pneg %p157
      %p258 = pneg %p154
      %p259 = pneg %p185
      %p260 = pneg %p182
      %p261 = scmp.lt.s32.totalorder %s21, 0
      %s262 = scalar_select %p261, %s21, 0
      %p263 = scmp.lt.s32.totalorder %s22, 31
      %s264 = scalar_select %p263, %s22, 31
      %s265 = smul.addr %s264, 4
      %s266 = smul.addr %s262, 128
      %s267 = sadd.s32 %s265, %s266
      %s268 = smul.addr %s267, 8
      %s269 = scalar_lea.vmem %s6, %s268
      %p270 = scmp.lt.s32.totalorder %s21, 0
      %s271 = scalar_select %p270, %s21, 0
      %p272 = scmp.lt.s32.totalorder %s22, 31
      %s273 = scalar_select %p272, %s22, 31
      %s274 = smul.addr %s273, 4
      %s275 = smul.addr %s271, 128
      %s276 = sadd.s32 %s274, %s275
      %s277 = smul.addr %s276, 8
      %s278 = scalar_lea.vmem %s0, %s277
      %p279 = scmp.lt.s32.totalorder %s21, 0
      %s280 = scalar_select %p279, %s21, 0
      %p281 = scmp.lt.s32.totalorder %s22, 31
      %s282 = scalar_select %p281, %s22, 31
      %s283 = smul.addr %s282, 4
      %s284 = smul.addr %s280, 128
      %s285 = sadd.s32 %s283, %s284
      %s286 = smul.addr %s285, 8
      %s287 = scalar_lea.vmem %s6, %s286
      %v288 = vld [vmem:[%s278] sm:$0xff]
      %v289 = vld [vmem:[%s278 + $0x8] sm:$0xff]
      %v290 = vld [vmem:[%s278 + $0x10] sm:$0xff]
      %v291 = vld [vmem:[%s278 + $0x18] sm:$0xff]
      %v292 = vld [vmem:[%s4] sm:$0x1]
      %v293 = vld [vmem:[%s5] sm:$0x1]
      %vm294 = vcmask 261120
      %v295 = vsel %vm294, %v288, 0.0
      %296 = vadd.xlane.f32.xlu0 %v295
      %v297 = vpop.xlane.xlu0 %296
      %v298 = vsel %vm294, %v289, 0.0
      %299 = vadd.xlane.f32.xlu0 %v298
      %v300 = vpop.xlane.xlu0 %299
      %v301 = vsel %vm294, %v290, 0.0
      %302 = vadd.xlane.f32.xlu0 %v301
      %v303 = vpop.xlane.xlu0 %302
      %v304 = vsel %vm294, %v291, 0.0
      %305 = vadd.xlane.f32.xlu0 %v304
      %v306 = vpop.xlane.xlu0 %305
      %v307 = vrcp.pop 32.0
      %v308 = vmul.f32 %v297, %v307
      %v309 = vmul.f32 %v300, %v307
      %v310 = vmul.f32 %v303, %v307
      %v311 = vmul.f32 %v306, %v307
      %v312 = vsub.f32 %v288, %v308
      %v313 = vsub.f32 %v289, %v309
      %v314 = vsub.f32 %v290, %v310
      %v315 = vsub.f32 %v291, %v311
      %v316 = vmul.f32 %v312, %v312
      %v317 = vmul.f32 %v313, %v313
      %v318 = vmul.f32 %v314, %v314
      %v319 = vmul.f32 %v315, %v315
      %v320 = vsel %vm294, %v316, 0.0
      %321 = vadd.xlane.f32.xlu0 %v320
      %v322 = vpop.xlane.xlu0 %321
      %v323 = vsel %vm294, %v317, 0.0
      %324 = vadd.xlane.f32.xlu0 %v323
      %v325 = vpop.xlane.xlu0 %324
      %v326 = vsel %vm294, %v318, 0.0
      %327 = vadd.xlane.f32.xlu0 %v326
      %v328 = vpop.xlane.xlu0 %327
      %v329 = vsel %vm294, %v319, 0.0
      %330 = vadd.xlane.f32.xlu0 %v329
      %v331 = vpop.xlane.xlu0 %330
      %v332 = vmul.f32 %v322, %v307
      %v333 = vmul.f32 %v325, %v307
      %v334 = vmul.f32 %v328, %v307
      %v335 = vmul.f32 %v331, %v307
      %v336 = vadd.f32 %v332, 1e-05
      %v337 = vadd.f32 %v333, 1e-05
      %v338 = vadd.f32 %v334, 1e-05
      %v339 = vadd.f32 %v335, 1e-05
      %v340 = vrsqrt.pop %v336
      %v341 = vrsqrt.pop %v337
      %v342 = vrsqrt.pop %v338
      %v343 = vrsqrt.pop %v339
      %v344 = vmul.f32 %v312, %v340
      %v345 = vmul.f32 %v313, %v341
      %v346 = vmul.f32 %v314, %v342
      %v347 = vmul.f32 %v315, %v343
      %v349 = vlaneseq
      %v350 = vshrl.u32 %v349, 7
      %v351 = vsub.s32 0, %v350
      %v352 = vrot.slane %v292, %v351
      %v354 = vmul.f32 %v344, %v352
      %v355 = vmul.f32 %v345, %v352
      %v356 = vmul.f32 %v346, %v352
      %v357 = vmul.f32 %v347, %v352
      %v359 = vlaneseq
      %v360 = vshrl.u32 %v359, 7
      %v361 = vsub.s32 0, %v360
      %v362 = vrot.slane %v293, %v361
      %v364 = vadd.f32 %v354, %v362
      %v365 = vadd.f32 %v355, %v362
      %v366 = vadd.f32 %v356, %v362
      %v367 = vadd.f32 %v357, %v362
      %v368 = vld [vmem:[%s1] sm:$0xff]
      %v369 = vld [vmem:[%s1 + $0x8] sm:$0xff]
      %v370 = vld [vmem:[%s1 + $0x10] sm:$0xff]
      %v371 = vld [vmem:[%s1 + $0x18] sm:$0xff]
      %v373 = vsel %vm294, %v364, 0
      %v376 = vsel %vm294, %v365, 0
      %v379 = vsel %vm294, %v366, 0
      %v382 = vsel %vm294, %v367, 0
      %384 = vmatprep.subr.mxu0 0.0
      %385 = vmatpush1.msra.mxu0 %v368
      %386 = vmatprep.subr.mxu0 0.0
      %387 = vmatpush1.msra.mxu0 %v369
      %388 = vmatprep.subr.mxu0 0.0
      %389 = vmatpush1.msra.mxu0 %v370
      %390 = vmatprep.subr.mxu0 0.0
      %391 = vmatpush1.msra.mxu0 %v371
      %392 = vmatprep.subr.mxu0 0.0
      %393 = vmatpush1.msra.mxu0 0.0
      %394 = vmatprep.subr.mxu0 0.0
      %395 = vmatpush1.msra.mxu0 0.0
      %396 = vmatprep.subr.mxu0 0.0
      %397 = vmatpush1.msra.mxu0 0.0
      %398 = vmatprep.subr.mxu0 0.0
      %399 = vmatpush1.msra.mxu0 0.0
      %400 = vmatprep.subr.mxu0 0.0
      %401 = vmatpush1.msra.mxu0 0.0
      %402 = vmatprep.subr.mxu0 0.0
      %403 = vmatpush1.msra.mxu0 0.0
      %404 = vmatprep.subr.mxu0 0.0
      %405 = vmatpush1.msra.mxu0 0.0
      %406 = vmatprep.subr.mxu0 0.0
      %407 = vmatpush1.msra.mxu0 0.0
      %408 = vmatprep.subr.mxu0 0.0
      %409 = vmatpush1.msra.mxu0 0.0
      %410 = vmatprep.subr.mxu0 0.0
      %411 = vmatpush1.msra.mxu0 0.0
      %412 = vmatprep.subr.mxu0 0.0
      %413 = vmatpush1.msra.mxu0 0.0
      %414 = vmatprep.subr.mxu0 0.0
      %415 = vmatpush1.msra.mxu0 0.0
      %416 = vmatprep.subr.mxu0 0.0
      %417 = vmatpush1.msra.mxu0 0.0
      %418 = vmatprep.subr.mxu0 0.0
      %419 = vmatpush1.msra.mxu0 0.0
      %420 = vmatprep.subr.mxu0 0.0
      %421 = vmatpush1.msra.mxu0 0.0
      %422 = vmatprep.subr.mxu0 0.0
      %423 = vmatpush1.msra.mxu0 0.0
      %424 = vmatprep.subr.mxu0 0.0
      %425 = vmatpush1.msra.mxu0 0.0
      %426 = vmatprep.subr.mxu0 0.0
      %427 = vmatpush1.msra.mxu0 0.0
      %428 = vmatprep.subr.mxu0 0.0
      %429 = vmatpush1.msra.mxu0 0.0
      %430 = vmatprep.subr.mxu0 0.0
      %431 = vmatpush1.msra.mxu0 0.0
      %432 = vmatprep.subr.mxu0 0.0
      %433 = vmatpush1.msra.mxu0 0.0
      %434 = vmatprep.subr.mxu0 0.0
      %435 = vmatpush1.msra.mxu0 0.0
      %436 = vmatprep.subr.mxu0 0.0
      %437 = vmatpush1.msra.mxu0 0.0
      %438 = vmatprep.subr.mxu0 0.0
      %439 = vmatpush1.msra.mxu0 0.0
      %440 = vmatprep.subr.mxu0 0.0
      %441 = vmatpush1.msra.mxu0 0.0
      %442 = vmatprep.subr.mxu0 0.0
      %443 = vmatpush1.msra.mxu0 0.0
      %444 = vmatprep.subr.mxu0 0.0
      %445 = vmatpush1.msra.mxu0 0.0
      %446 = vmatprep.subr.mxu0 0.0
      %447 = vmatpush1.msra.mxu0 0.0
      %448 = vmatprep.mubr.f32.mxu0 0.0
      %449 = vmatmul.mubr.f32.gmra.mrb[0].mxu0 %v373
      %v450 = vpop.f32.mrb[0].mxu0
      %v451 = vadd.f32 0.0, %v450
      %v452 = vpop.f32.mrb[0].mxu0
      %453 = vmatprep.mubr.f32.mxu0 0.0
      %454 = vmatmul.mubr.f32.gmra.mrb[0].mxu0 %v376
      %v455 = vpop.f32.mrb[0].mxu0
      %v456 = vadd.f32 0.0, %v455
      %v457 = vpop.f32.mrb[0].mxu0
      %458 = vmatprep.mubr.f32.mxu0 0.0
      %459 = vmatmul.mubr.f32.gmra.mrb[0].mxu0 %v379
      %v460 = vpop.f32.mrb[0].mxu0
      %v461 = vadd.f32 0.0, %v460
      %v462 = vpop.f32.mrb[0].mxu0
      %463 = vmatprep.mubr.f32.mxu0 0.0
      %464 = vmatmul.mubr.f32.gmra.mrb[0].mxu0 %v382
      %v465 = vpop.f32.mrb[0].mxu0
      %v466 = vadd.f32 0.0, %v465
      %v467 = vpop.f32.mrb[0].mxu0
      %468 = vdwg.mxu0
      %v469 = vxor.u32 %v451, 2147483648
      %v470 = vxor.u32 %v456, 2147483648
      %v471 = vxor.u32 %v461, 2147483648
      %v472 = vxor.u32 %v466, 2147483648
      %v473 = vmul.f32 %v469, 1.442695
      %v474 = vpow.pop %v473
      %v475 = vmul.f32 %v470, 1.442695
      %v476 = vpow.pop %v475
      %v477 = vmul.f32 %v471, 1.442695
      %v478 = vpow.pop %v477
      %v479 = vmul.f32 %v472, 1.442695
      %v480 = vpow.pop %v479
      %v481 = vadd.f32 %v474, 1.0
      %v482 = vadd.f32 %v476, 1.0
      %v483 = vadd.f32 %v478, 1.0
      %v484 = vadd.f32 %v480, 1.0
      %v485 = vrcp.pop %v481
      %v486 = vmul.f32 1.0, %v485
      %v487 = vrcp.pop %v482
      %v488 = vmul.f32 1.0, %v487
      %v489 = vrcp.pop %v483
      %v490 = vmul.f32 1.0, %v489
      %v491 = vrcp.pop %v484
      %v492 = vmul.f32 1.0, %v491
      %v493 = vmul.f32 %v486, %v451
      %v494 = vmul.f32 %v488, %v456
      %v495 = vmul.f32 %v490, %v461
      %v496 = vmul.f32 %v492, %v466
      %v497 = vld [vmem:[%s2] sm:$0xff]
      %v498 = vld [vmem:[%s2 + $0x8] sm:$0xff]
      %v499 = vld [vmem:[%s2 + $0x10] sm:$0xff]
      %v500 = vld [vmem:[%s2 + $0x18] sm:$0xff]
      %501 = vmatprep.subr.mxu0 0.0
      %502 = vmatpush1.msra.mxu0 %v497
      %503 = vmatprep.subr.mxu0 0.0
      %504 = vmatpush1.msra.mxu0 %v498
      %505 = vmatprep.subr.mxu0 0.0
      %506 = vmatpush1.msra.mxu0 %v499
      %507 = vmatprep.subr.mxu0 0.0
      %508 = vmatpush1.msra.mxu0 %v500
      %509 = vmatprep.subr.mxu0 0.0
      %510 = vmatpush1.msra.mxu0 0.0
      %511 = vmatprep.subr.mxu0 0.0
      %512 = vmatpush1.msra.mxu0 0.0
      %513 = vmatprep.subr.mxu0 0.0
      %514 = vmatpush1.msra.mxu0 0.0
      %515 = vmatprep.subr.mxu0 0.0
      %516 = vmatpush1.msra.mxu0 0.0
      %517 = vmatprep.subr.mxu0 0.0
      %518 = vmatpush1.msra.mxu0 0.0
      %519 = vmatprep.subr.mxu0 0.0
      %520 = vmatpush1.msra.mxu0 0.0
      %521 = vmatprep.subr.mxu0 0.0
      %522 = vmatpush1.msra.mxu0 0.0
      %523 = vmatprep.subr.mxu0 0.0
      %524 = vmatpush1.msra.mxu0 0.0
      %525 = vmatprep.subr.mxu0 0.0
      %526 = vmatpush1.msra.mxu0 0.0
      %527 = vmatprep.subr.mxu0 0.0
      %528 = vmatpush1.msra.mxu0 0.0
      %529 = vmatprep.subr.mxu0 0.0
      %530 = vmatpush1.msra.mxu0 0.0
      %531 = vmatprep.subr.mxu0 0.0
      %532 = vmatpush1.msra.mxu0 0.0
      %533 = vmatprep.subr.mxu0 0.0
      %534 = vmatpush1.msra.mxu0 0.0
      %535 = vmatprep.subr.mxu0 0.0
      %536 = vmatpush1.msra.mxu0 0.0
      %537 = vmatprep.subr.mxu0 0.0
      %538 = vmatpush1.msra.mxu0 0.0
      %539 = vmatprep.subr.mxu0 0.0
      %540 = vmatpush1.msra.mxu0 0.0
      %541 = vmatprep.subr.mxu0 0.0
      %542 = vmatpush1.msra.mxu0 0.0
      %543 = vmatprep.subr.mxu0 0.0
      %544 = vmatpush1.msra.mxu0 0.0
      %545 = vmatprep.subr.mxu0 0.0
      %546 = vmatpush1.msra.mxu0 0.0
      %547 = vmatprep.subr.mxu0 0.0
      %548 = vmatpush1.msra.mxu0 0.0
      %549 = vmatprep.subr.mxu0 0.0
      %550 = vmatpush1.msra.mxu0 0.0
      %551 = vmatprep.subr.mxu0 0.0
      %552 = vmatpush1.msra.mxu0 0.0
      %553 = vmatprep.subr.mxu0 0.0
      %554 = vmatpush1.msra.mxu0 0.0
      %555 = vmatprep.subr.mxu0 0.0
      %556 = vmatpush1.msra.mxu0 0.0
      %557 = vmatprep.subr.mxu0 0.0
      %558 = vmatpush1.msra.mxu0 0.0
      %559 = vmatprep.subr.mxu0 0.0
      %560 = vmatpush1.msra.mxu0 0.0
      %561 = vmatprep.subr.mxu0 0.0
      %562 = vmatpush1.msra.mxu0 0.0
      %563 = vmatprep.subr.mxu0 0.0
      %564 = vmatpush1.msra.mxu0 0.0
      %565 = vmatprep.mubr.f32.mxu0 0.0
      %566 = vmatmul.mubr.f32.gmra.mrb[0].mxu0 %v373
      %v567 = vpop.f32.mrb[0].mxu0
      %v568 = vadd.f32 0.0, %v567
      %v569 = vpop.f32.mrb[0].mxu0
      %570 = vmatprep.mubr.f32.mxu0 0.0
      %571 = vmatmul.mubr.f32.gmra.mrb[0].mxu0 %v376
      %v572 = vpop.f32.mrb[0].mxu0
      %v573 = vadd.f32 0.0, %v572
      %v574 = vpop.f32.mrb[0].mxu0
      %575 = vmatprep.mubr.f32.mxu0 0.0
      %576 = vmatmul.mubr.f32.gmra.mrb[0].mxu0 %v379
      %v577 = vpop.f32.mrb[0].mxu0
      %v578 = vadd.f32 0.0, %v577
      %v579 = vpop.f32.mrb[0].mxu0
      %580 = vmatprep.mubr.f32.mxu0 0.0
      %581 = vmatmul.mubr.f32.gmra.mrb[0].mxu0 %v382
      %v582 = vpop.f32.mrb[0].mxu0
      %v583 = vadd.f32 0.0, %v582
      %v584 = vpop.f32.mrb[0].mxu0
      %585 = vdwg.mxu0
      %v586 = vxor.u32 %v568, 2147483648
      %v587 = vxor.u32 %v573, 2147483648
      %v588 = vxor.u32 %v578, 2147483648
      %v589 = vxor.u32 %v583, 2147483648
      %v590 = vmul.f32 %v586, 1.442695
      %v591 = vpow.pop %v590
      %v592 = vmul.f32 %v587, 1.442695
      %v593 = vpow.pop %v592
      %v594 = vmul.f32 %v588, 1.442695
      %v595 = vpow.pop %v594
      %v596 = vmul.f32 %v589, 1.442695
      %v597 = vpow.pop %v596
      %v598 = vadd.f32 %v591, 1.0
      %v599 = vadd.f32 %v593, 1.0
      %v600 = vadd.f32 %v595, 1.0
      %v601 = vadd.f32 %v597, 1.0
      %v602 = vrcp.pop %v598
      %v603 = vmul.f32 1.0, %v602
      %v604 = vrcp.pop %v599
      %v605 = vmul.f32 1.0, %v604
      %v606 = vrcp.pop %v600
      %v607 = vmul.f32 1.0, %v606
      %v608 = vrcp.pop %v601
      %v609 = vmul.f32 1.0, %v608
      %610 = vxpose.xlu0.b32.start [1/16] %v493, 128
      %611 = vxpose.xlu0.b32.cont [2/16] %v494, 128
      %612 = vxpose.xlu0.b32.cont [3/16] %v495, 128
      %613 = vxpose.xlu0.b32.cont [4/16] %v496, 128
      %614 = vxpose.xlu0.b32.cont [5/16] 0.0, 128
      %615 = vxpose.xlu0.b32.cont [6/16] 0.0, 128
      %616 = vxpose.xlu0.b32.cont [7/16] 0.0, 128
      %617 = vxpose.xlu0.b32.cont [8/16] 0.0, 128
      %618 = vxpose.xlu0.b32.cont [9/16] 0.0, 128
      %619 = vxpose.xlu0.b32.cont [10/16] 0.0, 128
      %620 = vxpose.xlu0.b32.cont [11/16] 0.0, 128
      %621 = vxpose.xlu0.b32.cont [12/16] 0.0, 128
      %622 = vxpose.xlu0.b32.cont [13/16] 0.0, 128
      %623 = vxpose.xlu0.b32.cont [14/16] 0.0, 128
      %624 = vxpose.xlu0.b32.cont [15/16] 0.0, 128
      %625 = vxpose.xlu0.b32.end [16/16] 0.0, 128
      %v626 = vpop.trf.xlu0
      %v627 = vpop.trf.xlu0
      %v628 = vpop.trf.xlu0
      %v629 = vpop.trf.xlu0
      %v630 = vpop.trf.xlu0
      %v631 = vpop.trf.xlu0
      %v632 = vpop.trf.xlu0
      %v633 = vpop.trf.xlu0
      %v634 = vpop.trf.xlu0
      %v635 = vpop.trf.xlu0
      %v636 = vpop.trf.xlu0
      %v637 = vpop.trf.xlu0
      %v638 = vpop.trf.xlu0
      %v639 = vpop.trf.xlu0
      %v640 = vpop.trf.xlu0
      %v641 = vpop.trf.xlu0
      %646 = vrot.lane.b32.xlu0 %v493, 96
      %v647 = vpop.permute.xlu0 %646
      %648 = vrot.lane.b32.xlu0 %v494, 96
      %v649 = vpop.permute.xlu0 %648
      %650 = vrot.lane.b32.xlu0 %v495, 96
      %v651 = vpop.permute.xlu0 %650
      %652 = vrot.lane.b32.xlu0 %v496, 96
      %v653 = vpop.permute.xlu0 %652
      %v659 = vsel %vm294, %v626, 0
      %v662 = vsel %vm294, %v627, 0
      %v665 = vsel %vm294, %v628, 0
      %v668 = vsel %vm294, %v629, 0
      %670 = vmatprep.subr.mxu0 0.0
      %671 = vmatpush1.msra.mxu0 %v647
      %672 = vmatprep.subr.mxu0 0.0
      %673 = vmatpush1.msra.mxu0 %v649
      %674 = vmatprep.subr.mxu0 0.0
      %675 = vmatpush1.msra.mxu0 %v651
      %676 = vmatprep.subr.mxu0 0.0
      %677 = vmatpush1.msra.mxu0 %v653
      %678 = vmatprep.subr.mxu0 0.0
      %679 = vmatpush1.msra.mxu0 0.0
      %680 = vmatprep.subr.mxu0 0.0
      %681 = vmatpush1.msra.mxu0 0.0
      %682 = vmatprep.subr.mxu0 0.0
      %683 = vmatpush1.msra.mxu0 0.0
      %684 = vmatprep.subr.mxu0 0.0
      %685 = vmatpush1.msra.mxu0 0.0
      %686 = vmatprep.subr.mxu0 0.0
      %687 = vmatpush1.msra.mxu0 0.0
      %688 = vmatprep.subr.mxu0 0.0
      %689 = vmatpush1.msra.mxu0 0.0
      %690 = vmatprep.subr.mxu0 0.0
      %691 = vmatpush1.msra.mxu0 0.0
      %692 = vmatprep.subr.mxu0 0.0
      %693 = vmatpush1.msra.mxu0 0.0
      %694 = vmatprep.subr.mxu0 0.0
      %695 = vmatpush1.msra.mxu0 0.0
      %696 = vmatprep.subr.mxu0 0.0
      %697 = vmatpush1.msra.mxu0 0.0
      %698 = vmatprep.subr.mxu0 0.0
      %699 = vmatpush1.msra.mxu0 0.0
      %700 = vmatprep.subr.mxu0 0.0
      %701 = vmatpush1.msra.mxu0 0.0
      %702 = vmatprep.subr.mxu0 0.0
      %703 = vmatpush1.msra.mxu0 0.0
      %704 = vmatprep.subr.mxu0 0.0
      %705 = vmatpush1.msra.mxu0 0.0
      %706 = vmatprep.subr.mxu0 0.0
      %707 = vmatpush1.msra.mxu0 0.0
      %708 = vmatprep.subr.mxu0 0.0
      %709 = vmatpush1.msra.mxu0 0.0
      %710 = vmatprep.subr.mxu0 0.0
      %711 = vmatpush1.msra.mxu0 0.0
      %712 = vmatprep.subr.mxu0 0.0
      %713 = vmatpush1.msra.mxu0 0.0
      %714 = vmatprep.subr.mxu0 0.0
      %715 = vmatpush1.msra.mxu0 0.0
      %716 = vmatprep.subr.mxu0 0.0
      %717 = vmatpush1.msra.mxu0 0.0
      %718 = vmatprep.subr.mxu0 0.0
      %719 = vmatpush1.msra.mxu0 0.0
      %720 = vmatprep.subr.mxu0 0.0
      %721 = vmatpush1.msra.mxu0 0.0
      %722 = vmatprep.subr.mxu0 0.0
      %723 = vmatpush1.msra.mxu0 0.0
      %724 = vmatprep.subr.mxu0 0.0
      %725 = vmatpush1.msra.mxu0 0.0
      %726 = vmatprep.subr.mxu0 0.0
      %727 = vmatpush1.msra.mxu0 0.0
      %728 = vmatprep.subr.mxu0 0.0
      %729 = vmatpush1.msra.mxu0 0.0
      %730 = vmatprep.subr.mxu0 0.0
      %731 = vmatpush1.msra.mxu0 0.0
      %732 = vmatprep.subr.mxu0 0.0
      %733 = vmatpush1.msra.mxu0 0.0
      %734 = vmatprep.mubr.f32.mxu0 0.0
      %735 = vmatmul.mubr.f32.gmra.mrb[0].mxu0 %v659
      %v736 = vpop.f32.mrb[0].mxu0
      %v737 = vadd.f32 0.0, %v736
      %v738 = vpop.f32.mrb[0].mxu0
      %739 = vmatprep.mubr.f32.mxu0 0.0
      %740 = vmatmul.mubr.f32.gmra.mrb[0].mxu0 %v662
      %v741 = vpop.f32.mrb[0].mxu0
      %v742 = vadd.f32 0.0, %v741
      %v743 = vpop.f32.mrb[0].mxu0
      %744 = vmatprep.mubr.f32.mxu0 0.0
      %745 = vmatmul.mubr.f32.gmra.mrb[0].mxu0 %v665
      %v746 = vpop.f32.mrb[0].mxu0
      %v747 = vadd.f32 0.0, %v746
      %v748 = vpop.f32.mrb[0].mxu0
      %749 = vmatprep.mubr.f32.mxu0 0.0
      %750 = vmatmul.mubr.f32.gmra.mrb[0].mxu0 %v668
      %v751 = vpop.f32.mrb[0].mxu0
      %v752 = vadd.f32 0.0, %v751
      %v753 = vpop.f32.mrb[0].mxu0
      %754 = vdwg.mxu0
      %v755 = vsel %vm294, %v737, 0.0
      %756 = vadd.xlane.f32.xlu0 %v755
      %v757 = vpop.xlane.xlu0 %756
      %v758 = vsel %vm294, %v742, 0.0
      %759 = vadd.xlane.f32.xlu0 %v758
      %v760 = vpop.xlane.xlu0 %759
      %v761 = vsel %vm294, %v747, 0.0
      %762 = vadd.xlane.f32.xlu0 %v761
      %v763 = vpop.xlane.xlu0 %762
      %v764 = vsel %vm294, %v752, 0.0
      %765 = vadd.xlane.f32.xlu0 %v764
      %v766 = vpop.xlane.xlu0 %765
      %v767 = vmul.f32 %v757, %v307
      %v768 = vmul.f32 %v760, %v307
      %v769 = vmul.f32 %v763, %v307
      %v770 = vmul.f32 %v766, %v307
      %v771 = vsub.f32 %v737, %v767
      %v772 = vsub.f32 %v742, %v768
      %v773 = vsub.f32 %v747, %v769
      %v774 = vsub.f32 %v752, %v770
      %v775 = vmul.f32 %v771, %v771
      %v776 = vmul.f32 %v772, %v772
      %v777 = vmul.f32 %v773, %v773
      %v778 = vmul.f32 %v774, %v774
      %v779 = vsel %vm294, %v775, 0.0
      %780 = vadd.xlane.f32.xlu0 %v779
      %v781 = vpop.xlane.xlu0 %780
      %v782 = vsel %vm294, %v776, 0.0
      %783 = vadd.xlane.f32.xlu0 %v782
      %v784 = vpop.xlane.xlu0 %783
      %v785 = vsel %vm294, %v777, 0.0
      %786 = vadd.xlane.f32.xlu0 %v785
      %v787 = vpop.xlane.xlu0 %786
      %v788 = vsel %vm294, %v778, 0.0
      %789 = vadd.xlane.f32.xlu0 %v788
      %v790 = vpop.xlane.xlu0 %789
      %v791 = vmul.f32 %v781, %v307
      %v792 = vmul.f32 %v784, %v307
      %v793 = vmul.f32 %v787, %v307
      %v794 = vmul.f32 %v790, %v307
      %v795 = vadd.f32 %v791, 1e-05
      %v796 = vadd.f32 %v792, 1e-05
      %v797 = vadd.f32 %v793, 1e-05
      %v798 = vadd.f32 %v794, 1e-05
      %v799 = vrsqrt.pop %v795
      %v800 = vrsqrt.pop %v796
      %v801 = vrsqrt.pop %v797
      %v802 = vrsqrt.pop %v798
      %v803 = vmul.f32 %v771, %v799
      %v804 = vmul.f32 %v772, %v800
      %v805 = vmul.f32 %v773, %v801
      %v806 = vmul.f32 %v774, %v802
      %v807 = vmul.f32 %v803, %v352
      %v808 = vmul.f32 %v804, %v352
      %v809 = vmul.f32 %v805, %v352
      %v810 = vmul.f32 %v806, %v352
      %v811 = vadd.f32 %v807, %v362
      %v812 = vadd.f32 %v808, %v362
      %v813 = vadd.f32 %v809, %v362
      %v814 = vadd.f32 %v810, %v362
      %v815 = vld [vmem:[%s3] sm:$0xff]
      %v816 = vld [vmem:[%s3 + $0x8] sm:$0xff]
      %v817 = vld [vmem:[%s3 + $0x10] sm:$0xff]
      %v818 = vld [vmem:[%s3 + $0x18] sm:$0xff]
      %v820 = vsel %vm294, %v811, 0
      %v823 = vsel %vm294, %v812, 0
      %v826 = vsel %vm294, %v813, 0
      %v829 = vsel %vm294, %v814, 0
      %831 = vmatprep.subr.mxu0 0.0
      %832 = vmatpush1.msra.mxu0 %v815
      %833 = vmatprep.subr.mxu0 0.0
      %834 = vmatpush1.msra.mxu0 %v816
      %835 = vmatprep.subr.mxu0 0.0
      %836 = vmatpush1.msra.mxu0 %v817
      %837 = vmatprep.subr.mxu0 0.0
      %838 = vmatpush1.msra.mxu0 %v818
      %839 = vmatprep.subr.mxu0 0.0
      %840 = vmatpush1.msra.mxu0 0.0
      %841 = vmatprep.subr.mxu0 0.0
      %842 = vmatpush1.msra.mxu0 0.0
      %843 = vmatprep.subr.mxu0 0.0
      %844 = vmatpush1.msra.mxu0 0.0
      %845 = vmatprep.subr.mxu0 0.0
      %846 = vmatpush1.msra.mxu0 0.0
      %847 = vmatprep.subr.mxu0 0.0
      %848 = vmatpush1.msra.mxu0 0.0
      %849 = vmatprep.subr.mxu0 0.0
      %850 = vmatpush1.msra.mxu0 0.0
      %851 = vmatprep.subr.mxu0 0.0
      %852 = vmatpush1.msra.mxu0 0.0
      %853 = vmatprep.subr.mxu0 0.0
      %854 = vmatpush1.msra.mxu0 0.0
      %855 = vmatprep.subr.mxu0 0.0
      %856 = vmatpush1.msra.mxu0 0.0
      %857 = vmatprep.subr.mxu0 0.0
      %858 = vmatpush1.msra.mxu0 0.0
      %859 = vmatprep.subr.mxu0 0.0
      %860 = vmatpush1.msra.mxu0 0.0
      %861 = vmatprep.subr.mxu0 0.0
      %862 = vmatpush1.msra.mxu0 0.0
      %863 = vmatprep.subr.mxu0 0.0
      %864 = vmatpush1.msra.mxu0 0.0
      %865 = vmatprep.subr.mxu0 0.0
      %866 = vmatpush1.msra.mxu0 0.0
      %867 = vmatprep.subr.mxu0 0.0
      %868 = vmatpush1.msra.mxu0 0.0
      %869 = vmatprep.subr.mxu0 0.0
      %870 = vmatpush1.msra.mxu0 0.0
      %871 = vmatprep.subr.mxu0 0.0
      %872 = vmatpush1.msra.mxu0 0.0
      %873 = vmatprep.subr.mxu0 0.0
      %874 = vmatpush1.msra.mxu0 0.0
      %875 = vmatprep.subr.mxu0 0.0
      %876 = vmatpush1.msra.mxu0 0.0
      %877 = vmatprep.subr.mxu0 0.0
      %878 = vmatpush1.msra.mxu0 0.0
      %879 = vmatprep.subr.mxu0 0.0
      %880 = vmatpush1.msra.mxu0 0.0
      %881 = vmatprep.subr.mxu0 0.0
      %882 = vmatpush1.msra.mxu0 0.0
      %883 = vmatprep.subr.mxu0 0.0
      %884 = vmatpush1.msra.mxu0 0.0
      %885 = vmatprep.subr.mxu0 0.0
      %886 = vmatpush1.msra.mxu0 0.0
      %887 = vmatprep.subr.mxu0 0.0
      %888 = vmatpush1.msra.mxu0 0.0
      %889 = vmatprep.subr.mxu0 0.0
      %890 = vmatpush1.msra.mxu0 0.0
      %891 = vmatprep.subr.mxu0 0.0
      %892 = vmatpush1.msra.mxu0 0.0
      %893 = vmatprep.subr.mxu0 0.0
      %894 = vmatpush1.msra.mxu0 0.0
      %895 = vmatprep.mubr.f32.mxu0 0.0
      %896 = vmatmul.mubr.f32.gmra.mrb[0].mxu0 %v820
      %v897 = vpop.f32.mrb[0].mxu0
      %v898 = vadd.f32 0.0, %v897
      %v899 = vpop.f32.mrb[0].mxu0
      %900 = vmatprep.mubr.f32.mxu0 0.0
      %901 = vmatmul.mubr.f32.gmra.mrb[0].mxu0 %v823
      %v902 = vpop.f32.mrb[0].mxu0
      %v903 = vadd.f32 0.0, %v902
      %v904 = vpop.f32.mrb[0].mxu0
      %905 = vmatprep.mubr.f32.mxu0 0.0
      %906 = vmatmul.mubr.f32.gmra.mrb[0].mxu0 %v826
      %v907 = vpop.f32.mrb[0].mxu0
      %v908 = vadd.f32 0.0, %v907
      %v909 = vpop.f32.mrb[0].mxu0
      %910 = vmatprep.mubr.f32.mxu0 0.0
      %911 = vmatmul.mubr.f32.gmra.mrb[0].mxu0 %v829
      %v912 = vpop.f32.mrb[0].mxu0
      %v913 = vadd.f32 0.0, %v912
      %v914 = vpop.f32.mrb[0].mxu0
      %915 = vdwg.mxu0
      %v916 = vmul.f32 %v898, %v603
      %v917 = vmul.f32 %v903, %v605
      %v918 = vmul.f32 %v908, %v607
      %v919 = vmul.f32 %v913, %v609
      %v920 = vadd.f32 %v288, %v916
      %v921 = vadd.f32 %v289, %v917
      %v922 = vadd.f32 %v290, %v918
      %v923 = vadd.f32 %v291, %v919
      %924 = vst.msk [vmem:[%s287] sm:$0xff] %vm294, %v920
      %925 = vst.msk [vmem:[%s287 + $0x8] sm:$0xff] %vm294, %v921
      %926 = vst.msk [vmem:[%s287 + $0x10] sm:$0xff] %vm294, %v922
      %927 = vst.msk [vmem:[%s287 + $0x18] sm:$0xff] %vm294, %v923
      %p928 = scmp.lt.s32.totalorder %s21, 0
      %s929 = scalar_select %p928, %s21, 0
      %p930 = scmp.lt.s32.totalorder %s22, 31
      %s931 = scalar_select %p930, %s22, 31
      %s932 = smul.addr %s931, 4
      %s933 = smul.addr %s929, 128
      %s934 = sadd.s32 %s932, %s933
      %s935 = smul.addr %s934, 8
      %s936 = scalar_lea.vmem %s6, %s935
      // Predicated region
      $region45: #{pair_stack_forward.6} parent=43 // pred_check
        %p937 = pneg %p182
      $region46: #{pair_stack_forward.6} parent=43 // pred_check_branch
        %939 = sbr.rel (%p937) target = $region48
      $region47: #{pair_stack_forward.6} parent=43 // pred_region
        _
      $region48: #{pair_stack_forward.6} parent=43 // pred_fallthru
        _
    $region44: #{pair_stack_forward.6} parent=5 // pred_fallthru
      _
    %p940 = scmp.le.s32.totalorder 2, %s12
    // Predicated region
    $region49: #{pair_stack_forward.6} parent=5 // pred_check
      %p941 = pneg %p940
    $region50: #{pair_stack_forward.6} parent=5 // pred_check_branch
      %943 = sbr.rel (%p941) target = $region52
    $region51: #{pair_stack_forward.6} parent=5 // pred_region
      %s944 = ssub.s32 %s12, 2
      // Predicated region
      $region53: #{pair_stack_forward.6} parent=51 // pred_check
        %p945 = pneg %p188
      $region54: #{pair_stack_forward.6} parent=51 // pred_check_branch
        %947 = sbr.rel (%p945) target = $region56
      $region55: #{pair_stack_forward.6} parent=51 // pred_region
        %p948 = scmp.lt.s32.totalorder %s23, 0
        %s949 = scalar_select %p948, %s23, 0
        %p950 = scmp.lt.s32.totalorder %s24, 31
        %s951 = scalar_select %p950, %s24, 31
        %s952 = smul.addr %s951, 4
        %s953 = smul.addr %s949, 128
        %s954 = sadd.s32 %s952, %s953
        %s955 = smul.addr %s954, 8
        %s956 = scalar_lea.vmem %s6, %s955
      $region56: #{pair_stack_forward.6} parent=51 // pred_fallthru
        _
    $region52: #{pair_stack_forward.6} parent=5 // pred_fallthru
      _
  $region6: #{pair_stack_forward.6} parent=0 // loop_footer
    %s16 = sadd.s32 1, %s12
  $region7: #{pair_stack_forward.6} parent=0 // loop_footer_branch
    %11 = sbr.rel target = $region3
  $region8: #{pair_stack_forward.6} parent=0 // loop_exit
    _

// kernel: pair_stack_forward.7
$region0: #{pair_stack_forward.7}
  #allocation0 [shape = 'u32[]', space=smem, size = 0x4, offset = 0x4, fixed_abs, tag = 'smem constant byte address 0x4 - core index']
  #allocation1 [shape = 'u32[144,128]{1,0:T(1,128)}', space=vmem, size = 0x12000, scoped, tag = 'internal scratch']
  %s0 = inlined_call_operand.vmem [shape: f32[1,32,32,32], index: 0, kind: input, shape index: {}]
  %s1 = inlined_call_operand.vmem [shape: bf16[32,128], index: 1, kind: input, shape index: {}]
  %s2 = inlined_call_operand.vmem [shape: bf16[2,16,32], index: 2, kind: input, shape index: {}]
  %s3 = inlined_call_operand.vmem [shape: f32[1,2,32,32], index: 3, kind: input, shape index: {}]
  %s4 = inlined_call_operand.vmem [shape: f32[1,32,32,32], index: 4, kind: output, shape index: {}]
  %s5 = sld [smem:[#allocation0]]
  $region49: #{pair_stack_forward.7} parent=0
    _
  %s7 = ssub.s32 1, %s5
  %s8 = scalar_select 0, %s7, %s5
  loop: start=0, step=1, limit=34
  $region2: #{pair_stack_forward.7} parent=0 // loop_pre_header
    _
  $region3: #{pair_stack_forward.7} parent=0 // loop_header
    %s10 = sphi 0, %s14
    %p11 = scmp.ge.s32.totalorder %s10, 34
    %s17 = sphi 0, %s29
    %s18 = sphi 0, %s25
    %s19 = sphi 0, %s17
    %s20 = sphi 0, %s18
    %s21 = sphi 0, %s19
    %s22 = sphi 0, %s20
    %s34 = sphi 0, %s36
    %s37 = sphi 0, %s34
    %s38 = sphi 0, %s37
    %s54 = sphi 0, %s38
    %s58 = sphi 0, %s58
    %s60 = sphi 0, %s58
    %s61 = sphi 0, %s60
    %s75 = sphi 0, %s61
    %s79 = sphi 0, %s79
    %s81 = sphi 0, %s79
    %s82 = sphi 0, %s81
    %s96 = sphi 0, %s82
    %s102 = sphi 0, %s104
    %s105 = sphi 0, %s102
    %s106 = sphi 0, %s105
    %s122 = sphi 0, %s106
    %s130 = sphi 0, %s132
    %s133 = sphi 0, %s130
    %s134 = sphi 0, %s133
    %s150 = sphi 0, %s134
  $region4: #{pair_stack_forward.7} parent=0 // loop_header_branch
    %13 = sbr.rel (%p11) target = $region8
  $region5: #{pair_stack_forward.7} parent=0 // loop_body
    %s15 = ssub.s32 %s10, 1
    %s16 = ssub.s32 %s10, 2
    %s23 = sadd.s32 1, %s18
    %p24 = scmp.ge.s32.totalorder %s23, 32
    %s25 = scalar_select %p24, 0, %s23
    %s26 = sadd.s32 1, %s17
    %s27 = scalar_select %p24, %s26, %s17
    %p28 = scmp.ge.s32.totalorder %s27, 1
    %s29 = scalar_select %p28, 0, %s27
    %s30 = ssub.s32 %s17, %s29
    %s31 = ssub.s32 %s18, %s25
    %s32 = sor.u32 %s30, %s31
    %p33 = scmp.eq.s32.totalorder %s32, 0
    %s35 = sadd.s32 %s34, 1
    %s36 = scalar_select %p33, %s34, %s35
    %p39 = pneg %p33
    %p40 = scmp.eq.s32.totalorder %s10, 31
    %p41 = por %p39, %p40
    %p42 = scmp.ne.s32.totalorder %s34, %s37
    %p43 = scmp.eq.s32.totalorder %s10, 0
    %p44 = por %p42, %p43
    %p45 = scmp.ne.s32.totalorder %s34, %s37
    %p46 = scmp.eq.s32.totalorder %s15, 31
    %p47 = por %p45, %p46
    %p48 = scmp.ne.s32.totalorder %s37, %s38
    %p49 = scmp.eq.s32.totalorder %s15, 0
    %p50 = por %p48, %p49
    %p51 = scmp.ne.s32.totalorder %s37, %s38
    %p52 = scmp.eq.s32.totalorder %s16, 31
    %p53 = por %p51, %p52
    %p55 = scmp.ne.s32.totalorder %s38, %s54
    %p56 = scmp.eq.s32.totalorder %s16, 0
    %p57 = por %p55, %p56
    %s59 = sadd.s32 %s58, 1
    %p62 = scmp.eq.s32.totalorder %s10, 31
    %p63 = scmp.ne.s32.totalorder %s58, %s60
    %p64 = scmp.eq.s32.totalorder %s10, 0
    %p65 = por %p63, %p64
    %p66 = scmp.ne.s32.totalorder %s58, %s60
    %p67 = scmp.eq.s32.totalorder %s15, 31
    %p68 = por %p66, %p67
    %p69 = scmp.ne.s32.totalorder %s60, %s61
    %p70 = scmp.eq.s32.totalorder %s15, 0
    %p71 = por %p69, %p70
    %p72 = scmp.ne.s32.totalorder %s60, %s61
    %p73 = scmp.eq.s32.totalorder %s16, 31
    %p74 = por %p72, %p73
    %p76 = scmp.ne.s32.totalorder %s61, %s75
    %p77 = scmp.eq.s32.totalorder %s16, 0
    %p78 = por %p76, %p77
    %s80 = sadd.s32 %s79, 1
    %p83 = scmp.eq.s32.totalorder %s10, 31
    %p84 = scmp.ne.s32.totalorder %s79, %s81
    %p85 = scmp.eq.s32.totalorder %s10, 0
    %p86 = por %p84, %p85
    %p87 = scmp.ne.s32.totalorder %s79, %s81
    %p88 = scmp.eq.s32.totalorder %s15, 31
    %p89 = por %p87, %p88
    %p90 = scmp.ne.s32.totalorder %s81, %s82
    %p91 = scmp.eq.s32.totalorder %s15, 0
    %p92 = por %p90, %p91
    %p93 = scmp.ne.s32.totalorder %s81, %s82
    %p94 = scmp.eq.s32.totalorder %s16, 31
    %p95 = por %p93, %p94
    %p97 = scmp.ne.s32.totalorder %s82, %s96
    %p98 = scmp.eq.s32.totalorder %s16, 0
    %p99 = por %p97, %p98
    %s100 = ssub.s32 %s17, %s29
    %p101 = scmp.eq.s32.totalorder %s100, 0
    %s103 = sadd.s32 %s102, 1
    %s104 = scalar_select %p101, %s102, %s103
    %p107 = pneg %p101
    %p108 = scmp.eq.s32.totalorder %s10, 31
    %p109 = por %p107, %p108
    %p110 = scmp.ne.s32.totalorder %s102, %s105
    %p111 = scmp.eq.s32.totalorder %s10, 0
    %p112 = por %p110, %p111
    %p113 = scmp.ne.s32.totalorder %s102, %s105
    %p114 = scmp.eq.s32.totalorder %s15, 31
    %p115 = por %p113, %p114
    %p116 = scmp.ne.s32.totalorder %s105, %s106
    %p117 = scmp.eq.s32.totalorder %s15, 0
    %p118 = por %p116, %p117
    %p119 = scmp.ne.s32.totalorder %s105, %s106
    %p120 = scmp.eq.s32.totalorder %s16, 31
    %p121 = por %p119, %p120
    %p123 = scmp.ne.s32.totalorder %s106, %s122
    %p124 = scmp.eq.s32.totalorder %s16, 0
    %p125 = por %p123, %p124
    %s126 = ssub.s32 %s17, %s29
    %s127 = ssub.s32 %s18, %s25
    %s128 = sor.u32 %s126, %s127
    %p129 = scmp.eq.s32.totalorder %s128, 0
    %s131 = sadd.s32 %s130, 1
    %s132 = scalar_select %p129, %s130, %s131
    %p135 = pneg %p129
    %p136 = scmp.eq.s32.totalorder %s10, 31
    %p137 = por %p135, %p136
    %p138 = scmp.ne.s32.totalorder %s130, %s133
    %p139 = scmp.eq.s32.totalorder %s10, 0
    %p140 = por %p138, %p139
    %p141 = scmp.ne.s32.totalorder %s130, %s133
    %p142 = scmp.eq.s32.totalorder %s15, 31
    %p143 = por %p141, %p142
    %p144 = scmp.ne.s32.totalorder %s133, %s134
    %p145 = scmp.eq.s32.totalorder %s15, 0
    %p146 = por %p144, %p145
    %p147 = scmp.ne.s32.totalorder %s133, %s134
    %p148 = scmp.eq.s32.totalorder %s16, 31
    %p149 = por %p147, %p148
    %p151 = scmp.ne.s32.totalorder %s134, %s150
    %p152 = scmp.eq.s32.totalorder %s16, 0
    %p153 = por %p151, %p152
    %p154 = scmp.le.s32.totalorder 1, %s10
    %p155 = scmp.lt.s32.totalorder %s10, 33
    %p156 = pnand %p154, %p155
    %p157 = pneg %p156
    // Predicated region
    $region9: #{pair_stack_forward.7} parent=5 // pred_check
      _
    $region10: #{pair_stack_forward.7} parent=5 // pred_check_branch
      %159 = sbr.rel (%p156) target = $region12
    $region11: #{pair_stack_forward.7} parent=5 // pred_region
      %s160 = ssub.s32 %s10, 1
      // Predicated region
      $region13: #{pair_stack_forward.7} parent=11 // pred_check
        %p161 = pneg %p71
      $region14: #{pair_stack_forward.7} parent=11 // pred_check_branch
        %163 = sbr.rel (%p161) target = $region16
      $region15: #{pair_stack_forward.7} parent=11 // pred_region
        _
      $region16: #{pair_stack_forward.7} parent=11 // pred_fallthru
        _
      // Predicated region
      $region17: #{pair_stack_forward.7} parent=11 // pred_check
        %p164 = pneg %p92
      $region18: #{pair_stack_forward.7} parent=11 // pred_check_branch
        %166 = sbr.rel (%p164) target = $region20
      $region19: #{pair_stack_forward.7} parent=11 // pred_region
        _
      $region20: #{pair_stack_forward.7} parent=11 // pred_fallthru
        _
      // Predicated region
      $region21: #{pair_stack_forward.7} parent=11 // pred_check
        %p167 = pneg %p118
      $region22: #{pair_stack_forward.7} parent=11 // pred_check_branch
        %169 = sbr.rel (%p167) target = $region24
      $region23: #{pair_stack_forward.7} parent=11 // pred_region
        %p170 = scmp.lt.s32.totalorder %s19, 0
        %s171 = scalar_select %p170, %s19, 0
        %s172 = smul.addr %s171, 8
        %s173 = smul.addr %s172, 8
        %s174 = scalar_lea.vmem %s3, %s173
      $region24: #{pair_stack_forward.7} parent=11 // pred_fallthru
        _
    $region12: #{pair_stack_forward.7} parent=5 // pred_fallthru
      _
    %p175 = scmp.lt.s32.totalorder %s10, 32
    // Predicated region
    $region25: #{pair_stack_forward.7} parent=5 // pred_check
      %p176 = pneg %p175
    $region26: #{pair_stack_forward.7} parent=5 // pred_check_branch
      %178 = sbr.rel (%p176) target = $region28
    $region27: #{pair_stack_forward.7} parent=5 // pred_region
      // Predicated region
      $region29: #{pair_stack_forward.7} parent=27 // pred_check
        %p179 = pneg %p44
      $region30: #{pair_stack_forward.7} parent=27 // pred_check_branch
        %181 = sbr.rel (%p179) target = $region32
      $region31: #{pair_stack_forward.7} parent=27 // pred_region
        %p182 = scmp.lt.s32.totalorder %s17, 0
        %s183 = scalar_select %p182, %s17, 0
        %p184 = scmp.lt.s32.totalorder %s18, 31
        %s185 = scalar_select %p184, %s18, 31
        %s186 = smul.addr %s185, 4
        %s187 = smul.addr %s183, 128
        %s188 = sadd.s32 %s186, %s187
        %s189 = smul.addr %s188, 8
        %s190 = scalar_lea.vmem %s0, %s189
      $region32: #{pair_stack_forward.7} parent=27 // pred_fallthru
        _
    $region28: #{pair_stack_forward.7} parent=5 // pred_fallthru
      _
    %p191 = scmp.le.s32.totalorder 1, %s10
    %p192 = scmp.lt.s32.totalorder %s10, 33
    %p193 = pnand %p191, %p192
    %p194 = pneg %p193
    // Predicated region
    $region33: #{pair_stack_forward.7} parent=5 // pred_check
      _
    $region34: #{pair_stack_forward.7} parent=5 // pred_check_branch
      %196 = sbr.rel (%p193) target = $region36
    $region35: #{pair_stack_forward.7} parent=5 // pred_region
      %s197 = ssub.s32 %s10, 1
      %p198 = scmp.lt.s32.totalorder %s19, 0
      %s199 = scalar_select %p198, %s19, 0
      %p200 = scmp.lt.s32.totalorder %s20, 31
      %s201 = scalar_select %p200, %s20, 31
      %s202 = smul.addr %s201, 4
      %s203 = smul.addr %s199, 128
      %s204 = sadd.s32 %s202, %s203
      %s205 = smul.addr %s204, 8
      %s206 = scalar_lea.vmem %s0, %s205
      %p207 = pneg %p50
      %p208 = pneg %p47
      %p209 = pneg %p71
      %p210 = pneg %p68
      %p211 = pneg %p92
      %p212 = pneg %p89
      %p213 = scmp.lt.s32.totalorder %s19, 0
      %s214 = scalar_select %p213, %s19, 0
      %s215 = smul.addr %s214, 8
      %s216 = smul.addr %s215, 8
      %s217 = scalar_lea.vmem %s3, %s216
      %p218 = pneg %p118
      %p219 = pneg %p115
      %p220 = pneg %p146
      %p221 = pneg %p143
      %p222 = scmp.lt.s32.totalorder %s19, 0
      %s223 = scalar_select %p222, %s19, 0
      %p224 = scmp.lt.s32.totalorder %s20, 31
      %s225 = scalar_select %p224, %s20, 31
      %s226 = smul.addr %s225, 4
      %s227 = smul.addr %s223, 128
      %s228 = sadd.s32 %s226, %s227
      %s229 = smul.addr %s228, 8
      %s230 = scalar_lea.vmem %s4, %s229
      %p231 = scmp.lt.s32.totalorder %s19, 0
      %s232 = scalar_select %p231, %s19, 0
      %p233 = scmp.lt.s32.totalorder %s20, 31
      %s234 = scalar_select %p233, %s20, 31
      %s235 = smul.addr %s234, 4
      %s236 = smul.addr %s232, 128
      %s237 = sadd.s32 %s235, %s236
      %s238 = smul.addr %s237, 8
      %s239 = scalar_lea.vmem %s0, %s238
      %p240 = scmp.lt.s32.totalorder %s19, 0
      %s241 = scalar_select %p240, %s19, 0
      %s242 = smul.addr %s241, 8
      %s243 = smul.addr %s242, 8
      %s244 = scalar_lea.vmem %s3, %s243
      %p245 = scmp.lt.s32.totalorder %s19, 0
      %s246 = scalar_select %p245, %s19, 0
      %p247 = scmp.lt.s32.totalorder %s20, 31
      %s248 = scalar_select %p247, %s20, 31
      %s249 = smul.addr %s248, 4
      %s250 = smul.addr %s246, 128
      %s251 = sadd.s32 %s249, %s250
      %s252 = smul.addr %s251, 8
      %s253 = scalar_lea.vmem %s4, %s252
      %v255 = vld [vmem:[%s239] sm:$0xff]
      %v256 = vld [vmem:[%s239 + $0x8] sm:$0xff]
      %v257 = vld [vmem:[%s239 + $0x10] sm:$0xff]
      %v258 = vld [vmem:[%s239 + $0x18] sm:$0xff]
      %v259 = vpack.c.bf16 %v256, %v255
      %v260 = vpack.c.bf16 %v258, %v257
      %v261 = vld [vmem:[%s1] sm:$0xf]
      %v262 = vld [vmem:[%s1 + $0x4] sm:$0xf]
      %v263 = vld [vmem:[%s1 + $0x8] sm:$0xf]
      %v264 = vld [vmem:[%s1 + $0xc] sm:$0xf]
      %v269 = vunpack.c.l.b16 %v261
      %v270 = vunpack.c.l.b16 %v262
      %v271 = vunpack.c.l.b16 %v263
      %v272 = vunpack.c.l.b16 %v264
      %v273 = vpack.c.b16 %v270, %v269
      %v274 = vpack.c.b16 %v272, %v271
      %vm277 = vcmask 261120
      %v279 = vsel %vm277, %v259, 0
      %v282 = vsel %vm277, %v260, 0
      %284 = vmatprep.subr.bf16.mxu0 0
      %285 = vmatpush1.bf16.msra.mxu0 %v273
      %286 = vmatprep.subr.bf16.mxu0 0
      %287 = vmatpush1.bf16.msra.mxu0 %v274
      %288 = vmatprep.subr.bf16.mxu0 0
      %289 = vmatpush1.bf16.msra.mxu0 0
      %290 = vmatprep.subr.bf16.mxu0 0
      %291 = vmatpush1.bf16.msra.mxu0 0
      %292 = vmatprep.subr.bf16.mxu0 0
      %293 = vmatpush1.bf16.msra.mxu0 0
      %294 = vmatprep.subr.bf16.mxu0 0
      %295 = vmatpush1.bf16.msra.mxu0 0
      %296 = vmatprep.subr.bf16.mxu0 0
      %297 = vmatpush1.bf16.msra.mxu0 0
      %298 = vmatprep.subr.bf16.mxu0 0
      %299 = vmatpush1.bf16.msra.mxu0 0
      %300 = vmatprep.subr.bf16.mxu0 0
      %301 = vmatpush1.bf16.msra.mxu0 0
      %302 = vmatprep.subr.bf16.mxu0 0
      %303 = vmatpush1.bf16.msra.mxu0 0
      %304 = vmatprep.subr.bf16.mxu0 0
      %305 = vmatpush1.bf16.msra.mxu0 0
      %306 = vmatprep.subr.bf16.mxu0 0
      %307 = vmatpush1.bf16.msra.mxu0 0
      %308 = vmatprep.subr.bf16.mxu0 0
      %309 = vmatpush1.bf16.msra.mxu0 0
      %310 = vmatprep.subr.bf16.mxu0 0
      %311 = vmatpush1.bf16.msra.mxu0 0
      %312 = vmatprep.subr.bf16.mxu0 0
      %313 = vmatpush1.bf16.msra.mxu0 0
      %314 = vmatprep.subr.bf16.mxu0 0
      %315 = vmatpush1.bf16.msra.mxu0 0
      %316 = vmatprep.mubr.bf16.mxu0 0
      %317 = vmatmul.mubr.bf16.gmra.mrb[0].mxu0 %v279
      %v318 = vpop.f32.mrb[0].mxu0
      %v319 = vadd.f32 0.0, %v318
      %v320 = vpop.f32.mrb[0].mxu0
      %v321 = vpop.f32.mrb[0].mxu0
      %v322 = vadd.f32 0.0, %v321
      %v323 = vpop.f32.mrb[0].mxu0
      %324 = vmatprep.mubr.bf16.mxu0 0
      %325 = vmatmul.mubr.bf16.gmra.mrb[0].mxu0 %v282
      %v326 = vpop.f32.mrb[0].mxu0
      %v327 = vadd.f32 0.0, %v326
      %v328 = vpop.f32.mrb[0].mxu0
      %v329 = vpop.f32.mrb[0].mxu0
      %v330 = vadd.f32 0.0, %v329
      %v331 = vpop.f32.mrb[0].mxu0
      %332 = vdwg.mxu0
      %v333 = vxor.u32 %v319, 2147483648
      %v334 = vxor.u32 %v322, 2147483648
      %v335 = vxor.u32 %v327, 2147483648
      %v336 = vxor.u32 %v330, 2147483648
      %v337 = vmul.f32 %v333, 1.442695
      %v338 = vpow.pop %v337
      %v339 = vmul.f32 %v334, 1.442695
      %v340 = vpow.pop %v339
      %v341 = vmul.f32 %v335, 1.442695
      %v342 = vpow.pop %v341
      %v343 = vmul.f32 %v336, 1.442695
      %v344 = vpow.pop %v343
      %v345 = vadd.f32 %v338, 1.0
      %v346 = vadd.f32 %v340, 1.0
      %v347 = vadd.f32 %v342, 1.0
      %v348 = vadd.f32 %v344, 1.0
      %v349 = vrcp.pop %v345
      %v350 = vmul.f32 1.0, %v349
      %v351 = vrcp.pop %v346
      %v352 = vmul.f32 1.0, %v351
      %v353 = vrcp.pop %v347
      %v354 = vmul.f32 1.0, %v353
      %v355 = vrcp.pop %v348
      %v356 = vmul.f32 1.0, %v355
      %v357 = vpack.c.bf16 %v322, %v319
      %v358 = vpack.c.bf16 %v330, %v327
      %v359 = vld [vmem:[%s244] sm:$0xff]
      %v360 = vld [vmem:[%s244 + $0x8] sm:$0xff]
      %v361 = vld [vmem:[%s244 + $0x10] sm:$0xff]
      %v362 = vld [vmem:[%s244 + $0x18] sm:$0xff]
      %365 = vrot.lane.b32.xlu0 %v357, 96
      %v366 = vpop.permute.xlu0 %365
      %367 = vrot.lane.b32.xlu0 %v358, 96
      %v368 = vpop.permute.xlu0 %367
      %vm369 = vcmask 130048
      %v371 = vsel %vm369, %v357, 0
      %v374 = vsel %vm369, %v358, 0
      %v377 = vsel %vm369, %v366, 0
      %v380 = vsel %vm369, %v368, 0
      %382 = vmatprep.subr.bf16.mxu0 0
      %383 = vmatpush1.bf16.xpose.msra.mxu0 %v377
      %384 = vmatprep.subr.bf16.mxu0 0
      %385 = vmatpush1.bf16.xpose.msra.mxu0 %v380
      %386 = vmatprep.subr.bf16.mxu0 0
      %387 = vmatpush1.bf16.xpose.msra.mxu0 0
      %388 = vmatprep.subr.bf16.mxu0 0
      %389 = vmatpush1.bf16.xpose.msra.mxu0 0
      %390 = vmatprep.subr.bf16.mxu0 0
      %391 = vmatpush1.bf16.xpose.msra.mxu0 0
      %392 = vmatprep.subr.bf16.mxu0 0
      %393 = vmatpush1.bf16.xpose.msra.mxu0 0
      %394 = vmatprep.subr.bf16.mxu0 0
      %395 = vmatpush1.bf16.xpose.msra.mxu0 0
      %396 = vmatprep.subr.bf16.mxu0 0
      %397 = vmatpush1.bf16.xpose.msra.mxu0 0
      %398 = vmatprep.subr.bf16.mxu0 0
      %399 = vmatpush1.bf16.xpose.msra.mxu0 0
      %400 = vmatprep.subr.bf16.mxu0 0
      %401 = vmatpush1.bf16.xpose.msra.mxu0 0
      %402 = vmatprep.subr.bf16.mxu0 0
      %403 = vmatpush1.bf16.xpose.msra.mxu0 0
      %404 = vmatprep.subr.bf16.mxu0 0
      %405 = vmatpush1.bf16.xpose.msra.mxu0 0
      %406 = vmatprep.subr.bf16.mxu0 0
      %407 = vmatpush1.bf16.xpose.msra.mxu0 0
      %408 = vmatprep.subr.bf16.mxu0 0
      %409 = vmatpush1.bf16.xpose.msra.mxu0 0
      %410 = vmatprep.subr.bf16.mxu0 0
      %411 = vmatpush1.bf16.xpose.msra.mxu0 0
      %412 = vmatprep.subr.bf16.mxu0 0
      %413 = vmatpush1.bf16.xpose.msra.mxu0 0
      %414 = vmatprep.mubr.bf16.mxu0 0
      %415 = vmatmul.mubr.bf16.gmra.mrb[0].mxu0 %v371
      %v416 = vpop.f32.mrb[0].mxu0
      %v417 = vadd.f32 %v359, %v416
      %v418 = vpop.f32.mrb[0].mxu0
      %v419 = vpop.f32.mrb[0].mxu0
      %v420 = vadd.f32 %v360, %v419
      %v421 = vpop.f32.mrb[0].mxu0
      %422 = vmatprep.mubr.bf16.mxu0 0
      %423 = vmatmul.mubr.bf16.gmra.mrb[0].mxu0 %v374
      %v424 = vpop.f32.mrb[0].mxu0
      %v425 = vadd.f32 %v361, %v424
      %v426 = vpop.f32.mrb[0].mxu0
      %v427 = vpop.f32.mrb[0].mxu0
      %v428 = vadd.f32 %v362, %v427
      %v429 = vpop.f32.mrb[0].mxu0
      %430 = vdwg.mxu0
      %v431 = vsel %vm277, %v417, -inf
      %432 = vmax.xlane.f32.xlu0 %v431
      %v433 = vpop.xlane.xlu0 %432
      %v434 = vsel %vm277, %v420, -inf
      %435 = vmax.xlane.f32.xlu0 %v434
      %v436 = vpop.xlane.xlu0 %435
      %v437 = vsel %vm277, %v425, -inf
      %438 = vmax.xlane.f32.xlu0 %v437
      %v439 = vpop.xlane.xlu0 %438
      %v440 = vsel %vm277, %v428, -inf
      %441 = vmax.xlane.f32.xlu0 %v440
      %v442 = vpop.xlane.xlu0 %441
      %v443 = vsub.f32 %v417, %v433
      %v444 = vsub.f32 %v420, %v436
      %v445 = vsub.f32 %v425, %v439
      %v446 = vsub.f32 %v428, %v442
      %v447 = vmul.f32 %v443, 1.442695
      %v448 = vpow.pop %v447
      %v449 = vmul.f32 %v444, 1.442695
      %v450 = vpow.pop %v449
      %v451 = vmul.f32 %v445, 1.442695
      %v452 = vpow.pop %v451
      %v453 = vmul.f32 %v446, 1.442695
      %v454 = vpow.pop %v453
      %v455 = vsel %vm277, %v448, 0.0
      %456 = vadd.xlane.f32.xlu0 %v455
      %v457 = vpop.xlane.xlu0 %456
      %v458 = vsel %vm277, %v450, 0.0
      %459 = vadd.xlane.f32.xlu0 %v458
      %v460 = vpop.xlane.xlu0 %459
      %v461 = vsel %vm277, %v452, 0.0
      %462 = vadd.xlane.f32.xlu0 %v461
      %v463 = vpop.xlane.xlu0 %462
      %v464 = vsel %vm277, %v454, 0.0
      %465 = vadd.xlane.f32.xlu0 %v464
      %v466 = vpop.xlane.xlu0 %465
      %v467 = vrcp.pop %v457
      %v468 = vrcp.pop %v460
      %v469 = vrcp.pop %v463
      %v470 = vrcp.pop %v466
      %v471 = vmul.f32 %v448, %v467
      %v472 = vmul.f32 %v450, %v468
      %v473 = vmul.f32 %v452, %v469
      %v474 = vmul.f32 %v454, %v470
      %v475 = vpack.c.bf16 %v472, %v471
      %v476 = vpack.c.bf16 %v474, %v473
      %477 = vrot.lane.b32.xlu0 %v357, 64
      %v478 = vpop.permute.xlu0 %477
      %479 = vrot.lane.b32.xlu0 %v358, 64
      %v480 = vpop.permute.xlu0 %479
      %v484 = vsel %vm277, %v475, 0
      %v487 = vsel %vm277, %v476, 0
      %489 = vmatprep.subr.bf16.mxu0 0
      %490 = vmatpush1.bf16.msra.mxu0 %v478
      %491 = vmatprep.subr.bf16.mxu0 0
      %492 = vmatpush1.bf16.msra.mxu0 %v480
      %493 = vmatprep.subr.bf16.mxu0 0
      %494 = vmatpush1.bf16.msra.mxu0 0
      %495 = vmatprep.subr.bf16.mxu0 0
      %496 = vmatpush1.bf16.msra.mxu0 0
      %497 = vmatprep.subr.bf16.mxu0 0
      %498 = vmatpush1.bf16.msra.mxu0 0
      %499 = vmatprep.subr.bf16.mxu0 0
      %500 = vmatpush1.bf16.msra.mxu0 0
      %501 = vmatprep.subr.bf16.mxu0 0
      %502 = vmatpush1.bf16.msra.mxu0 0
      %503 = vmatprep.subr.bf16.mxu0 0
      %504 = vmatpush1.bf16.msra.mxu0 0
      %505 = vmatprep.subr.bf16.mxu0 0
      %506 = vmatpush1.bf16.msra.mxu0 0
      %507 = vmatprep.subr.bf16.mxu0 0
      %508 = vmatpush1.bf16.msra.mxu0 0
      %509 = vmatprep.subr.bf16.mxu0 0
      %510 = vmatpush1.bf16.msra.mxu0 0
      %511 = vmatprep.subr.bf16.mxu0 0
      %512 = vmatpush1.bf16.msra.mxu0 0
      %513 = vmatprep.subr.bf16.mxu0 0
      %514 = vmatpush1.bf16.msra.mxu0 0
      %515 = vmatprep.subr.bf16.mxu0 0
      %516 = vmatpush1.bf16.msra.mxu0 0
      %517 = vmatprep.subr.bf16.mxu0 0
      %518 = vmatpush1.bf16.msra.mxu0 0
      %519 = vmatprep.subr.bf16.mxu0 0
      %520 = vmatpush1.bf16.msra.mxu0 0
      %521 = vmatprep.mubr.bf16.mxu0 0
      %522 = vmatmul.mubr.bf16.gmra.mrb[0].mxu0 %v484
      %v523 = vpop.f32.mrb[0].mxu0
      %v524 = vadd.f32 0.0, %v523
      %v525 = vpop.f32.mrb[0].mxu0
      %v526 = vpop.f32.mrb[0].mxu0
      %v527 = vadd.f32 0.0, %v526
      %v528 = vpop.f32.mrb[0].mxu0
      %529 = vmatprep.mubr.bf16.mxu0 0
      %530 = vmatmul.mubr.bf16.gmra.mrb[0].mxu0 %v487
      %v531 = vpop.f32.mrb[0].mxu0
      %v532 = vadd.f32 0.0, %v531
      %v533 = vpop.f32.mrb[0].mxu0
      %v534 = vpop.f32.mrb[0].mxu0
      %v535 = vadd.f32 0.0, %v534
      %v536 = vpop.f32.mrb[0].mxu0
      %537 = vdwg.mxu0
      %v538 = vpack.c.bf16 %v527, %v524
      %v539 = vpack.c.bf16 %v535, %v532
      %v540 = vld [vmem:[%s2] sm:$0xf]
      %v541 = vld [vmem:[%s2 + $0x4] sm:$0xf]
      %s542 = scalar_lea.vmem %s244, 32
      %v543 = vld [vmem:[%s542] sm:$0xff]
      %v544 = vld [vmem:[%s542 + $0x8] sm:$0xff]
      %v545 = vld [vmem:[%s542 + $0x10] sm:$0xff]
      %v546 = vld [vmem:[%s542 + $0x18] sm:$0xff]
      %547 = vrot.lane.b32.xlu0 %v357, 112
      %v548 = vpop.permute.xlu0 %547
      %549 = vrot.lane.b32.xlu0 %v358, 112
      %v550 = vpop.permute.xlu0 %549
      %551 = vrot.lane.b32.xlu0 %v357, 80
      %v552 = vpop.permute.xlu0 %551
      %553 = vrot.lane.b32.xlu0 %v358, 80
      %v554 = vpop.permute.xlu0 %553
      %v556 = vsel %vm369, %v548, 0
      %v559 = vsel %vm369, %v550, 0
      %v562 = vsel %vm369, %v552, 0
      %v565 = vsel %vm369, %v554, 0
      %567 = vmatprep.subr.bf16.mxu0 0
      %568 = vmatpush1.bf16.xpose.msra.mxu0 %v562
      %569 = vmatprep.subr.bf16.mxu0 0
      %570 = vmatpush1.bf16.xpose.msra.mxu0 %v565
      %571 = vmatprep.subr.bf16.mxu0 0
      %572 = vmatpush1.bf16.xpose.msra.mxu0 0
      %573 = vmatprep.subr.bf16.mxu0 0
      %574 = vmatpush1.bf16.xpose.msra.mxu0 0
      %575 = vmatprep.subr.bf16.mxu0 0
      %576 = vmatpush1.bf16.xpose.msra.mxu0 0
      %577 = vmatprep.subr.bf16.mxu0 0
      %578 = vmatpush1.bf16.xpose.msra.mxu0 0
      %579 = vmatprep.subr.bf16.mxu0 0
      %580 = vmatpush1.bf16.xpose.msra.mxu0 0
      %581 = vmatprep.subr.bf16.mxu0 0
      %582 = vmatpush1.bf16.xpose.msra.mxu0 0
      %583 = vmatprep.subr.bf16.mxu0 0
      %584 = vmatpush1.bf16.xpose.msra.mxu0 0
      %585 = vmatprep.subr.bf16.mxu0 0
      %586 = vmatpush1.bf16.xpose.msra.mxu0 0
      %587 = vmatprep.subr.bf16.mxu0 0
      %588 = vmatpush1.bf16.xpose.msra.mxu0 0
      %589 = vmatprep.subr.bf16.mxu0 0
      %590 = vmatpush1.bf16.xpose.msra.mxu0 0
      %591 = vmatprep.subr.bf16.mxu0 0
      %592 = vmatpush1.bf16.xpose.msra.mxu0 0
      %593 = vmatprep.subr.bf16.mxu0 0
      %594 = vmatpush1.bf16.xpose.msra.mxu0 0
      %595 = vmatprep.subr.bf16.mxu0 0
      %596 = vmatpush1.bf16.xpose.msra.mxu0 0
      %597 = vmatprep.subr.bf16.mxu0 0
      %598 = vmatpush1.bf16.xpose.msra.mxu0 0
      %599 = vmatprep.mubr.bf16.mxu0 0
      %600 = vmatmul.mubr.bf16.gmra.mrb[0].mxu0 %v556
      %v601 = vpop.f32.mrb[0].mxu0
      %v602 = vadd.f32 %v543, %v601
      %v603 = vpop.f32.mrb[0].mxu0
      %v604 = vpop.f32.mrb[0].mxu0
      %v605 = vadd.f32 %v544, %v604
      %v606 = vpop.f32.mrb[0].mxu0
      %607 = vmatprep.mubr.bf16.mxu0 0
      %608 = vmatmul.mubr.bf16.gmra.mrb[0].mxu0 %v559
      %v609 = vpop.f32.mrb[0].mxu0
      %v610 = vadd.f32 %v545, %v609
      %v611 = vpop.f32.mrb[0].mxu0
      %v612 = vpop.f32.mrb[0].mxu0
      %v613 = vadd.f32 %v546, %v612
      %v614 = vpop.f32.mrb[0].mxu0
      %615 = vdwg.mxu0
      %v616 = vsel %vm277, %v602, -inf
      %617 = vmax.xlane.f32.xlu0 %v616
      %v618 = vpop.xlane.xlu0 %617
      %v619 = vsel %vm277, %v605, -inf
      %620 = vmax.xlane.f32.xlu0 %v619
      %v621 = vpop.xlane.xlu0 %620
      %v622 = vsel %vm277, %v610, -inf
      %623 = vmax.xlane.f32.xlu0 %v622
      %v624 = vpop.xlane.xlu0 %623
      %v625 = vsel %vm277, %v613, -inf
      %626 = vmax.xlane.f32.xlu0 %v625
      %v627 = vpop.xlane.xlu0 %626
      %v628 = vsub.f32 %v602, %v618
      %v629 = vsub.f32 %v605, %v621
      %v630 = vsub.f32 %v610, %v624
      %v631 = vsub.f32 %v613, %v627
      %v632 = vmul.f32 %v628, 1.442695
      %v633 = vpow.pop %v632
      %v634 = vmul.f32 %v629, 1.442695
      %v635 = vpow.pop %v634
      %v636 = vmul.f32 %v630, 1.442695
      %v637 = vpow.pop %v636
      %v638 = vmul.f32 %v631, 1.442695
      %v639 = vpow.pop %v638
      %v640 = vsel %vm277, %v633, 0.0
      %641 = vadd.xlane.f32.xlu0 %v640
      %v642 = vpop.xlane.xlu0 %641
      %v643 = vsel %vm277, %v635, 0.0
      %644 = vadd.xlane.f32.xlu0 %v643
      %v645 = vpop.xlane.xlu0 %644
      %v646 = vsel %vm277, %v637, 0.0
      %647 = vadd.xlane.f32.xlu0 %v646
      %v648 = vpop.xlane.xlu0 %647
      %v649 = vsel %vm277, %v639, 0.0
      %650 = vadd.xlane.f32.xlu0 %v649
      %v651 = vpop.xlane.xlu0 %650
      %v652 = vrcp.pop %v642
      %v653 = vrcp.pop %v645
      %v654 = vrcp.pop %v648
      %v655 = vrcp.pop %v651
      %v656 = vmul.f32 %v633, %v652
      %v657 = vmul.f32 %v635, %v653
      %v658 = vmul.f32 %v637, %v654
      %v659 = vmul.f32 %v639, %v655
      %v660 = vpack.c.bf16 %v657, %v656
      %v661 = vpack.c.bf16 %v659, %v658
      %662 = vrot.lane.b32.xlu0 %v357, 48
      %v663 = vpop.permute.xlu0 %662
      %664 = vrot.lane.b32.xlu0 %v358, 48
      %v665 = vpop.permute.xlu0 %664
      %v669 = vsel %vm277, %v660, 0
      %v672 = vsel %vm277, %v661, 0
      %674 = vmatprep.subr.bf16.mxu0 0
      %675 = vmatpush1.bf16.msra.mxu0 %v663
      %676 = vmatprep.subr.bf16.mxu0 0
      %677 = vmatpush1.bf16.msra.mxu0 %v665
      %678 = vmatprep.subr.bf16.mxu0 0
      %679 = vmatpush1.bf16.msra.mxu0 0
      %680 = vmatprep.subr.bf16.mxu0 0
      %681 = vmatpush1.bf16.msra.mxu0 0
      %682 = vmatprep.subr.bf16.mxu0 0
      %683 = vmatpush1.bf16.msra.mxu0 0
      %684 = vmatprep.subr.bf16.mxu0 0
      %685 = vmatpush1.bf16.msra.mxu0 0
      %686 = vmatprep.subr.bf16.mxu0 0
      %687 = vmatpush1.bf16.msra.mxu0 0
      %688 = vmatprep.subr.bf16.mxu0 0
      %689 = vmatpush1.bf16.msra.mxu0 0
      %690 = vmatprep.subr.bf16.mxu0 0
      %691 = vmatpush1.bf16.msra.mxu0 0
      %692 = vmatprep.subr.bf16.mxu0 0
      %693 = vmatpush1.bf16.msra.mxu0 0
      %694 = vmatprep.subr.bf16.mxu0 0
      %695 = vmatpush1.bf16.msra.mxu0 0
      %696 = vmatprep.subr.bf16.mxu0 0
      %697 = vmatpush1.bf16.msra.mxu0 0
      %698 = vmatprep.subr.bf16.mxu0 0
      %699 = vmatpush1.bf16.msra.mxu0 0
      %700 = vmatprep.subr.bf16.mxu0 0
      %701 = vmatpush1.bf16.msra.mxu0 0
      %702 = vmatprep.subr.bf16.mxu0 0
      %703 = vmatpush1.bf16.msra.mxu0 0
      %704 = vmatprep.subr.bf16.mxu0 0
      %705 = vmatpush1.bf16.msra.mxu0 0
      %706 = vmatprep.mubr.bf16.mxu0 0
      %707 = vmatmul.mubr.bf16.gmra.mrb[0].mxu0 %v669
      %v708 = vpop.f32.mrb[0].mxu0
      %v709 = vadd.f32 0.0, %v708
      %v710 = vpop.f32.mrb[0].mxu0
      %v711 = vpop.f32.mrb[0].mxu0
      %v712 = vadd.f32 0.0, %v711
      %v713 = vpop.f32.mrb[0].mxu0
      %714 = vmatprep.mubr.bf16.mxu0 0
      %715 = vmatmul.mubr.bf16.gmra.mrb[0].mxu0 %v672
      %v716 = vpop.f32.mrb[0].mxu0
      %v717 = vadd.f32 0.0, %v716
      %v718 = vpop.f32.mrb[0].mxu0
      %v719 = vpop.f32.mrb[0].mxu0
      %v720 = vadd.f32 0.0, %v719
      %v721 = vpop.f32.mrb[0].mxu0
      %722 = vdwg.mxu0
      %v723 = vpack.c.bf16 %v712, %v709
      %v724 = vpack.c.bf16 %v720, %v717
      %s725 = scalar_lea.vmem %s2, 8
      %v726 = vld [vmem:[%s725] sm:$0xf]
      %v727 = vld [vmem:[%s725 + $0x4] sm:$0xf]
      %v730 = vunpack.c.l.b16 %v726
      %v731 = vunpack.c.l.b16 %v727
      %v732 = vpack.c.b16 %v731, %v730
      %v735 = vsel %vm369, %v723, 0
      %v738 = vsel %vm369, %v724, 0
      %740 = vmatprep.subr.bf16.mxu0 0
      %741 = vmatpush1.bf16.msra.mxu0 %v732
      %742 = vmatprep.subr.bf16.mxu0 0
      %743 = vmatpush1.bf16.msra.mxu0 0
      %744 = vmatprep.subr.bf16.mxu0 0
      %745 = vmatpush1.bf16.msra.mxu0 0
      %746 = vmatprep.subr.bf16.mxu0 0
      %747 = vmatpush1.bf16.msra.mxu0 0
      %748 = vmatprep.subr.bf16.mxu0 0
      %749 = vmatpush1.bf16.msra.mxu0 0
      %750 = vmatprep.subr.bf16.mxu0 0
      %751 = vmatpush1.bf16.msra.mxu0 0
      %752 = vmatprep.subr.bf16.mxu0 0
      %753 = vmatpush1.bf16.msra.mxu0 0
      %754 = vmatprep.subr.bf16.mxu0 0
      %755 = vmatpush1.bf16.msra.mxu0 0
      %756 = vmatprep.subr.bf16.mxu0 0
      %757 = vmatpush1.bf16.msra.mxu0 0
      %758 = vmatprep.subr.bf16.mxu0 0
      %759 = vmatpush1.bf16.msra.mxu0 0
      %760 = vmatprep.subr.bf16.mxu0 0
      %761 = vmatpush1.bf16.msra.mxu0 0
      %762 = vmatprep.subr.bf16.mxu0 0
      %763 = vmatpush1.bf16.msra.mxu0 0
      %764 = vmatprep.subr.bf16.mxu0 0
      %765 = vmatpush1.bf16.msra.mxu0 0
      %766 = vmatprep.subr.bf16.mxu0 0
      %767 = vmatpush1.bf16.msra.mxu0 0
      %768 = vmatprep.subr.bf16.mxu0 0
      %769 = vmatpush1.bf16.msra.mxu0 0
      %770 = vmatprep.subr.bf16.mxu0 0
      %771 = vmatpush1.bf16.msra.mxu0 0
      %772 = vmatprep.mubr.bf16.mxu0 0
      %773 = vmatmul.mubr.bf16.gmra.mrb[0].mxu0 %v735
      %v774 = vpop.f32.mrb[0].mxu0
      %v775 = vadd.f32 0.0, %v774
      %v776 = vpop.f32.mrb[0].mxu0
      %v777 = vpop.f32.mrb[0].mxu0
      %v778 = vadd.f32 0.0, %v777
      %v779 = vpop.f32.mrb[0].mxu0
      %780 = vmatprep.mubr.bf16.mxu0 0
      %781 = vmatmul.mubr.bf16.gmra.mrb[0].mxu0 %v738
      %v782 = vpop.f32.mrb[0].mxu0
      %v783 = vadd.f32 0.0, %v782
      %v784 = vpop.f32.mrb[0].mxu0
      %v785 = vpop.f32.mrb[0].mxu0
      %v786 = vadd.f32 0.0, %v785
      %v787 = vpop.f32.mrb[0].mxu0
      %788 = vdwg.mxu0
      %v791 = vunpack.c.l.b16 %v540
      %v792 = vunpack.c.l.b16 %v541
      %v793 = vpack.c.b16 %v792, %v791
      %v796 = vsel %vm369, %v538, 0
      %v799 = vsel %vm369, %v539, 0
      %801 = vmatprep.subr.bf16.mxu0 0
      %802 = vmatpush1.bf16.msra.mxu0 %v793
      %803 = vmatprep.subr.bf16.mxu0 0
      %804 = vmatpush1.bf16.msra.mxu0 0
      %805 = vmatprep.subr.bf16.mxu0 0
      %806 = vmatpush1.bf16.msra.mxu0 0
      %807 = vmatprep.subr.bf16.mxu0 0
      %808 = vmatpush1.bf16.msra.mxu0 0
      %809 = vmatprep.subr.bf16.mxu0 0
      %810 = vmatpush1.bf16.msra.mxu0 0
      %811 = vmatprep.subr.bf16.mxu0 0
      %812 = vmatpush1.bf16.msra.mxu0 0
      %813 = vmatprep.subr.bf16.mxu0 0
      %814 = vmatpush1.bf16.msra.mxu0 0
      %815 = vmatprep.subr.bf16.mxu0 0
      %816 = vmatpush1.bf16.msra.mxu0 0
      %817 = vmatprep.subr.bf16.mxu0 0
      %818 = vmatpush1.bf16.msra.mxu0 0
      %819 = vmatprep.subr.bf16.mxu0 0
      %820 = vmatpush1.bf16.msra.mxu0 0
      %821 = vmatprep.subr.bf16.mxu0 0
      %822 = vmatpush1.bf16.msra.mxu0 0
      %823 = vmatprep.subr.bf16.mxu0 0
      %824 = vmatpush1.bf16.msra.mxu0 0
      %825 = vmatprep.subr.bf16.mxu0 0
      %826 = vmatpush1.bf16.msra.mxu0 0
      %827 = vmatprep.subr.bf16.mxu0 0
      %828 = vmatpush1.bf16.msra.mxu0 0
      %829 = vmatprep.subr.bf16.mxu0 0
      %830 = vmatpush1.bf16.msra.mxu0 0
      %831 = vmatprep.subr.bf16.mxu0 0
      %832 = vmatpush1.bf16.msra.mxu0 0
      %833 = vmatprep.mubr.bf16.mxu0 0
      %834 = vmatmul.mubr.bf16.gmra.mrb[0].mxu0 %v796
      %v835 = vpop.f32.mrb[0].mxu0
      %v836 = vadd.f32 %v775, %v835
      %v837 = vpop.f32.mrb[0].mxu0
      %v838 = vpop.f32.mrb[0].mxu0
      %v839 = vadd.f32 %v778, %v838
      %v840 = vpop.f32.mrb[0].mxu0
      %841 = vmatprep.mubr.bf16.mxu0 0
      %842 = vmatmul.mubr.bf16.gmra.mrb[0].mxu0 %v799
      %v843 = vpop.f32.mrb[0].mxu0
      %v844 = vadd.f32 %v783, %v843
      %v845 = vpop.f32.mrb[0].mxu0
      %v846 = vpop.f32.mrb[0].mxu0
      %v847 = vadd.f32 %v786, %v846
      %v848 = vpop.f32.mrb[0].mxu0
      %849 = vdwg.mxu0
      %854 = vrot.lane.b32.xlu0 %v350, 32
      %v855 = vpop.permute.xlu0 %854
      %856 = vrot.lane.b32.xlu0 %v352, 32
      %v857 = vpop.permute.xlu0 %856
      %858 = vrot.lane.b32.xlu0 %v354, 32
      %v859 = vpop.permute.xlu0 %858
      %860 = vrot.lane.b32.xlu0 %v356, 32
      %v861 = vpop.permute.xlu0 %860
      %v866 = vmul.f32 %v836, %v855
      %v867 = vmul.f32 %v839, %v857
      %v868 = vmul.f32 %v844, %v859
      %v869 = vmul.f32 %v847, %v861
      %v870 = vadd.f32 %v255, %v866
      %v871 = vadd.f32 %v256, %v867
      %v872 = vadd.f32 %v257, %v868
      %v873 = vadd.f32 %v258, %v869
      %874 = vst.msk [vmem:[%s253] sm:$0xff] %vm277, %v870
      %875 = vst.msk [vmem:[%s253 + $0x8] sm:$0xff] %vm277, %v871
      %876 = vst.msk [vmem:[%s253 + $0x10] sm:$0xff] %vm277, %v872
      %877 = vst.msk [vmem:[%s253 + $0x18] sm:$0xff] %vm277, %v873
      %p878 = scmp.lt.s32.totalorder %s19, 0
      %s879 = scalar_select %p878, %s19, 0
      %p880 = scmp.lt.s32.totalorder %s20, 31
      %s881 = scalar_select %p880, %s20, 31
      %s882 = smul.addr %s881, 4
      %s883 = smul.addr %s879, 128
      %s884 = sadd.s32 %s882, %s883
      %s885 = smul.addr %s884, 8
      %s886 = scalar_lea.vmem %s4, %s885
      // Predicated region
      $region37: #{pair_stack_forward.7} parent=35 // pred_check
        %p887 = pneg %p143
      $region38: #{pair_stack_forward.7} parent=35 // pred_check_branch
        %889 = sbr.rel (%p887) target = $region40
      $region39: #{pair_stack_forward.7} parent=35 // pred_region
        _
      $region40: #{pair_stack_forward.7} parent=35 // pred_fallthru
        _
    $region36: #{pair_stack_forward.7} parent=5 // pred_fallthru
      _
    %p890 = scmp.le.s32.totalorder 2, %s10
    // Predicated region
    $region41: #{pair_stack_forward.7} parent=5 // pred_check
      %p891 = pneg %p890
    $region42: #{pair_stack_forward.7} parent=5 // pred_check_branch
      %893 = sbr.rel (%p891) target = $region44
    $region43: #{pair_stack_forward.7} parent=5 // pred_region
      %s894 = ssub.s32 %s10, 2
      // Predicated region
      $region45: #{pair_stack_forward.7} parent=43 // pred_check
        %p895 = pneg %p149
      $region46: #{pair_stack_forward.7} parent=43 // pred_check_branch
        %897 = sbr.rel (%p895) target = $region48
      $region47: #{pair_stack_forward.7} parent=43 // pred_region
        %p898 = scmp.lt.s32.totalorder %s21, 0
        %s899 = scalar_select %p898, %s21, 0
        %p900 = scmp.lt.s32.totalorder %s22, 31
        %s901 = scalar_select %p900, %s22, 31
        %s902 = smul.addr %s901, 4
        %s903 = smul.addr %s899, 128
        %s904 = sadd.s32 %s902, %s903
        %s905 = smul.addr %s904, 8
        %s906 = scalar_lea.vmem %s4, %s905
      $region48: #{pair_stack_forward.7} parent=43 // pred_fallthru
        _
    $region44: #{pair_stack_forward.7} parent=5 // pred_fallthru
      _
  $region6: #{pair_stack_forward.7} parent=0 // loop_footer
    %s14 = sadd.s32 1, %s10
  $region7: #{pair_stack_forward.7} parent=0 // loop_footer_branch
    %9 = sbr.rel target = $region3
  $region8: #{pair_stack_forward.7} parent=0 // loop_exit
    _

// kernel: pair_stack_forward.9
$region0: #{pair_stack_forward.9}
  #allocation0 [shape = 'u32[]', space=smem, size = 0x4, offset = 0x4, fixed_abs, tag = 'smem constant byte address 0x4 - core index']
  #allocation1 [shape = 'u32[144,128]{1,0:T(1,128)}', space=vmem, size = 0x12000, scoped, tag = 'internal scratch']
  %s0 = inlined_call_operand.vmem [shape: f32[1,32,32,32], index: 0, kind: input, shape index: {}]
  %s1 = inlined_call_operand.vmem [shape: f32[32,256], index: 1, kind: input, shape index: {}]
  %s2 = inlined_call_operand.vmem [shape: f32[128,32], index: 2, kind: input, shape index: {}]
  %s3 = inlined_call_operand.vmem [shape: f32[1,32], index: 3, kind: input, shape index: {}]
  %s4 = inlined_call_operand.vmem [shape: f32[1,32], index: 4, kind: input, shape index: {}]
  %s5 = inlined_call_operand.hbm [shape: f32[1,32,32,32], index: 5, kind: output, shape index: {}]
  %s6 = sld [smem:[#allocation0]]
  $region53: #{pair_stack_forward.9} parent=0
    _
  %s8 = ssub.s32 1, %s6
  %s9 = scalar_select 0, %s8, %s6
  $region1: #{pair_stack_forward.9} parent=0
    #allocation2 [shape = 'u8[32768]{0}', space=vmem, size = 0x8000, scoped, tag = 'output window, operand 0']
    #allocation3 [shape = 's32[2]{0}', space=sflag, size = 0x8, scoped, tag = 'scoped memory for pair_stack_forward.9']
    %10 = vsyncpa [#allocation3], 0
    %s11 = scalar_lea.sflag [#allocation3], 1
    %12 = vsyncpa %s11, 0
    loop: start=0, step=1, limit=34
    $region2: #{pair_stack_forward.9} parent=1 // loop_pre_header
      _
    $region3: #{pair_stack_forward.9} parent=1 // loop_header
      %s14 = sphi 0, %s18
      %p15 = scmp.ge.s32.totalorder %s14, 34
      %s21 = sphi 0, %s33
      %s22 = sphi 0, %s29
      %s23 = sphi 0, %s21
      %s24 = sphi 0, %s22
      %s25 = sphi 0, %s23
      %s26 = sphi 0, %s24
      %s38 = sphi 0, %s40
      %s41 = sphi 0, %s38
      %s42 = sphi 0, %s41
      %s58 = sphi 0, %s42
      %s62 = sphi 0, %s62
      %s64 = sphi 0, %s62
      %s65 = sphi 0, %s64
      %s79 = sphi 0, %s65
      %s83 = sphi 0, %s83
      %s85 = sphi 0, %s83
      %s86 = sphi 0, %s85
      %s100 = sphi 0, %s86
      %s104 = sphi 0, %s104
      %s106 = sphi 0, %s104
      %s107 = sphi 0, %s106
      %s121 = sphi 0, %s107
      %s125 = sphi 0, %s125
      %s127 = sphi 0, %s125
      %s128 = sphi 0, %s127
      %s142 = sphi 0, %s128
      %s150 = sphi 0, %s152
      %s153 = sphi 0, %s150
      %s154 = sphi 0, %s153
      %s170 = sphi 0, %s154
    $region4: #{pair_stack_forward.9} parent=1 // loop_header_branch
      %17 = sbr.rel (%p15) target = $region8
    $region5: #{pair_stack_forward.9} parent=1 // loop_body
      %s19 = ssub.s32 %s14, 1
      %s20 = ssub.s32 %s14, 2
      %s27 = sadd.s32 1, %s22
      %p28 = scmp.ge.s32.totalorder %s27, 32
      %s29 = scalar_select %p28, 0, %s27
      %s30 = sadd.s32 1, %s21
      %s31 = scalar_select %p28, %s30, %s21
      %p32 = scmp.ge.s32.totalorder %s31, 1
      %s33 = scalar_select %p32, 0, %s31
      %s34 = ssub.s32 %s21, %s33
      %s35 = ssub.s32 %s22, %s29
      %s36 = sor.u32 %s34, %s35
      %p37 = scmp.eq.s32.totalorder %s36, 0
      %s39 = sadd.s32 %s38, 1
      %s40 = scalar_select %p37, %s38, %s39
      %p43 = pneg %p37
      %p44 = scmp.eq.s32.totalorder %s14, 31
      %p45 = por %p43, %p44
      %p46 = scmp.ne.s32.totalorder %s38, %s41
      %p47 = scmp.eq.s32.totalorder %s14, 0
      %p48 = por %p46, %p47
      %p49 = scmp.ne.s32.totalorder %s38, %s41
      %p50 = scmp.eq.s32.totalorder %s19, 31
      %p51 = por %p49, %p50
      %p52 = scmp.ne.s32.totalorder %s41, %s42
      %p53 = scmp.eq.s32.totalorder %s19, 0
      %p54 = por %p52, %p53
      %p55 = scmp.ne.s32.totalorder %s41, %s42
      %p56 = scmp.eq.s32.totalorder %s20, 31
      %p57 = por %p55, %p56
      %p59 = scmp.ne.s32.totalorder %s42, %s58
      %p60 = scmp.eq.s32.totalorder %s20, 0
      %p61 = por %p59, %p60
      %s63 = sadd.s32 %s62, 1
      %p66 = scmp.eq.s32.totalorder %s14, 31
      %p67 = scmp.ne.s32.totalorder %s62, %s64
      %p68 = scmp.eq.s32.totalorder %s14, 0
      %p69 = por %p67, %p68
      %p70 = scmp.ne.s32.totalorder %s62, %s64
      %p71 = scmp.eq.s32.totalorder %s19, 31
      %p72 = por %p70, %p71
      %p73 = scmp.ne.s32.totalorder %s64, %s65
      %p74 = scmp.eq.s32.totalorder %s19, 0
      %p75 = por %p73, %p74
      %p76 = scmp.ne.s32.totalorder %s64, %s65
      %p77 = scmp.eq.s32.totalorder %s20, 31
      %p78 = por %p76, %p77
      %p80 = scmp.ne.s32.totalorder %s65, %s79
      %p81 = scmp.eq.s32.totalorder %s20, 0
      %p82 = por %p80, %p81
      %s84 = sadd.s32 %s83, 1
      %p87 = scmp.eq.s32.totalorder %s14, 31
      %p88 = scmp.ne.s32.totalorder %s83, %s85
      %p89 = scmp.eq.s32.totalorder %s14, 0
      %p90 = por %p88, %p89
      %p91 = scmp.ne.s32.totalorder %s83, %s85
      %p92 = scmp.eq.s32.totalorder %s19, 31
      %p93 = por %p91, %p92
      %p94 = scmp.ne.s32.totalorder %s85, %s86
      %p95 = scmp.eq.s32.totalorder %s19, 0
      %p96 = por %p94, %p95
      %p97 = scmp.ne.s32.totalorder %s85, %s86
      %p98 = scmp.eq.s32.totalorder %s20, 31
      %p99 = por %p97, %p98
      %p101 = scmp.ne.s32.totalorder %s86, %s100
      %p102 = scmp.eq.s32.totalorder %s20, 0
      %p103 = por %p101, %p102
      %s105 = sadd.s32 %s104, 1
      %p108 = scmp.eq.s32.totalorder %s14, 31
      %p109 = scmp.ne.s32.totalorder %s104, %s106
      %p110 = scmp.eq.s32.totalorder %s14, 0
      %p111 = por %p109, %p110
      %p112 = scmp.ne.s32.totalorder %s104, %s106
      %p113 = scmp.eq.s32.totalorder %s19, 31
      %p114 = por %p112, %p113
      %p115 = scmp.ne.s32.totalorder %s106, %s107
      %p116 = scmp.eq.s32.totalorder %s19, 0
      %p117 = por %p115, %p116
      %p118 = scmp.ne.s32.totalorder %s106, %s107
      %p119 = scmp.eq.s32.totalorder %s20, 31
      %p120 = por %p118, %p119
      %p122 = scmp.ne.s32.totalorder %s107, %s121
      %p123 = scmp.eq.s32.totalorder %s20, 0
      %p124 = por %p122, %p123
      %s126 = sadd.s32 %s125, 1
      %p129 = scmp.eq.s32.totalorder %s14, 31
      %p130 = scmp.ne.s32.totalorder %s125, %s127
      %p131 = scmp.eq.s32.totalorder %s14, 0
      %p132 = por %p130, %p131
      %p133 = scmp.ne.s32.totalorder %s125, %s127
      %p134 = scmp.eq.s32.totalorder %s19, 31
      %p135 = por %p133, %p134
      %p136 = scmp.ne.s32.totalorder %s127, %s128
      %p137 = scmp.eq.s32.totalorder %s19, 0
      %p138 = por %p136, %p137
      %p139 = scmp.ne.s32.totalorder %s127, %s128
      %p140 = scmp.eq.s32.totalorder %s20, 31
      %p141 = por %p139, %p140
      %p143 = scmp.ne.s32.totalorder %s128, %s142
      %p144 = scmp.eq.s32.totalorder %s20, 0
      %p145 = por %p143, %p144
      %s146 = ssub.s32 %s21, %s33
      %s147 = ssub.s32 %s22, %s29
      %s148 = sor.u32 %s146, %s147
      %p149 = scmp.eq.s32.totalorder %s148, 0
      %s151 = sadd.s32 %s150, 1
      %s152 = scalar_select %p149, %s150, %s151
      %p155 = pneg %p149
      %p156 = scmp.eq.s32.totalorder %s14, 31
      %p157 = por %p155, %p156
      %p158 = scmp.ne.s32.totalorder %s150, %s153
      %p159 = scmp.eq.s32.totalorder %s14, 0
      %p160 = por %p158, %p159
      %p161 = scmp.ne.s32.totalorder %s150, %s153
      %p162 = scmp.eq.s32.totalorder %s19, 31
      %p163 = por %p161, %p162
      %p164 = scmp.ne.s32.totalorder %s153, %s154
      %p165 = scmp.eq.s32.totalorder %s19, 0
      %p166 = por %p164, %p165
      %p167 = scmp.ne.s32.totalorder %s153, %s154
      %p168 = scmp.eq.s32.totalorder %s20, 31
      %p169 = por %p167, %p168
      %p171 = scmp.ne.s32.totalorder %s154, %s170
      %p172 = scmp.eq.s32.totalorder %s20, 0
      %p173 = por %p171, %p172
      %p174 = scmp.le.s32.totalorder 1, %s14
      %p175 = scmp.lt.s32.totalorder %s14, 33
      %p176 = pnand %p174, %p175
      %p177 = pneg %p176
      // Predicated region
      $region9: #{pair_stack_forward.9} parent=5 // pred_check
        _
      $region10: #{pair_stack_forward.9} parent=5 // pred_check_branch
        %179 = sbr.rel (%p176) target = $region12
      $region11: #{pair_stack_forward.9} parent=5 // pred_region
        %s180 = ssub.s32 %s14, 1
        // Predicated region
        $region13: #{pair_stack_forward.9} parent=11 // pred_check
          %p181 = pneg %p75
        $region14: #{pair_stack_forward.9} parent=11 // pred_check_branch
          %183 = sbr.rel (%p181) target = $region16
        $region15: #{pair_stack_forward.9} parent=11 // pred_region
          _
        $region16: #{pair_stack_forward.9} parent=11 // pred_fallthru
          _
        // Predicated region
        $region17: #{pair_stack_forward.9} parent=11 // pred_check
          %p184 = pneg %p96
        $region18: #{pair_stack_forward.9} parent=11 // pred_check_branch
          %186 = sbr.rel (%p184) target = $region20
        $region19: #{pair_stack_forward.9} parent=11 // pred_region
          _
        $region20: #{pair_stack_forward.9} parent=11 // pred_fallthru
          _
        // Predicated region
        $region21: #{pair_stack_forward.9} parent=11 // pred_check
          %p187 = pneg %p117
        $region22: #{pair_stack_forward.9} parent=11 // pred_check_branch
          %189 = sbr.rel (%p187) target = $region24
        $region23: #{pair_stack_forward.9} parent=11 // pred_region
          _
        $region24: #{pair_stack_forward.9} parent=11 // pred_fallthru
          _
        // Predicated region
        $region25: #{pair_stack_forward.9} parent=11 // pred_check
          %p190 = pneg %p138
        $region26: #{pair_stack_forward.9} parent=11 // pred_check_branch
          %192 = sbr.rel (%p190) target = $region28
        $region27: #{pair_stack_forward.9} parent=11 // pred_region
          _
        $region28: #{pair_stack_forward.9} parent=11 // pred_fallthru
          _
      $region12: #{pair_stack_forward.9} parent=5 // pred_fallthru
        _
      %p193 = scmp.lt.s32.totalorder %s14, 32
      // Predicated region
      $region29: #{pair_stack_forward.9} parent=5 // pred_check
        %p194 = pneg %p193
      $region30: #{pair_stack_forward.9} parent=5 // pred_check_branch
        %196 = sbr.rel (%p194) target = $region32
      $region31: #{pair_stack_forward.9} parent=5 // pred_region
        // Predicated region
        $region33: #{pair_stack_forward.9} parent=31 // pred_check
          %p197 = pneg %p48
        $region34: #{pair_stack_forward.9} parent=31 // pred_check_branch
          %199 = sbr.rel (%p197) target = $region36
        $region35: #{pair_stack_forward.9} parent=31 // pred_region
          %p200 = scmp.lt.s32.totalorder %s21, 0
          %s201 = scalar_select %p200, %s21, 0
          %p202 = scmp.lt.s32.totalorder %s22, 31
          %s203 = scalar_select %p202, %s22, 31
          %s204 = smul.addr %s203, 4
          %s205 = smul.addr %s201, 128
          %s206 = sadd.s32 %s204, %s205
          %s207 = smul.addr %s206, 8
          %s208 = scalar_lea.vmem %s0, %s207
        $region36: #{pair_stack_forward.9} parent=31 // pred_fallthru
          _
      $region32: #{pair_stack_forward.9} parent=5 // pred_fallthru
        _
      %p209 = scmp.le.s32.totalorder 1, %s14
      %p210 = scmp.lt.s32.totalorder %s14, 33
      %p211 = pnand %p209, %p210
      %p212 = pneg %p211
      // Predicated region
      $region37: #{pair_stack_forward.9} parent=5 // pred_check
        _
      $region38: #{pair_stack_forward.9} parent=5 // pred_check_branch
        %214 = sbr.rel (%p211) target = $region40
      $region39: #{pair_stack_forward.9} parent=5 // pred_region
        %s215 = ssub.s32 %s14, 1
        %p216 = scmp.lt.s32.totalorder %s23, 0
        %s217 = scalar_select %p216, %s23, 0
        %p218 = scmp.lt.s32.totalorder %s24, 31
        %s219 = scalar_select %p218, %s24, 31
        %s220 = smul.addr %s219, 4
        %s221 = smul.addr %s217, 128
        %s222 = sadd.s32 %s220, %s221
        %s223 = smul.addr %s222, 8
        %s224 = scalar_lea.vmem %s0, %s223
        %p225 = pneg %p54
        %p226 = pneg %p51
        %p227 = pneg %p75
        %p228 = pneg %p72
        %p229 = pneg %p96
        %p230 = pneg %p93
        %p231 = pneg %p117
        %p232 = pneg %p114
        %p233 = pneg %p138
        %p234 = pneg %p135
        %p235 = pneg %p166
        %p236 = pneg %p163
        %s237 = sand.u32 %s153, 1
        %s238 = scalar_lea.sflag [#allocation3], %s237
        %s239 = sand.u32 %s153, 1
        %s240 = smul.addr %s239, 32
        %s241 = scalar_lea.vmem [#allocation2], %s240
        %p242 = scmp.lt.s32.totalorder %s23, 0
        %s243 = scalar_select %p242, %s23, 0
        %p244 = scmp.lt.s32.totalorder %s24, 31
        %s245 = scalar_select %p244, %s24, 31
        %s246 = smul.addr %s245, 4
        %s247 = smul.addr %s243, 128
        %s248 = sadd.s32 %s246, %s247
        %s249 = smul.addr %s248, 8
        %s250 = scalar_lea.vmem %s0, %s249
        %v251 = vld [vmem:[%s250] sm:$0xff]
        %v252 = vld [vmem:[%s250 + $0x8] sm:$0xff]
        %v253 = vld [vmem:[%s250 + $0x10] sm:$0xff]
        %v254 = vld [vmem:[%s250 + $0x18] sm:$0xff]
        %v255 = vld [vmem:[%s3] sm:$0x1]
        %v256 = vld [vmem:[%s4] sm:$0x1]
        %vm257 = vcmask 261120
        %v258 = vsel %vm257, %v251, 0.0
        %259 = vadd.xlane.f32.xlu0 %v258
        %v260 = vpop.xlane.xlu0 %259
        %v261 = vsel %vm257, %v252, 0.0
        %262 = vadd.xlane.f32.xlu0 %v261
        %v263 = vpop.xlane.xlu0 %262
        %v264 = vsel %vm257, %v253, 0.0
        %265 = vadd.xlane.f32.xlu0 %v264
        %v266 = vpop.xlane.xlu0 %265
        %v267 = vsel %vm257, %v254, 0.0
        %268 = vadd.xlane.f32.xlu0 %v267
        %v269 = vpop.xlane.xlu0 %268
        %v270 = vrcp.pop 32.0
        %v271 = vmul.f32 %v260, %v270
        %v272 = vmul.f32 %v263, %v270
        %v273 = vmul.f32 %v266, %v270
        %v274 = vmul.f32 %v269, %v270
        %v275 = vsub.f32 %v251, %v271
        %v276 = vsub.f32 %v252, %v272
        %v277 = vsub.f32 %v253, %v273
        %v278 = vsub.f32 %v254, %v274
        %v279 = vmul.f32 %v275, %v275
        %v280 = vmul.f32 %v276, %v276
        %v281 = vmul.f32 %v277, %v277
        %v282 = vmul.f32 %v278, %v278
        %v283 = vsel %vm257, %v279, 0.0
        %284 = vadd.xlane.f32.xlu0 %v283
        %v285 = vpop.xlane.xlu0 %284
        %v286 = vsel %vm257, %v280, 0.0
        %287 = vadd.xlane.f32.xlu0 %v286
        %v288 = vpop.xlane.xlu0 %287
        %v289 = vsel %vm257, %v281, 0.0
        %290 = vadd.xlane.f32.xlu0 %v289
        %v291 = vpop.xlane.xlu0 %290
        %v292 = vsel %vm257, %v282, 0.0
        %293 = vadd.xlane.f32.xlu0 %v292
        %v294 = vpop.xlane.xlu0 %293
        %v295 = vmul.f32 %v285, %v270
        %v296 = vmul.f32 %v288, %v270
        %v297 = vmul.f32 %v291, %v270
        %v298 = vmul.f32 %v294, %v270
        %v299 = vadd.f32 %v295, 1e-05
        %v300 = vadd.f32 %v296, 1e-05
        %v301 = vadd.f32 %v297, 1e-05
        %v302 = vadd.f32 %v298, 1e-05
        %v303 = vrsqrt.pop %v299
        %v304 = vrsqrt.pop %v300
        %v305 = vrsqrt.pop %v301
        %v306 = vrsqrt.pop %v302
        %v307 = vmul.f32 %v275, %v303
        %v308 = vmul.f32 %v276, %v304
        %v309 = vmul.f32 %v277, %v305
        %v310 = vmul.f32 %v278, %v306
        %v312 = vlaneseq
        %v313 = vshrl.u32 %v312, 7
        %v314 = vsub.s32 0, %v313
        %v315 = vrot.slane %v255, %v314
        %v317 = vmul.f32 %v307, %v315
        %v318 = vmul.f32 %v308, %v315
        %v319 = vmul.f32 %v309, %v315
        %v320 = vmul.f32 %v310, %v315
        %v322 = vlaneseq
        %v323 = vshrl.u32 %v322, 7
        %v324 = vsub.s32 0, %v323
        %v325 = vrot.slane %v256, %v324
        %v327 = vadd.f32 %v317, %v325
        %v328 = vadd.f32 %v318, %v325
        %v329 = vadd.f32 %v319, %v325
        %v330 = vadd.f32 %v320, %v325
        %v331 = vld [vmem:[%s1] sm:$0xff]
        %v332 = vld [vmem:[%s1 + $0x8] sm:$0xff]
        %v333 = vld [vmem:[%s1 + $0x10] sm:$0xff]
        %v334 = vld [vmem:[%s1 + $0x18] sm:$0xff]
        %v335 = vld [vmem:[%s1 + $0x20] sm:$0xff]
        %v336 = vld [vmem:[%s1 + $0x28] sm:$0xff]
        %v337 = vld [vmem:[%s1 + $0x30] sm:$0xff]
        %v338 = vld [vmem:[%s1 + $0x38] sm:$0xff]
        %v340 = vsel %vm257, %v327, 0
        %v343 = vsel %vm257, %v328, 0
        %v346 = vsel %vm257, %v329, 0
        %v349 = vsel %vm257, %v330, 0
        %351 = vmatprep.subr.mxu0 %v332
        %352 = vmatpush1.msra.mxu0 %v331
        %353 = vmatprep.subr.mxu0 %v334
        %354 = vmatpush1.msra.mxu0 %v333
        %355 = vmatprep.subr.mxu0 %v336
        %356 = vmatpush1.msra.mxu0 %v335
        %357 = vmatprep.subr.mxu0 %v338
        %358 = vmatpush1.msra.mxu0 %v337
        %359 = vmatprep.subr.mxu0 0.0
        %360 = vmatpush1.msra.mxu0 0.0
        %361 = vmatprep.subr.mxu0 0.0
        %362 = vmatpush1.msra.mxu0 0.0
        %363 = vmatprep.subr.mxu0 0.0
        %364 = vmatpush1.msra.mxu0 0.0
        %365 = vmatprep.subr.mxu0 0.0
        %366 = vmatpush1.msra.mxu0 0.0
        %367 = vmatprep.subr.mxu0 0.0
        %368 = vmatpush1.msra.mxu0 0.0
        %369 = vmatprep.subr.mxu0 0.0
        %370 = vmatpush1.msra.mxu0 0.0
        %371 = vmatprep.subr.mxu0 0.0
        %372 = vmatpush1.msra.mxu0 0.0
        %373 = vmatprep.subr.mxu0 0.0
        %374 = vmatpush1.msra.mxu0 0.0
        %375 = vmatprep.subr.mxu0 0.0
        %376 = vmatpush1.msra.mxu0 0.0
        %377 = vmatprep.subr.mxu0 0.0
        %378 = vmatpush1.msra.mxu0 0.0
        %379 = vmatprep.subr.mxu0 0.0
        %380 = vmatpush1.msra.mxu0 0.0
        %381 = vmatprep.subr.mxu0 0.0
        %382 = vmatpush1.msra.mxu0 0.0
        %383 = vmatprep.subr.mxu0 0.0
        %384 = vmatpush1.msra.mxu0 0.0
        %385 = vmatprep.subr.mxu0 0.0
        %386 = vmatpush1.msra.mxu0 0.0
        %387 = vmatprep.subr.mxu0 0.0
        %388 = vmatpush1.msra.mxu0 0.0
        %389 = vmatprep.subr.mxu0 0.0
        %390 = vmatpush1.msra.mxu0 0.0
        %391 = vmatprep.subr.mxu0 0.0
        %392 = vmatpush1.msra.mxu0 0.0
        %393 = vmatprep.subr.mxu0 0.0
        %394 = vmatpush1.msra.mxu0 0.0
        %395 = vmatprep.subr.mxu0 0.0
        %396 = vmatpush1.msra.mxu0 0.0
        %397 = vmatprep.subr.mxu0 0.0
        %398 = vmatpush1.msra.mxu0 0.0
        %399 = vmatprep.subr.mxu0 0.0
        %400 = vmatpush1.msra.mxu0 0.0
        %401 = vmatprep.subr.mxu0 0.0
        %402 = vmatpush1.msra.mxu0 0.0
        %403 = vmatprep.subr.mxu0 0.0
        %404 = vmatpush1.msra.mxu0 0.0
        %405 = vmatprep.subr.mxu0 0.0
        %406 = vmatpush1.msra.mxu0 0.0
        %407 = vmatprep.subr.mxu0 0.0
        %408 = vmatpush1.msra.mxu0 0.0
        %409 = vmatprep.subr.mxu0 0.0
        %410 = vmatpush1.msra.mxu0 0.0
        %411 = vmatprep.subr.mxu0 0.0
        %412 = vmatpush1.msra.mxu0 0.0
        %413 = vmatprep.subr.mxu0 0.0
        %414 = vmatpush1.msra.mxu0 0.0
        %415 = vmatprep.mubr.f32.mxu0 0.0
        %416 = vmatmul.mubr.f32.gmra.mrb[0].mxu0 %v340
        %v417 = vpop.f32.mrb[0].mxu0
        %v418 = vadd.f32 0.0, %v417
        %v419 = vpop.f32.mrb[0].mxu0
        %v420 = vadd.f32 0.0, %v419
        %421 = vmatprep.mubr.f32.mxu0 0.0
        %422 = vmatmul.mubr.f32.gmra.mrb[0].mxu0 %v343
        %v423 = vpop.f32.mrb[0].mxu0
        %v424 = vadd.f32 0.0, %v423
        %v425 = vpop.f32.mrb[0].mxu0
        %v426 = vadd.f32 0.0, %v425
        %427 = vmatprep.mubr.f32.mxu0 0.0
        %428 = vmatmul.mubr.f32.gmra.mrb[0].mxu0 %v346
        %v429 = vpop.f32.mrb[0].mxu0
        %v430 = vadd.f32 0.0, %v429
        %v431 = vpop.f32.mrb[0].mxu0
        %v432 = vadd.f32 0.0, %v431
        %433 = vmatprep.mubr.f32.mxu0 0.0
        %434 = vmatmul.mubr.f32.gmra.mrb[0].mxu0 %v349
        %v435 = vpop.f32.mrb[0].mxu0
        %v436 = vadd.f32 0.0, %v435
        %v437 = vpop.f32.mrb[0].mxu0
        %v438 = vadd.f32 0.0, %v437
        %439 = vdwg.mxu0
        %v440 = vxor.u32 %v418, 2147483648
        %v441 = vxor.u32 %v424, 2147483648
        %v442 = vxor.u32 %v430, 2147483648
        %v443 = vxor.u32 %v436, 2147483648
        %v444 = vmul.f32 %v440, 1.442695
        %v445 = vpow.pop %v444
        %v446 = vmul.f32 %v441, 1.442695
        %v447 = vpow.pop %v446
        %v448 = vmul.f32 %v442, 1.442695
        %v449 = vpow.pop %v448
        %v450 = vmul.f32 %v443, 1.442695
        %v451 = vpow.pop %v450
        %v452 = vadd.f32 %v445, 1.0
        %v453 = vadd.f32 %v447, 1.0
        %v454 = vadd.f32 %v449, 1.0
        %v455 = vadd.f32 %v451, 1.0
        %v456 = vrcp.pop %v452
        %v457 = vmul.f32 1.0, %v456
        %v458 = vrcp.pop %v453
        %v459 = vmul.f32 1.0, %v458
        %v460 = vrcp.pop %v454
        %v461 = vmul.f32 1.0, %v460
        %v462 = vrcp.pop %v455
        %v463 = vmul.f32 1.0, %v462
        %v464 = vmul.f32 %v418, %v457
        %v465 = vmul.f32 %v424, %v459
        %v466 = vmul.f32 %v430, %v461
        %v467 = vmul.f32 %v436, %v463
        %v468 = vmul.f32 %v464, %v420
        %v469 = vmul.f32 %v465, %v426
        %v470 = vmul.f32 %v466, %v432
        %v471 = vmul.f32 %v467, %v438
        %v472 = vld [vmem:[%s2] sm:$0xff]
        %v473 = vld [vmem:[%s2 + $0x8] sm:$0xff]
        %v474 = vld [vmem:[%s2 + $0x10] sm:$0xff]
        %v475 = vld [vmem:[%s2 + $0x18] sm:$0xff]
        %v476 = vld [vmem:[%s2 + $0x20] sm:$0xff]
        %v477 = vld [vmem:[%s2 + $0x28] sm:$0xff]
        %v478 = vld [vmem:[%s2 + $0x30] sm:$0xff]
        %v479 = vld [vmem:[%s2 + $0x38] sm:$0xff]
        %v480 = vld [vmem:[%s2 + $0x40] sm:$0xff]
        %v481 = vld [vmem:[%s2 + $0x48] sm:$0xff]
        %v482 = vld [vmem:[%s2 + $0x50] sm:$0xff]
        %v483 = vld [vmem:[%s2 + $0x58] sm:$0xff]
        %v484 = vld [vmem:[%s2 + $0x60] sm:$0xff]
        %v485 = vld [vmem:[%s2 + $0x68] sm:$0xff]
        %v486 = vld [vmem:[%s2 + $0x70] sm:$0xff]
        %v487 = vld [vmem:[%s2 + $0x78] sm:$0xff]
        %488 = vmatprep.subr.mxu0 0.0
        %489 = vmatpush1.msra.mxu0 %v472
        %490 = vmatprep.subr.mxu0 0.0
        %491 = vmatpush1.msra.mxu0 %v473
        %492 = vmatprep.subr.mxu0 0.0
        %493 = vmatpush1.msra.mxu0 %v474
        %494 = vmatprep.subr.mxu0 0.0
        %495 = vmatpush1.msra.mxu0 %v475
        %496 = vmatprep.subr.mxu0 0.0
        %497 = vmatpush1.msra.mxu0 %v476
        %498 = vmatprep.subr.mxu0 0.0
        %499 = vmatpush1.msra.mxu0 %v477
        %500 = vmatprep.subr.mxu0 0.0
        %501 = vmatpush1.msra.mxu0 %v478
        %502 = vmatprep.subr.mxu0 0.0
        %503 = vmatpush1.msra.mxu0 %v479
        %504 = vmatprep.subr.mxu0 0.0
        %505 = vmatpush1.msra.mxu0 %v480
        %506 = vmatprep.subr.mxu0 0.0
        %507 = vmatpush1.msra.mxu0 %v481
        %508 = vmatprep.subr.mxu0 0.0
        %509 = vmatpush1.msra.mxu0 %v482
        %510 = vmatprep.subr.mxu0 0.0
        %511 = vmatpush1.msra.mxu0 %v483
        %512 = vmatprep.subr.mxu0 0.0
        %513 = vmatpush1.msra.mxu0 %v484
        %514 = vmatprep.subr.mxu0 0.0
        %515 = vmatpush1.msra.mxu0 %v485
        %516 = vmatprep.subr.mxu0 0.0
        %517 = vmatpush1.msra.mxu0 %v486
        %518 = vmatprep.subr.mxu0 0.0
        %519 = vmatpush1.msra.mxu0 %v487
        %520 = vmatprep.subr.mxu0 0.0
        %521 = vmatpush1.msra.mxu0 0.0
        %522 = vmatprep.subr.mxu0 0.0
        %523 = vmatpush1.msra.mxu0 0.0
        %524 = vmatprep.subr.mxu0 0.0
        %525 = vmatpush1.msra.mxu0 0.0
        %526 = vmatprep.subr.mxu0 0.0
        %527 = vmatpush1.msra.mxu0 0.0
        %528 = vmatprep.subr.mxu0 0.0
        %529 = vmatpush1.msra.mxu0 0.0
        %530 = vmatprep.subr.mxu0 0.0
        %531 = vmatpush1.msra.mxu0 0.0
        %532 = vmatprep.subr.mxu0 0.0
        %533 = vmatpush1.msra.mxu0 0.0
        %534 = vmatprep.subr.mxu0 0.0
        %535 = vmatpush1.msra.mxu0 0.0
        %536 = vmatprep.subr.mxu0 0.0
        %537 = vmatpush1.msra.mxu0 0.0
        %538 = vmatprep.subr.mxu0 0.0
        %539 = vmatpush1.msra.mxu0 0.0
        %540 = vmatprep.subr.mxu0 0.0
        %541 = vmatpush1.msra.mxu0 0.0
        %542 = vmatprep.subr.mxu0 0.0
        %543 = vmatpush1.msra.mxu0 0.0
        %544 = vmatprep.subr.mxu0 0.0
        %545 = vmatpush1.msra.mxu0 0.0
        %546 = vmatprep.subr.mxu0 0.0
        %547 = vmatpush1.msra.mxu0 0.0
        %548 = vmatprep.subr.mxu0 0.0
        %549 = vmatpush1.msra.mxu0 0.0
        %550 = vmatprep.subr.mxu0 0.0
        %551 = vmatpush1.msra.mxu0 0.0
        %552 = vmatprep.mubr.f32.mxu0 0.0
        %553 = vmatmul.mubr.f32.gmra.mrb[0].mxu0 %v468
        %v554 = vpop.f32.mrb[0].mxu0
        %v555 = vadd.f32 0.0, %v554
        %v556 = vpop.f32.mrb[0].mxu0
        %557 = vmatprep.mubr.f32.mxu0 0.0
        %558 = vmatmul.mubr.f32.gmra.mrb[0].mxu0 %v469
        %v559 = vpop.f32.mrb[0].mxu0
        %v560 = vadd.f32 0.0, %v559
        %v561 = vpop.f32.mrb[0].mxu0
        %562 = vmatprep.mubr.f32.mxu0 0.0
        %563 = vmatmul.mubr.f32.gmra.mrb[0].mxu0 %v470
        %v564 = vpop.f32.mrb[0].mxu0
        %v565 = vadd.f32 0.0, %v564
        %v566 = vpop.f32.mrb[0].mxu0
        %567 = vmatprep.mubr.f32.mxu0 0.0
        %568 = vmatmul.mubr.f32.gmra.mrb[0].mxu0 %v471
        %v569 = vpop.f32.mrb[0].mxu0
        %v570 = vadd.f32 0.0, %v569
        %v571 = vpop.f32.mrb[0].mxu0
        %572 = vdwg.mxu0
        %v573 = vadd.f32 %v251, %v555
        %v574 = vadd.f32 %v252, %v560
        %v575 = vadd.f32 %v253, %v565
        %v576 = vadd.f32 %v254, %v570
        %577 = vst.msk [vmem:[%s241] sm:$0xff] %vm257, %v573
        %578 = vst.msk [vmem:[%s241 + $0x8] sm:$0xff] %vm257, %v574
        %579 = vst.msk [vmem:[%s241 + $0x10] sm:$0xff] %vm257, %v575
        %580 = vst.msk [vmem:[%s241 + $0x18] sm:$0xff] %vm257, %v576
        %s581 = sand.u32 %s153, 1
        %s582 = scalar_lea.sflag [#allocation3], %s581
        %s583 = sand.u32 %s153, 1
        %s584 = smul.addr %s583, 32
        %s585 = scalar_lea.vmem [#allocation2], %s584
        // Predicated region
        $region41: #{pair_stack_forward.9} parent=39 // pred_check
          %p586 = pneg %p163
        $region42: #{pair_stack_forward.9} parent=39 // pred_check_branch
          %588 = sbr.rel (%p586) target = $region44
        $region43: #{pair_stack_forward.9} parent=39 // pred_region
          %s590 = ssub.s32 512, 512
          %591 = vsyncadd %s582, %s590
          %s592 = smul.addr %s24, 4
          %s593 = smul.addr %s23, 128
          %s594 = sadd.s32 %s592, %s593
          %s595 = smul.addr %s594, 128
          %s596 = scalar_lea.hbm %s5, %s595
          %s597 = sshll.u32 %s585, 4
          %s598 = int_to_ptr.vmem [resolvable:$true] %s597
          %603 = dma.vmem_to_hbm [thread:$0]  %s598, 512, %s596, %s582, 128, 128, 8
        $region44: #{pair_stack_forward.9} parent=39 // pred_fallthru
          _
      $region40: #{pair_stack_forward.9} parent=5 // pred_fallthru
        _
      %p604 = scmp.le.s32.totalorder 2, %s14
      // Predicated region
      $region45: #{pair_stack_forward.9} parent=5 // pred_check
        %p605 = pneg %p604
      $region46: #{pair_stack_forward.9} parent=5 // pred_check_branch
        %607 = sbr.rel (%p605) target = $region48
      $region47: #{pair_stack_forward.9} parent=5 // pred_region
        %s608 = ssub.s32 %s14, 2
        // Predicated region
        $region49: #{pair_stack_forward.9} parent=47 // pred_check
          %p609 = pneg %p169
        $region50: #{pair_stack_forward.9} parent=47 // pred_check_branch
          %611 = sbr.rel (%p609) target = $region52
        $region51: #{pair_stack_forward.9} parent=47 // pred_region
          %s612 = sand.u32 %s154, 1
          %s613 = scalar_lea.sflag [#allocation3], %s612
          %s614 = sand.u32 %s154, 1
          %s615 = smul.addr %s614, 32
          %s616 = scalar_lea.vmem [#allocation2], %s615
          %617 = dma.done %s613, 512
        $region52: #{pair_stack_forward.9} parent=47 // pred_fallthru
          _
      $region48: #{pair_stack_forward.9} parent=5 // pred_fallthru
        _
    $region6: #{pair_stack_forward.9} parent=1 // loop_footer
      %s18 = sadd.s32 1, %s14
    $region7: #{pair_stack_forward.9} parent=1 // loop_footer_branch
      %13 = sbr.rel target = $region3
    $region8: #{pair_stack_forward.9} parent=1 // loop_exit
      _
    %618 = vsyncpa [#allocation3], 1
    %s619 = scalar_lea.sflag [#allocation3], 1
    %620 = vsyncpa %s619, 1

</llo_original>
